<compile_context>
chip_gen: v6e
topology: v6e:2x2x1
jax: 0.10.0
libtpu: 0.0.40
codegen_flags: <defaults>
</compile_context>

<pallas_src>
import functools

import numpy as np
import jax
import jax.numpy as jnp
from jax.experimental import pallas as pl
from jax.experimental.pallas import tpu as pltpu


def _aux_head_kernel(x_ref, pmat_ref, wct_ref, bc_ref, w1_ref, b1_ref, w2t_ref,
                     out_ref, acc_ref, *, n_batch, tp):
    """Grid = (hidden tiles [parallel], pool-position tiles [arbitrary])."""
    kp = pl.program_id(1)

    @pl.when(kp == 0)
    def _init():
        acc_ref[...] = jnp.zeros_like(acc_ref)

    # ---- Stage 1: AvgPool(5,3) + 1x1 Conv + bias + ReLU for this step's tp
    # positions only (a few KFLOP, recomputed per step, f32 for accuracy).
    pmat_blk = pmat_ref[...]                                     # (tp, HW) f32
    wct = wct_ref[...]                                           # (C, K)   f32
    bc = bc_ref[...]                                             # (1, K)   f32
    conv = []
    for n in range(n_batch):                                     # static unroll
        pooled_n = jnp.dot(pmat_blk, x_ref[n],
                           preferred_element_type=jnp.float32)   # (tp, C)
        conv_n = jnp.dot(pooled_n, wct,
                         preferred_element_type=jnp.float32)     # (tp, K)
        conv.append(jnp.maximum(conv_n + bc, 0.0))

    # ---- Stage 2: h_acc += flat_block @ w1_block.  w1 is streamed as
    # (tp, K, th) bf16 blocks; one (N, K) @ (K, th) dot per position keeps
    # everything a plain 2-D lane-dense matmul (total MXU weight-push volume is
    # still exactly one pass over w1).
    contrib = jnp.zeros(acc_ref.shape, jnp.float32)
    for i in range(tp):                                          # static unroll
        lhs = jnp.concatenate([conv[n][i:i + 1, :] for n in range(n_batch)],
                              axis=0).astype(jnp.bfloat16)       # (N, K)
        contrib = contrib + jnp.dot(lhs, w1_ref[i],
                                    preferred_element_type=jnp.float32)
    acc_ref[...] += contrib

    # ---- Stage 3 (last reduction step): Linear(1024) bias + ReLU, then the
    # final Linear for this hidden tile.  Dropout(0.7) is identity in eval.
    # TODO(synk): train-mode dropout (pltpu.prng_seed + prng_random_bits and
    # 1/(1-p) scaling) intentionally omitted.
    @pl.when(kp == pl.num_programs(1) - 1)
    def _finalize():
        h = jnp.maximum(acc_ref[...] + b1_ref[...], 0.0)         # (N, th) f32
        out_ref[0] = jnp.dot(h, w2t_ref[...].astype(jnp.float32),
                             preferred_element_type=jnp.float32)  # (N, ncls)


def prepare_params(params, input_shape):
    """One-time host-side prep: (P, HW) average-pool matrix, w1 reordered to
    (P, K, hidden) bf16, w2 transposed to bf16.  No kron(wc, Pmat) fold."""
    _, C, H, W = input_shape
    KH = KW = 5
    S = 3
    OH = (H - KH) // S + 1
    OW = (W - KW) // S + 1
    P = OH * OW
    K = params["wc"].shape[0]            # 128
    hidden = params["w1"].shape[0]       # 1024

    # Average-pooling matrix (P, H*W), entries 1/25 inside each 5x5 window.
    Ph = np.zeros((OH, H), np.float32)
    for oh in range(OH):
        Ph[oh, S * oh:S * oh + KH] = 1.0 / KH
    Pw = np.zeros((OW, W), np.float32)
    for ow in range(OW):
        Pw[ow, S * ow:S * ow + KW] = 1.0 / KW
    pmat = jnp.asarray(np.kron(Ph, Pw))                          # (P, HW) f32

    # w1 rows are in PyTorch Flatten order (k*P + p); reorder to (p, k, j) so
    # the kernel can stream lane-dense (tp, K, th) blocks.
    w1_3d = (params["w1"].reshape(hidden, K, P).transpose(2, 1, 0)
             .astype(jnp.bfloat16))                              # (P, K, hidden)

    # TODO(synk): optional int8 (v5e/v6e) or fp8 (v7x) streaming of w1_3d/w2T
    # would halve the remaining weight bytes; kept bf16 here for accuracy.
    return {
        "pmat": pmat,                                            # (P, HW)    f32
        "wcT": params["wc"].T,                                   # (C, K)     f32
        "bc": params["bc"].reshape(1, K),                        # (1, K)     f32
        "w1_3d": w1_3d,                                          # (P, K, h)  bf16
        "b1": params["b1"].reshape(1, hidden),                   # (1, h)     f32
        "w2T": params["w2"].T.astype(jnp.bfloat16),              # (h, ncls)  bf16
        "b2": params["b2"].reshape(1, -1),                       # (1, ncls)  f32
    }


@jax.jit
def aux_predictor_forward(x, prepped):
    """x: (N, C, H, W) float32 NCHW.  Returns logits (N, nclasses) float32."""
    N, C, H, W = x.shape
    HW = H * W
    P, K, hidden = prepped["w1_3d"].shape
    nclasses = prepped["b2"].shape[-1]

    # Tiling: th hidden columns per "parallel" tile (v7x megacore split),
    # tp pool positions per "arbitrary" reduction step (w1 streamed in
    # (tp, K, th) bf16 blocks, ~1 MiB each -> double-buffered by Pallas).
    th = 512 if hidden % 512 == 0 else hidden
    nh = hidden // th
    nkp = 2 if P % 2 == 0 else 1
    tp = P // nkp

    x_nhwc = x.transpose(0, 2, 3, 1).reshape(N, HW, C)   # layout glue, ~8 KiB

    flops = 2 * N * (P * HW * C + P * C * K + P * K * hidden + hidden * nclasses)
    bytes_accessed = (x_nhwc.size * 4 + prepped["pmat"].size * 4
                      + prepped["wcT"].size * 4 + prepped["bc"].size * 4
                      + prepped["w1_3d"].size * 2 + prepped["b1"].size * 4
                      + prepped["w2T"].size * 2 + prepped["b2"].size * 4
                      + nh * N * nclasses * 4)

    kernel = functools.partial(_aux_head_kernel, n_batch=N, tp=tp)

    partials = pl.pallas_call(
        kernel,
        out_shape=jax.ShapeDtypeStruct((nh, N, nclasses), jnp.float32),
        grid_spec=pltpu.PrefetchScalarGridSpec(
            num_scalar_prefetch=0,
            grid=(nh, nkp),
            in_specs=[
                pl.BlockSpec((N, HW, C), lambda h, kp: (0, 0, 0)),     # x (full)
                pl.BlockSpec((tp, HW), lambda h, kp: (kp, 0)),         # pool mat
                pl.BlockSpec((C, K), lambda h, kp: (0, 0)),            # conv w
                pl.BlockSpec((1, K), lambda h, kp: (0, 0)),            # conv b
                pl.BlockSpec((tp, K, th), lambda h, kp: (kp, 0, h)),   # w1 bf16
                pl.BlockSpec((1, th), lambda h, kp: (0, h)),           # b1
                pl.BlockSpec((th, nclasses), lambda h, kp: (h, 0)),    # w2T bf16
            ],
            out_specs=pl.BlockSpec((1, N, nclasses), lambda h, kp: (h, 0, 0)),
            scratch_shapes=[pltpu.VMEM((N, th), jnp.float32)],
        ),
        compiler_params=pltpu.CompilerParams(
            dimension_semantics=("parallel", "arbitrary"),
            vmem_limit_bytes=8 * 1024 * 1024),
        cost_estimate=pl.CostEstimate(flops=flops, transcendentals=0,
                                      bytes_accessed=bytes_accessed),
    )(x_nhwc, prepped["pmat"], prepped["wcT"], prepped["bc"],
      prepped["w1_3d"], prepped["b1"], prepped["w2T"])

    # Cross-hidden-tile (cross-core on v7x) reduction of the partial logits,
    # plus the final bias -- an (nh, N, nclasses) sum, negligible.
    return partials.sum(axis=0) + prepped["b2"]


def _reference_forward(x, p):
    """Pure-JAX eval-mode reference mirroring the PyTorch module (f32)."""
    pooled = jax.lax.reduce_window(
        x, 0.0, jax.lax.add, (1, 1, 5, 5), (1, 1, 3, 3), "VALID") / 25.0
    conv = jnp.einsum("nchw,kc->nkhw", pooled, p["wc"],
                      precision=jax.lax.Precision.HIGHEST) + p["bc"][None, :, None, None]
    conv = jnp.maximum(conv, 0.0)
    flat = conv.reshape(x.shape[0], -1)
    h = jnp.maximum(
        jnp.dot(flat, p["w1"].T, precision=jax.lax.Precision.HIGHEST) + p["b1"], 0.0)
    return jnp.dot(h, p["w2"].T, precision=jax.lax.Precision.HIGHEST) + p["b2"]


if __name__ == "__main__":
    N, C, H, W = 2, 4, 16, 16           # small NCHW input
    nclasses = 10
    OH = OW = (H - 5) // 3 + 1          # = 4
    in_feat = 128 * OH * OW             # = 2048 (LazyLinear inferred features)

    key = jax.random.PRNGKey(0)
    ks = jax.random.split(key, 7)
    x = jax.random.normal(ks[0], (N, C, H, W), jnp.float32)
    params = dict(
        wc=jax.random.normal(ks[1], (128, C), jnp.float32) * 0.1,          # Conv2d(1x1) weight
        bc=jax.random.normal(ks[2], (128,), jnp.float32) * 0.1,            # Conv2d bias
        w1=jax.random.normal(ks[3], (1024, in_feat), jnp.float32) * 0.02,  # Linear1 weight
        b1=jax.random.normal(ks[4], (1024,), jnp.float32) * 0.02,          # Linear1 bias
        w2=jax.random.normal(ks[5], (nclasses, 1024), jnp.float32) * 0.02, # Linear2 weight
        b2=jax.random.normal(ks[6], (nclasses,), jnp.float32) * 0.02,      # Linear2 bias
    )

    prepped = prepare_params(params, x.shape)           # one-time weight prep
    out = jax.block_until_ready(aux_predictor_forward(x, prepped))
    assert out.shape == (N, nclasses) and out.dtype == jnp.float32

    expected = jax.block_until_ready(_reference_forward(x, params))
    # Tolerance loosened vs. a pure-f32 check because w1/w2 are streamed as
    # bf16 (f32 accumulation); stage 1 (pool + conv) stays f32.
    np.testing.assert_allclose(np.asarray(out), np.asarray(expected),
                               rtol=2e-2, atol=5e-3)

    print("KERNEL_OK")
</pallas_src>

<mosaic_0001>
module attributes {stable_mosaic.version = 11 : i64} {
  func.func @_aux_head_kernel(%arg0: i32, %arg1: i32, %arg2: memref<2x256x4xf32, #tpu.memory_space<vmem>>, %arg3: memref<8x256xf32, #tpu.memory_space<vmem>>, %arg4: memref<4x128xf32, #tpu.memory_space<vmem>>, %arg5: memref<1x128xf32, #tpu.memory_space<vmem>>, %arg6: memref<8x128x512xbf16, #tpu.memory_space<vmem>>, %arg7: memref<1x512xf32, #tpu.memory_space<vmem>>, %arg8: memref<512x10xbf16, #tpu.memory_space<vmem>>, %arg9: memref<1x2x10xf32, #tpu.memory_space<vmem>>, %arg10: memref<2x512xf32, #tpu.memory_space<vmem>>) attributes {dimension_semantics = [#tpu.dimension_semantics<parallel>, #tpu.dimension_semantics<arbitrary>], iteration_bounds = array<i64: 2, 2>, scalar_prefetch = 0 : i64, scratch_operands = 1 : i64, tpu.core_type = #tpu.core_type<tc>, window_params = [{pipeline_mode = #tpu.pipeline_mode<synchronous>, transform_indices = @transform_0, window_bounds = array<i64: 2, 256, 4>}, {transform_indices = @transform_1, window_bounds = array<i64: 8, 256>}, {pipeline_mode = #tpu.pipeline_mode<synchronous>, transform_indices = @transform_2, window_bounds = array<i64: 4, 128>}, {pipeline_mode = #tpu.pipeline_mode<synchronous>, transform_indices = @transform_3, window_bounds = array<i64: 1, 128>}, {transform_indices = @transform_4, window_bounds = array<i64: 8, 128, 512>}, {transform_indices = @transform_5, window_bounds = array<i64: 1, 512>}, {transform_indices = @transform_6, window_bounds = array<i64: 512, 10>}, {transform_indices = @transform_7, window_bounds = array<i64: 1, 2, 10>}]} {
    %c0_i32 = arith.constant 0 : i32
    %0 = arith.cmpi eq, %arg1, %c0_i32 : i32
    %1 = arith.extui %0 : i1 to i32
    %c0_i32_0 = arith.constant 0 : i32
    %2 = arith.cmpi ne, %1, %c0_i32_0 : i32
    scf.if %2 {
      %cst_48 = arith.constant 0.000000e+00 : f32
      %93 = vector.broadcast %cst_48 : f32 to vector<2x512xf32>
      %c0_49 = arith.constant 0 : index
      %c0_50 = arith.constant 0 : index
      %94 = vector.load %arg10[%c0_49, %c0_50] : memref<2x512xf32, #tpu.memory_space<vmem>>, vector<2x512xf32>
      tpu.vector_store %arg10[%c0_49, %c0_50], %93 {strides = array<i32>} : memref<2x512xf32, #tpu.memory_space<vmem>>, vector<2x512xf32>,
    } else {
    }
    %c0 = arith.constant 0 : index
    %c0_1 = arith.constant 0 : index
    %3 = vector.load %arg3[%c0, %c0_1] : memref<8x256xf32, #tpu.memory_space<vmem>>, vector<8x256xf32>
    %c0_2 = arith.constant 0 : index
    %c0_3 = arith.constant 0 : index
    %4 = vector.load %arg4[%c0_2, %c0_3] : memref<4x128xf32, #tpu.memory_space<vmem>>, vector<4x128xf32>
    %c0_4 = arith.constant 0 : index
    %c0_5 = arith.constant 0 : index
    %5 = vector.load %arg5[%c0_4, %c0_5] : memref<1x128xf32, #tpu.memory_space<vmem>>, vector<1x128xf32>
    %c0_6 = arith.constant 0 : index
    %c0_7 = arith.constant 0 : index
    %c0_8 = arith.constant 0 : index
    %6 = vector.load %arg2[%c0_6, %c0_7, %c0_8] : memref<2x256x4xf32, #tpu.memory_space<vmem>>, vector<1x256x4xf32>
    %7 = vector.shape_cast %6 : vector<1x256x4xf32> to vector<256x4xf32>
    %cst = arith.constant dense<0.000000e+00> : vector<8x4xf32>
    %8 = tpu.matmul %3, %7, %cst {dimension_numbers = #tpu.dot_dimension_numbers<[1], [0], [0], [1], [0, 0, 1, 1], [], []>} : vector<8x256xf32>, vector<256x4xf32>, vector<8x4xf32> -> vector<8x4xf32>
    %cst_9 = arith.constant dense<0.000000e+00> : vector<8x128xf32>
    %9 = tpu.matmul %8, %4, %cst_9 {dimension_numbers = #tpu.dot_dimension_numbers<[1], [0], [0], [1], [0, 0, 1, 1], [], []>} : vector<8x4xf32>, vector<4x128xf32>, vector<8x128xf32> -> vector<8x128xf32>
    %10 = vector.broadcast %5 : vector<1x128xf32> to vector<8x128xf32>
    %11 = arith.addf %9, %10 : vector<8x128xf32>
    %cst_10 = arith.constant 0.000000e+00 : f32
    %12 = vector.broadcast %cst_10 : f32 to vector<8x128xf32>
    %13 = arith.maximumf %11, %12 : vector<8x128xf32>
    %c1 = arith.constant 1 : index
    %c0_11 = arith.constant 0 : index
    %c0_12 = arith.constant 0 : index
    %14 = vector.load %arg2[%c1, %c0_11, %c0_12] : memref<2x256x4xf32, #tpu.memory_space<vmem>>, vector<1x256x4xf32>
    %15 = vector.shape_cast %14 : vector<1x256x4xf32> to vector<256x4xf32>
    %cst_13 = arith.constant dense<0.000000e+00> : vector<8x4xf32>
    %16 = tpu.matmul %3, %15, %cst_13 {dimension_numbers = #tpu.dot_dimension_numbers<[1], [0], [0], [1], [0, 0, 1, 1], [], []>} : vector<8x256xf32>, vector<256x4xf32>, vector<8x4xf32> -> vector<8x4xf32>
    %cst_14 = arith.constant dense<0.000000e+00> : vector<8x128xf32>
    %17 = tpu.matmul %16, %4, %cst_14 {dimension_numbers = #tpu.dot_dimension_numbers<[1], [0], [0], [1], [0, 0, 1, 1], [], []>} : vector<8x4xf32>, vector<4x128xf32>, vector<8x128xf32> -> vector<8x128xf32>
    %18 = vector.broadcast %5 : vector<1x128xf32> to vector<8x128xf32>
    %19 = arith.addf %17, %18 : vector<8x128xf32>
    %cst_15 = arith.constant 0.000000e+00 : f32
    %20 = vector.broadcast %cst_15 : f32 to vector<8x128xf32>
    %21 = arith.maximumf %19, %20 : vector<8x128xf32>
    %cst_16 = arith.constant 0.000000e+00 : f32
    %22 = vector.broadcast %cst_16 : f32 to vector<2x512xf32>
    %23 = vector.extract_strided_slice %13 {offsets = [0, 0], sizes = [1, 128], strides = [1, 1]} : vector<8x128xf32> to vector<1x128xf32>
    %24 = vector.extract_strided_slice %21 {offsets = [0, 0], sizes = [1, 128], strides = [1, 1]} : vector<8x128xf32> to vector<1x128xf32>
    %25 = tpu.concatenate %23, %24 in 0 : vector<1x128xf32>, vector<1x128xf32> -> vector<2x128xf32>
    %26 = arith.truncf %25 : vector<2x128xf32> to vector<2x128xbf16>
    %c0_17 = arith.constant 0 : index
    %c0_18 = arith.constant 0 : index
    %c0_19 = arith.constant 0 : index
    %27 = vector.load %arg6[%c0_17, %c0_18, %c0_19] : memref<8x128x512xbf16, #tpu.memory_space<vmem>>, vector<1x128x512xbf16>
    %28 = vector.shape_cast %27 : vector<1x128x512xbf16> to vector<128x512xbf16>
    %cst_20 = arith.constant dense<0.000000e+00> : vector<2x512xf32>
    %29 = tpu.matmul %26, %28, %cst_20 {dimension_numbers = #tpu.dot_dimension_numbers<[1], [0], [0], [1], [0, 0, 1, 1], [], []>} : vector<2x128xbf16>, vector<128x512xbf16>, vector<2x512xf32> -> vector<2x512xf32>
    %30 = arith.addf %22, %29 : vector<2x512xf32>
    %31 = vector.extract_strided_slice %13 {offsets = [1, 0], sizes = [1, 128], strides = [1, 1]} : vector<8x128xf32> to vector<1x128xf32>
    %32 = vector.extract_strided_slice %21 {offsets = [1, 0], sizes = [1, 128], strides = [1, 1]} : vector<8x128xf32> to vector<1x128xf32>
    %33 = tpu.concatenate %31, %32 in 0 : vector<1x128xf32>, vector<1x128xf32> -> vector<2x128xf32>
    %34 = arith.truncf %33 : vector<2x128xf32> to vector<2x128xbf16>
    %c1_21 = arith.constant 1 : index
    %c0_22 = arith.constant 0 : index
    %c0_23 = arith.constant 0 : index
    %35 = vector.load %arg6[%c1_21, %c0_22, %c0_23] : memref<8x128x512xbf16, #tpu.memory_space<vmem>>, vector<1x128x512xbf16>
    %36 = vector.shape_cast %35 : vector<1x128x512xbf16> to vector<128x512xbf16>
    %cst_24 = arith.constant dense<0.000000e+00> : vector<2x512xf32>
    %37 = tpu.matmul %34, %36, %cst_24 {dimension_numbers = #tpu.dot_dimension_numbers<[1], [0], [0], [1], [0, 0, 1, 1], [], []>} : vector<2x128xbf16>, vector<128x512xbf16>, vector<2x512xf32> -> vector<2x512xf32>
    %38 = arith.addf %30, %37 : vector<2x512xf32>
    %39 = vector.extract_strided_slice %13 {offsets = [2, 0], sizes = [1, 128], strides = [1, 1]} : vector<8x128xf32> to vector<1x128xf32>
    %40 = vector.extract_strided_slice %21 {offsets = [2, 0], sizes = [1, 128], strides = [1, 1]} : vector<8x128xf32> to vector<1x128xf32>
    %41 = tpu.concatenate %39, %40 in 0 : vector<1x128xf32>, vector<1x128xf32> -> vector<2x128xf32>
    %42 = arith.truncf %41 : vector<2x128xf32> to vector<2x128xbf16>
    %c2 = arith.constant 2 : index
    %c0_25 = arith.constant 0 : index
    %c0_26 = arith.constant 0 : index
    %43 = vector.load %arg6[%c2, %c0_25, %c0_26] : memref<8x128x512xbf16, #tpu.memory_space<vmem>>, vector<1x128x512xbf16>
    %44 = vector.shape_cast %43 : vector<1x128x512xbf16> to vector<128x512xbf16>
    %cst_27 = arith.constant dense<0.000000e+00> : vector<2x512xf32>
    %45 = tpu.matmul %42, %44, %cst_27 {dimension_numbers = #tpu.dot_dimension_numbers<[1], [0], [0], [1], [0, 0, 1, 1], [], []>} : vector<2x128xbf16>, vector<128x512xbf16>, vector<2x512xf32> -> vector<2x512xf32>
    %46 = arith.addf %38, %45 : vector<2x512xf32>
    %47 = vector.extract_strided_slice %13 {offsets = [3, 0], sizes = [1, 128], strides = [1, 1]} : vector<8x128xf32> to vector<1x128xf32>
    %48 = vector.extract_strided_slice %21 {offsets = [3, 0], sizes = [1, 128], strides = [1, 1]} : vector<8x128xf32> to vector<1x128xf32>
    %49 = tpu.concatenate %47, %48 in 0 : vector<1x128xf32>, vector<1x128xf32> -> vector<2x128xf32>
    %50 = arith.truncf %49 : vector<2x128xf32> to vector<2x128xbf16>
    %c3 = arith.constant 3 : index
    %c0_28 = arith.constant 0 : index
    %c0_29 = arith.constant 0 : index
    %51 = vector.load %arg6[%c3, %c0_28, %c0_29] : memref<8x128x512xbf16, #tpu.memory_space<vmem>>, vector<1x128x512xbf16>
    %52 = vector.shape_cast %51 : vector<1x128x512xbf16> to vector<128x512xbf16>
    %cst_30 = arith.constant dense<0.000000e+00> : vector<2x512xf32>
    %53 = tpu.matmul %50, %52, %cst_30 {dimension_numbers = #tpu.dot_dimension_numbers<[1], [0], [0], [1], [0, 0, 1, 1], [], []>} : vector<2x128xbf16>, vector<128x512xbf16>, vector<2x512xf32> -> vector<2x512xf32>
    %54 = arith.addf %46, %53 : vector<2x512xf32>
    %55 = vector.extract_strided_slice %13 {offsets = [4, 0], sizes = [1, 128], strides = [1, 1]} : vector<8x128xf32> to vector<1x128xf32>
    %56 = vector.extract_strided_slice %21 {offsets = [4, 0], sizes = [1, 128], strides = [1, 1]} : vector<8x128xf32> to vector<1x128xf32>
    %57 = tpu.concatenate %55, %56 in 0 : vector<1x128xf32>, vector<1x128xf32> -> vector<2x128xf32>
    %58 = arith.truncf %57 : vector<2x128xf32> to vector<2x128xbf16>
    %c4 = arith.constant 4 : index
    %c0_31 = arith.constant 0 : index
    %c0_32 = arith.constant 0 : index
    %59 = vector.load %arg6[%c4, %c0_31, %c0_32] : memref<8x128x512xbf16, #tpu.memory_space<vmem>>, vector<1x128x512xbf16>
    %60 = vector.shape_cast %59 : vector<1x128x512xbf16> to vector<128x512xbf16>
    %cst_33 = arith.constant dense<0.000000e+00> : vector<2x512xf32>
    %61 = tpu.matmul %58, %60, %cst_33 {dimension_numbers = #tpu.dot_dimension_numbers<[1], [0], [0], [1], [0, 0, 1, 1], [], []>} : vector<2x128xbf16>, vector<128x512xbf16>, vector<2x512xf32> -> vector<2x512xf32>
    %62 = arith.addf %54, %61 : vector<2x512xf32>
    %63 = vector.extract_strided_slice %13 {offsets = [5, 0], sizes = [1, 128], strides = [1, 1]} : vector<8x128xf32> to vector<1x128xf32>
    %64 = vector.extract_strided_slice %21 {offsets = [5, 0], sizes = [1, 128], strides = [1, 1]} : vector<8x128xf32> to vector<1x128xf32>
    %65 = tpu.concatenate %63, %64 in 0 : vector<1x128xf32>, vector<1x128xf32> -> vector<2x128xf32>
    %66 = arith.truncf %65 : vector<2x128xf32> to vector<2x128xbf16>
    %c5 = arith.constant 5 : index
    %c0_34 = arith.constant 0 : index
    %c0_35 = arith.constant 0 : index
    %67 = vector.load %arg6[%c5, %c0_34, %c0_35] : memref<8x128x512xbf16, #tpu.memory_space<vmem>>, vector<1x128x512xbf16>
    %68 = vector.shape_cast %67 : vector<1x128x512xbf16> to vector<128x512xbf16>
    %cst_36 = arith.constant dense<0.000000e+00> : vector<2x512xf32>
    %69 = tpu.matmul %66, %68, %cst_36 {dimension_numbers = #tpu.dot_dimension_numbers<[1], [0], [0], [1], [0, 0, 1, 1], [], []>} : vector<2x128xbf16>, vector<128x512xbf16>, vector<2x512xf32> -> vector<2x512xf32>
    %70 = arith.addf %62, %69 : vector<2x512xf32>
    %71 = vector.extract_strided_slice %13 {offsets = [6, 0], sizes = [1, 128], strides = [1, 1]} : vector<8x128xf32> to vector<1x128xf32>
    %72 = vector.extract_strided_slice %21 {offsets = [6, 0], sizes = [1, 128], strides = [1, 1]} : vector<8x128xf32> to vector<1x128xf32>
    %73 = tpu.concatenate %71, %72 in 0 : vector<1x128xf32>, vector<1x128xf32> -> vector<2x128xf32>
    %74 = arith.truncf %73 : vector<2x128xf32> to vector<2x128xbf16>
    %c6 = arith.constant 6 : index
    %c0_37 = arith.constant 0 : index
    %c0_38 = arith.constant 0 : index
    %75 = vector.load %arg6[%c6, %c0_37, %c0_38] : memref<8x128x512xbf16, #tpu.memory_space<vmem>>, vector<1x128x512xbf16>
    %76 = vector.shape_cast %75 : vector<1x128x512xbf16> to vector<128x512xbf16>
    %cst_39 = arith.constant dense<0.000000e+00> : vector<2x512xf32>
    %77 = tpu.matmul %74, %76, %cst_39 {dimension_numbers = #tpu.dot_dimension_numbers<[1], [0], [0], [1], [0, 0, 1, 1], [], []>} : vector<2x128xbf16>, vector<128x512xbf16>, vector<2x512xf32> -> vector<2x512xf32>
    %78 = arith.addf %70, %77 : vector<2x512xf32>
    %79 = vector.extract_strided_slice %13 {offsets = [7, 0], sizes = [1, 128], strides = [1, 1]} : vector<8x128xf32> to vector<1x128xf32>
    %80 = vector.extract_strided_slice %21 {offsets = [7, 0], sizes = [1, 128], strides = [1, 1]} : vector<8x128xf32> to vector<1x128xf32>
    %81 = tpu.concatenate %79, %80 in 0 : vector<1x128xf32>, vector<1x128xf32> -> vector<2x128xf32>
    %82 = arith.truncf %81 : vector<2x128xf32> to vector<2x128xbf16>
    %c7 = arith.constant 7 : index
    %c0_40 = arith.constant 0 : index
    %c0_41 = arith.constant 0 : index
    %83 = vector.load %arg6[%c7, %c0_40, %c0_41] : memref<8x128x512xbf16, #tpu.memory_space<vmem>>, vector<1x128x512xbf16>
    %84 = vector.shape_cast %83 : vector<1x128x512xbf16> to vector<128x512xbf16>
    %cst_42 = arith.constant dense<0.000000e+00> : vector<2x512xf32>
    %85 = tpu.matmul %82, %84, %cst_42 {dimension_numbers = #tpu.dot_dimension_numbers<[1], [0], [0], [1], [0, 0, 1, 1], [], []>} : vector<2x128xbf16>, vector<128x512xbf16>, vector<2x512xf32> -> vector<2x512xf32>
    %86 = arith.addf %78, %85 : vector<2x512xf32>
    %c0_43 = arith.constant 0 : index
    %c0_44 = arith.constant 0 : index
    %87 = vector.load %arg10[%c0_43, %c0_44] : memref<2x512xf32, #tpu.memory_space<vmem>>, vector<2x512xf32>
    %88 = arith.addf %87, %86 : vector<2x512xf32>
    %c0_45 = arith.constant 0 : index
    %c0_46 = arith.constant 0 : index
    %89 = vector.load %arg10[%c0_45, %c0_46] : memref<2x512xf32, #tpu.memory_space<vmem>>, vector<2x512xf32>
    tpu.vector_store %arg10[%c0_45, %c0_46], %88 {strides = array<i32>} : memref<2x512xf32, #tpu.memory_space<vmem>>, vector<2x512xf32>,
    %c1_i32 = arith.constant 1 : i32
    %90 = arith.cmpi eq, %arg1, %c1_i32 : i32
    %91 = arith.extui %90 : i1 to i32
    %c0_i32_47 = arith.constant 0 : i32
    %92 = arith.cmpi ne, %91, %c0_i32_47 : i32
    scf.if %92 {
      %c0_48 = arith.constant 0 : index
      %c0_49 = arith.constant 0 : index
      %93 = vector.load %arg10[%c0_48, %c0_49] : memref<2x512xf32, #tpu.memory_space<vmem>>, vector<2x512xf32>
      %c0_50 = arith.constant 0 : index
      %c0_51 = arith.constant 0 : index
      %94 = vector.load %arg7[%c0_50, %c0_51] : memref<1x512xf32, #tpu.memory_space<vmem>>, vector<1x512xf32>
      %95 = vector.broadcast %94 : vector<1x512xf32> to vector<2x512xf32>
      %96 = arith.addf %93, %95 : vector<2x512xf32>
      %cst_52 = arith.constant 0.000000e+00 : f32
      %97 = vector.broadcast %cst_52 : f32 to vector<2x512xf32>
      %98 = arith.maximumf %96, %97 : vector<2x512xf32>
      %c0_53 = arith.constant 0 : index
      %c0_54 = arith.constant 0 : index
      %99 = vector.load %arg8[%c0_53, %c0_54] : memref<512x10xbf16, #tpu.memory_space<vmem>>, vector<512x10xbf16>
      %100 = arith.extf %99 : vector<512x10xbf16> to vector<512x10xf32>
      %cst_55 = arith.constant dense<0.000000e+00> : vector<2x10xf32>
      %101 = tpu.matmul %98, %100, %cst_55 {dimension_numbers = #tpu.dot_dimension_numbers<[1], [0], [0], [1], [0, 0, 1, 1], [], []>} : vector<2x512xf32>, vector<512x10xf32>, vector<2x10xf32> -> vector<2x10xf32>
      %c0_56 = arith.constant 0 : index
      %c0_57 = arith.constant 0 : index
      %c0_58 = arith.constant 0 : index
      %102 = vector.load %arg9[%c0_56, %c0_57, %c0_58] : memref<1x2x10xf32, #tpu.memory_space<vmem>>, vector<1x2x10xf32>
      %103 = vector.shape_cast %102 : vector<1x2x10xf32> to vector<2x10xf32>
      %104 = vector.shape_cast %101 : vector<2x10xf32> to vector<1x2x10xf32>
      tpu.vector_store %arg9[%c0_56, %c0_57, %c0_58], %104 {strides = array<i32>} : memref<1x2x10xf32, #tpu.memory_space<vmem>>, vector<1x2x10xf32>,
    } else {
    }
    return
  }
  func.func @transform_0(%arg0: i32, %arg1: i32) -> (i32, i32, i32) {
    %c0_i32 = arith.constant 0 : i32
    %c0_i32_0 = arith.constant 0 : i32
    %c0_i32_1 = arith.constant 0 : i32
    %c0_i32_2 = arith.constant 0 : i32
    return %c0_i32, %c0_i32_0, %c0_i32_1 : i32, i32, i32
  }
  func.func @transform_1(%arg0: i32, %arg1: i32) -> (i32, i32) {
    %c0_i32 = arith.constant 0 : i32
    %c0_i32_0 = arith.constant 0 : i32
    return %arg1, %c0_i32 : i32, i32
  }
  func.func @transform_2(%arg0: i32, %arg1: i32) -> (i32, i32) {
    %c0_i32 = arith.constant 0 : i32
    %c0_i32_0 = arith.constant 0 : i32
    %c0_i32_1 = arith.constant 0 : i32
    return %c0_i32, %c0_i32_0 : i32, i32
  }
  func.func @transform_3(%arg0: i32, %arg1: i32) -> (i32, i32) {
    %c0_i32 = arith.constant 0 : i32
    %c0_i32_0 = arith.constant 0 : i32
    %c0_i32_1 = arith.constant 0 : i32
    return %c0_i32, %c0_i32_0 : i32, i32
  }
  func.func @transform_4(%arg0: i32, %arg1: i32) -> (i32, i32, i32) {
    %c0_i32 = arith.constant 0 : i32
    %c0_i32_0 = arith.constant 0 : i32
    return %arg1, %c0_i32, %arg0 : i32, i32, i32
  }
  func.func @transform_5(%arg0: i32, %arg1: i32) -> (i32, i32) {
    %c0_i32 = arith.constant 0 : i32
    %c0_i32_0 = arith.constant 0 : i32
    return %c0_i32, %arg0 : i32, i32
  }
  func.func @transform_6(%arg0: i32, %arg1: i32) -> (i32, i32) {
    %c0_i32 = arith.constant 0 : i32
    %c0_i32_0 = arith.constant 0 : i32
    return %arg0, %c0_i32 : i32, i32
  }
  func.func @transform_7(%arg0: i32, %arg1: i32) -> (i32, i32, i32) {
    %c0_i32 = arith.constant 0 : i32
    %c0_i32_0 = arith.constant 0 : i32
    %c0_i32_1 = arith.constant 0 : i32
    return %arg0, %c0_i32, %c0_i32_0 : i32, i32, i32
  }
}

</mosaic_0001>

<llo_original>
// kernel: aux_predictor_forward.1
$region0: #{aux_predictor_forward.1}
  #allocation0 [shape = 'u32[]', space=smem, size = 0x4, offset = 0x4, fixed_abs, tag = 'smem constant byte address 0x4 - core index']
  #allocation1 [shape = 'u32[144,128]{1,0:T(1,128)}', space=vmem, size = 0x12000, scoped, tag = 'internal scratch']
  #allocation2 [shape = 'f32[2,512]{1,0:T(2,128)}', space=vmem, size = 0x1000, scoped, tag = 'scratch operand']
  %s0 = inlined_call_operand.vmem [shape: f32[2,256,4], index: 0, kind: input, shape index: {}]
  %s1 = inlined_call_operand.hbm [shape: f32[16,256], index: 1, kind: input, shape index: {}]
  %s2 = inlined_call_operand.hbm [shape: f32[4,128], index: 2, kind: input, shape index: {}]
  %s3 = inlined_call_operand.hbm [shape: f32[1,128], index: 3, kind: input, shape index: {}]
  %s4 = inlined_call_operand.hbm [shape: bf16[16,128,1024], index: 4, kind: input, shape index: {}]
  %s5 = inlined_call_operand.hbm [shape: f32[1,1024], index: 5, kind: input, shape index: {}]
  %s6 = inlined_call_operand.vmem [shape: bf16[1024,10], index: 6, kind: input, shape index: {}]
  %s7 = inlined_call_operand.vmem [shape: f32[2,2,10], index: 7, kind: output, shape index: {}]
  %s8 = sld [smem:[#allocation0]]
  $region89: #{aux_predictor_forward.1} parent=0
    _
  %s10 = ssub.s32 1, %s8
  %s11 = scalar_select 0, %s10, %s8
  $region1: #{aux_predictor_forward.1} parent=0
    #allocation3 [shape = 'u8[16384]{0}', space=vmem, size = 0x4000, scoped, tag = 'input window, operand 1']
    #allocation4 [shape = 's32[2]{0}', space=sflag, size = 0x8, scoped, tag = 'scoped memory for aux_predictor_forward.1']
    #allocation5 [shape = 'u8[2048]{0}', space=vmem, size = 0x800, scoped, tag = 'input window, operand 2, single buffered']
    #allocation6 [shape = 's32[1]{0}', space=sflag, size = 0x4, scoped, tag = 'scoped memory for aux_predictor_forward.1']
    #allocation7 [shape = 'u8[512]{0}', space=vmem, size = 0x400, scoped, tag = 'input window, operand 3, single buffered']
    #allocation8 [shape = 'u8[2097152]{0}', space=vmem, size = 0x200000, scoped, tag = 'input window, operand 4']
    #allocation9 [shape = 's32[2]{0}', space=sflag, size = 0x8, scoped, tag = 'scoped memory for aux_predictor_forward.1']
    #allocation10 [shape = 'u8[4096]{0}', space=vmem, size = 0x1000, scoped, tag = 'input window, operand 5']
    %12 = vsyncpa [#allocation4], 0
    %s13 = scalar_lea.sflag [#allocation4], 1
    %14 = vsyncpa %s13, 0
    %15 = vsyncpa [#allocation6], 0
    %16 = vsyncpa [#allocation9], 0
    %s17 = scalar_lea.sflag [#allocation9], 1
    %18 = vsyncpa %s17, 0
    loop: start=0, step=1, limit=6
    $region2: #{aux_predictor_forward.1} parent=1 // loop_pre_header
      _
    $region3: #{aux_predictor_forward.1} parent=1 // loop_header
      %s20 = sphi 0, %s24
      %p21 = scmp.ge.s32.totalorder %s20, 6
      %s27 = sphi 0, %s39
      %s28 = sphi 0, %s35
      %s29 = sphi 0, %s27
      %s30 = sphi 0, %s28
      %s31 = sphi 0, %s29
      %s32 = sphi 0, %s30
      %s40 = sphi 0, %s40
      %s42 = sphi 0, %s40
      %s43 = sphi 0, %s42
      %s57 = sphi 0, %s43
      %s63 = sphi 0, %s65
      %s66 = sphi 0, %s63
      %s67 = sphi 0, %s66
      %s83 = sphi 0, %s67
      %s87 = sphi 0, %s87
      %s89 = sphi 0, %s87
      %s90 = sphi 0, %s89
      %s104 = sphi 0, %s90
      %s108 = sphi 0, %s108
      %s110 = sphi 0, %s108
      %s111 = sphi 0, %s110
      %s125 = sphi 0, %s111
      %s133 = sphi 0, %s135
      %s136 = sphi 0, %s133
      %s137 = sphi 0, %s136
      %s153 = sphi 0, %s137
      %s159 = sphi 0, %s161
      %s162 = sphi 0, %s159
      %s163 = sphi 0, %s162
      %s179 = sphi 0, %s163
      %s185 = sphi 0, %s187
      %s188 = sphi 0, %s185
      %s189 = sphi 0, %s188
      %s205 = sphi 0, %s189
      %s211 = sphi 0, %s213
      %s214 = sphi 0, %s211
      %s215 = sphi 0, %s214
      %s231 = sphi 0, %s215
    $region4: #{aux_predictor_forward.1} parent=1 // loop_header_branch
      %23 = sbr.rel (%p21) target = $region8
    $region5: #{aux_predictor_forward.1} parent=1 // loop_body
      %s25 = ssub.s32 %s20, 1
      %s26 = ssub.s32 %s20, 2
      %s33 = sadd.s32 1, %s28
      %p34 = scmp.ge.s32.totalorder %s33, 2
      %s35 = scalar_select %p34, 0, %s33
      %s36 = sadd.s32 1, %s27
      %s37 = scalar_select %p34, %s36, %s27
      %p38 = scmp.ge.s32.totalorder %s37, 2
      %s39 = scalar_select %p38, 0, %s37
      %s41 = sadd.s32 %s40, 1
      %p44 = scmp.eq.s32.totalorder %s20, 3
      %p45 = scmp.ne.s32.totalorder %s40, %s42
      %p46 = scmp.eq.s32.totalorder %s20, 0
      %p47 = por %p45, %p46
      %p48 = scmp.ne.s32.totalorder %s40, %s42
      %p49 = scmp.eq.s32.totalorder %s25, 3
      %p50 = por %p48, %p49
      %p51 = scmp.ne.s32.totalorder %s42, %s43
      %p52 = scmp.eq.s32.totalorder %s25, 0
      %p53 = por %p51, %p52
      %p54 = scmp.ne.s32.totalorder %s42, %s43
      %p55 = scmp.eq.s32.totalorder %s26, 3
      %p56 = por %p54, %p55
      %p58 = scmp.ne.s32.totalorder %s43, %s57
      %p59 = scmp.eq.s32.totalorder %s26, 0
      %p60 = por %p58, %p59
      %s61 = ssub.s32 %s28, %s35
      %p62 = scmp.eq.s32.totalorder %s61, 0
      %s64 = sadd.s32 %s63, 1
      %s65 = scalar_select %p62, %s63, %s64
      %p68 = pneg %p62
      %p69 = scmp.eq.s32.totalorder %s20, 3
      %p70 = por %p68, %p69
      %p71 = scmp.ne.s32.totalorder %s63, %s66
      %p72 = scmp.eq.s32.totalorder %s20, 0
      %p73 = por %p71, %p72
      %p74 = scmp.ne.s32.totalorder %s63, %s66
      %p75 = scmp.eq.s32.totalorder %s25, 3
      %p76 = por %p74, %p75
      %p77 = scmp.ne.s32.totalorder %s66, %s67
      %p78 = scmp.eq.s32.totalorder %s25, 0
      %p79 = por %p77, %p78
      %p80 = scmp.ne.s32.totalorder %s66, %s67
      %p81 = scmp.eq.s32.totalorder %s26, 3
      %p82 = por %p80, %p81
      %p84 = scmp.ne.s32.totalorder %s67, %s83
      %p85 = scmp.eq.s32.totalorder %s26, 0
      %p86 = por %p84, %p85
      %s88 = sadd.s32 %s87, 1
      %p91 = scmp.eq.s32.totalorder %s20, 3
      %p92 = scmp.ne.s32.totalorder %s87, %s89
      %p93 = scmp.eq.s32.totalorder %s20, 0
      %p94 = por %p92, %p93
      %p95 = scmp.ne.s32.totalorder %s87, %s89
      %p96 = scmp.eq.s32.totalorder %s25, 3
      %p97 = por %p95, %p96
      %p98 = scmp.ne.s32.totalorder %s89, %s90
      %p99 = scmp.eq.s32.totalorder %s25, 0
      %p100 = por %p98, %p99
      %p101 = scmp.ne.s32.totalorder %s89, %s90
      %p102 = scmp.eq.s32.totalorder %s26, 3
      %p103 = por %p101, %p102
      %p105 = scmp.ne.s32.totalorder %s90, %s104
      %p106 = scmp.eq.s32.totalorder %s26, 0
      %p107 = por %p105, %p106
      %s109 = sadd.s32 %s108, 1
      %p112 = scmp.eq.s32.totalorder %s20, 3
      %p113 = scmp.ne.s32.totalorder %s108, %s110
      %p114 = scmp.eq.s32.totalorder %s20, 0
      %p115 = por %p113, %p114
      %p116 = scmp.ne.s32.totalorder %s108, %s110
      %p117 = scmp.eq.s32.totalorder %s25, 3
      %p118 = por %p116, %p117
      %p119 = scmp.ne.s32.totalorder %s110, %s111
      %p120 = scmp.eq.s32.totalorder %s25, 0
      %p121 = por %p119, %p120
      %p122 = scmp.ne.s32.totalorder %s110, %s111
      %p123 = scmp.eq.s32.totalorder %s26, 3
      %p124 = por %p122, %p123
      %p126 = scmp.ne.s32.totalorder %s111, %s125
      %p127 = scmp.eq.s32.totalorder %s26, 0
      %p128 = por %p126, %p127
      %s129 = ssub.s32 %s28, %s35
      %s130 = ssub.s32 %s27, %s39
      %s131 = sor.u32 %s129, %s130
      %p132 = scmp.eq.s32.totalorder %s131, 0
      %s134 = sadd.s32 %s133, 1
      %s135 = scalar_select %p132, %s133, %s134
      %p138 = pneg %p132
      %p139 = scmp.eq.s32.totalorder %s20, 3
      %p140 = por %p138, %p139
      %p141 = scmp.ne.s32.totalorder %s133, %s136
      %p142 = scmp.eq.s32.totalorder %s20, 0
      %p143 = por %p141, %p142
      %p144 = scmp.ne.s32.totalorder %s133, %s136
      %p145 = scmp.eq.s32.totalorder %s25, 3
      %p146 = por %p144, %p145
      %p147 = scmp.ne.s32.totalorder %s136, %s137
      %p148 = scmp.eq.s32.totalorder %s25, 0
      %p149 = por %p147, %p148
      %p150 = scmp.ne.s32.totalorder %s136, %s137
      %p151 = scmp.eq.s32.totalorder %s26, 3
      %p152 = por %p150, %p151
      %p154 = scmp.ne.s32.totalorder %s137, %s153
      %p155 = scmp.eq.s32.totalorder %s26, 0
      %p156 = por %p154, %p155
      %s157 = ssub.s32 %s27, %s39
      %p158 = scmp.eq.s32.totalorder %s157, 0
      %s160 = sadd.s32 %s159, 1
      %s161 = scalar_select %p158, %s159, %s160
      %p164 = pneg %p158
      %p165 = scmp.eq.s32.totalorder %s20, 3
      %p166 = por %p164, %p165
      %p167 = scmp.ne.s32.totalorder %s159, %s162
      %p168 = scmp.eq.s32.totalorder %s20, 0
      %p169 = por %p167, %p168
      %p170 = scmp.ne.s32.totalorder %s159, %s162
      %p171 = scmp.eq.s32.totalorder %s25, 3
      %p172 = por %p170, %p171
      %p173 = scmp.ne.s32.totalorder %s162, %s163
      %p174 = scmp.eq.s32.totalorder %s25, 0
      %p175 = por %p173, %p174
      %p176 = scmp.ne.s32.totalorder %s162, %s163
      %p177 = scmp.eq.s32.totalorder %s26, 3
      %p178 = por %p176, %p177
      %p180 = scmp.ne.s32.totalorder %s163, %s179
      %p181 = scmp.eq.s32.totalorder %s26, 0
      %p182 = por %p180, %p181
      %s183 = ssub.s32 %s27, %s39
      %p184 = scmp.eq.s32.totalorder %s183, 0
      %s186 = sadd.s32 %s185, 1
      %s187 = scalar_select %p184, %s185, %s186
      %p190 = pneg %p184
      %p191 = scmp.eq.s32.totalorder %s20, 3
      %p192 = por %p190, %p191
      %p193 = scmp.ne.s32.totalorder %s185, %s188
      %p194 = scmp.eq.s32.totalorder %s20, 0
      %p195 = por %p193, %p194
      %p196 = scmp.ne.s32.totalorder %s185, %s188
      %p197 = scmp.eq.s32.totalorder %s25, 3
      %p198 = por %p196, %p197
      %p199 = scmp.ne.s32.totalorder %s188, %s189
      %p200 = scmp.eq.s32.totalorder %s25, 0
      %p201 = por %p199, %p200
      %p202 = scmp.ne.s32.totalorder %s188, %s189
      %p203 = scmp.eq.s32.totalorder %s26, 3
      %p204 = por %p202, %p203
      %p206 = scmp.ne.s32.totalorder %s189, %s205
      %p207 = scmp.eq.s32.totalorder %s26, 0
      %p208 = por %p206, %p207
      %s209 = ssub.s32 %s27, %s39
      %p210 = scmp.eq.s32.totalorder %s209, 0
      %s212 = sadd.s32 %s211, 1
      %s213 = scalar_select %p210, %s211, %s212
      %p216 = pneg %p210
      %p217 = scmp.eq.s32.totalorder %s20, 3
      %p218 = por %p216, %p217
      %p219 = scmp.ne.s32.totalorder %s211, %s214
      %p220 = scmp.eq.s32.totalorder %s20, 0
      %p221 = por %p219, %p220
      %p222 = scmp.ne.s32.totalorder %s211, %s214
      %p223 = scmp.eq.s32.totalorder %s25, 3
      %p224 = por %p222, %p223
      %p225 = scmp.ne.s32.totalorder %s214, %s215
      %p226 = scmp.eq.s32.totalorder %s25, 0
      %p227 = por %p225, %p226
      %p228 = scmp.ne.s32.totalorder %s214, %s215
      %p229 = scmp.eq.s32.totalorder %s26, 3
      %p230 = por %p228, %p229
      %p232 = scmp.ne.s32.totalorder %s215, %s231
      %p233 = scmp.eq.s32.totalorder %s26, 0
      %p234 = por %p232, %p233
      %p235 = scmp.le.s32.totalorder 1, %s20
      %p236 = scmp.lt.s32.totalorder %s20, 5
      %p237 = pnand %p235, %p236
      %p238 = pneg %p237
      // Predicated region
      $region9: #{aux_predictor_forward.1} parent=5 // pred_check
        _
      $region10: #{aux_predictor_forward.1} parent=5 // pred_check_branch
        %240 = sbr.rel (%p237) target = $region12
      $region11: #{aux_predictor_forward.1} parent=5 // pred_region
        %s241 = ssub.s32 %s20, 1
        // Predicated region
        $region13: #{aux_predictor_forward.1} parent=11 // pred_check
          %p242 = pneg %p53
        $region14: #{aux_predictor_forward.1} parent=11 // pred_check_branch
          %244 = sbr.rel (%p242) target = $region16
        $region15: #{aux_predictor_forward.1} parent=11 // pred_region
          _
        $region16: #{aux_predictor_forward.1} parent=11 // pred_fallthru
          _
        // Predicated region
        $region17: #{aux_predictor_forward.1} parent=11 // pred_check
          %p245 = pneg %p100
        $region18: #{aux_predictor_forward.1} parent=11 // pred_check_branch
          %247 = sbr.rel (%p245) target = $region20
        $region19: #{aux_predictor_forward.1} parent=11 // pred_region
          %s249 = ssub.s32 64, 64
          %250 = vsyncadd [#allocation6], %s249
          %s252 = sshll.u32 [#allocation5], 4
          %s253 = int_to_ptr.vmem [resolvable:$true] %s252
          %255 = dma.hbm_to_vmem [thread:$0]  %s2, 64, %s253, [#allocation6]
        $region20: #{aux_predictor_forward.1} parent=11 // pred_fallthru
          _
        // Predicated region
        $region21: #{aux_predictor_forward.1} parent=11 // pred_check
          %p256 = pneg %p121
        $region22: #{aux_predictor_forward.1} parent=11 // pred_check_branch
          %258 = sbr.rel (%p256) target = $region24
        $region23: #{aux_predictor_forward.1} parent=11 // pred_region
          %s260 = ssub.s32 16, 16
          %261 = vsyncadd [#allocation6], %s260
          %s263 = sshll.u32 [#allocation7], 4
          %s264 = int_to_ptr.vmem [resolvable:$true] %s263
          %266 = dma.hbm_to_vmem [thread:$0]  %s3, 16, %s264, [#allocation6]
        $region24: #{aux_predictor_forward.1} parent=11 // pred_fallthru
          _
      $region12: #{aux_predictor_forward.1} parent=5 // pred_fallthru
        _
      %p267 = scmp.lt.s32.totalorder %s20, 4
      // Predicated region
      $region25: #{aux_predictor_forward.1} parent=5 // pred_check
        %p268 = pneg %p267
      $region26: #{aux_predictor_forward.1} parent=5 // pred_check_branch
        %270 = sbr.rel (%p268) target = $region28
      $region27: #{aux_predictor_forward.1} parent=5 // pred_region
        // Predicated region
        $region29: #{aux_predictor_forward.1} parent=27 // pred_check
          %p271 = pneg %p73
        $region30: #{aux_predictor_forward.1} parent=27 // pred_check_branch
          %273 = sbr.rel (%p271) target = $region32
        $region31: #{aux_predictor_forward.1} parent=27 // pred_region
          %s274 = sand.u32 %s63, 1
          %s275 = scalar_lea.sflag [#allocation4], %s274
          %s276 = sand.u32 %s63, 1
          %s277 = smul.addr %s276, 16
          %s278 = scalar_lea.vmem [#allocation3], %s277
          %s280 = ssub.s32 256, 256
          %281 = vsyncadd %s275, %s280
          %s282 = smul.addr %s28, 2
          %s283 = smul.addr %s282, 128
          %s284 = scalar_lea.hbm %s1, %s283
          %s286 = sshll.u32 %s278, 4
          %s287 = int_to_ptr.vmem [resolvable:$true] %s286
          %289 = dma.hbm_to_vmem [thread:$0]  %s284, 256, %s287, %s275
        $region32: #{aux_predictor_forward.1} parent=27 // pred_fallthru
          _
        // Predicated region
        $region33: #{aux_predictor_forward.1} parent=27 // pred_check
          %p290 = pneg %p143
        $region34: #{aux_predictor_forward.1} parent=27 // pred_check_branch
          %292 = sbr.rel (%p290) target = $region36
        $region35: #{aux_predictor_forward.1} parent=27 // pred_region
          %s293 = sand.u32 %s20, 1
          %s294 = scalar_lea.sflag [#allocation9], %s293
          %s295 = sand.u32 %s133, 1
          %s296 = smul.addr %s295, 2048
          %s297 = scalar_lea.vmem [#allocation8], %s296
          %s298 = smul.u32 8, %s28
          %s299 = smul.u32 4, %s27
          %s301 = ssub.s32 32768, 32768
          %302 = vsyncadd %s294, %s301
          %s303 = smul.addr %s298, 128
          %s304 = sadd.s32 %s299, %s303
          %s305 = smul.addr %s304, 64
          %s306 = scalar_lea.hbm %s4, %s305
          %s307 = sshll.u32 %s297, 4
          %s308 = int_to_ptr.vmem [resolvable:$true] %s307
          %313 = dma.hbm_to_vmem [thread:$0]  %s306, 32768, %s308, %s294, 512, 256, 16
        $region36: #{aux_predictor_forward.1} parent=27 // pred_fallthru
          _
        // Predicated region
        $region37: #{aux_predictor_forward.1} parent=27 // pred_check
          %p314 = pneg %p169
        $region38: #{aux_predictor_forward.1} parent=27 // pred_check_branch
          %316 = sbr.rel (%p314) target = $region40
        $region39: #{aux_predictor_forward.1} parent=27 // pred_region
          %s317 = sand.u32 %s20, 1
          %s318 = scalar_lea.sflag [#allocation9], %s317
          %s319 = sand.u32 %s159, 1
          %s320 = smul.addr %s319, 4
          %s321 = scalar_lea.vmem [#allocation10], %s320
          %s322 = smul.u32 4, %s27
          %s324 = ssub.s32 64, 64
          %325 = vsyncadd %s318, %s324
          %s326 = smul.addr %s322, 16
          %s327 = scalar_lea.hbm %s5, %s326
          %s329 = sshll.u32 %s321, 4
          %s330 = int_to_ptr.vmem [resolvable:$true] %s329
          %332 = dma.hbm_to_vmem [thread:$0]  %s327, 64, %s330, %s318
        $region40: #{aux_predictor_forward.1} parent=27 // pred_fallthru
          _
        // Predicated region
        $region41: #{aux_predictor_forward.1} parent=27 // pred_check
          %p333 = pneg %p195
        $region42: #{aux_predictor_forward.1} parent=27 // pred_check_branch
          %335 = sbr.rel (%p333) target = $region44
        $region43: #{aux_predictor_forward.1} parent=27 // pred_region
          %s336 = smul.u32 64, %s27
          %p337 = scmp.lt.s32.totalorder %s336, 127
          %s338 = scalar_select %p337, %s336, 127
          %s339 = smul.addr %s338, 4
          %s340 = scalar_lea.vmem %s6, %s339
          %s341 = smul.u32 64, %s27
        $region44: #{aux_predictor_forward.1} parent=27 // pred_fallthru
          _
      $region28: #{aux_predictor_forward.1} parent=5 // pred_fallthru
        _
      %p342 = scmp.le.s32.totalorder 1, %s20
      %p343 = scmp.lt.s32.totalorder %s20, 5
      %p344 = pnand %p342, %p343
      %p345 = pneg %p344
      // Predicated region
      $region45: #{aux_predictor_forward.1} parent=5 // pred_check
        _
      $region46: #{aux_predictor_forward.1} parent=5 // pred_check_branch
        %347 = sbr.rel (%p344) target = $region48
      $region47: #{aux_predictor_forward.1} parent=5 // pred_region
        %s348 = ssub.s32 %s20, 1
        %s349 = sand.u32 %s66, 1
        %s350 = scalar_lea.sflag [#allocation4], %s349
        %s351 = sand.u32 %s66, 1
        %s352 = smul.addr %s351, 16
        %s353 = scalar_lea.vmem [#allocation3], %s352
        // Predicated region
        $region49: #{aux_predictor_forward.1} parent=47 // pred_check
          %p354 = pneg %p79
        $region50: #{aux_predictor_forward.1} parent=47 // pred_check_branch
          %356 = sbr.rel (%p354) target = $region52
        $region51: #{aux_predictor_forward.1} parent=47 // pred_region
          %357 = dma.done %s350, 256
        $region52: #{aux_predictor_forward.1} parent=47 // pred_fallthru
          _
        // Predicated region
        $region53: #{aux_predictor_forward.1} parent=47 // pred_check
          %p358 = pneg %p100
        $region54: #{aux_predictor_forward.1} parent=47 // pred_check_branch
          %360 = sbr.rel (%p358) target = $region56
        $region55: #{aux_predictor_forward.1} parent=47 // pred_region
          %361 = dma.done [#allocation6], 64
        $region56: #{aux_predictor_forward.1} parent=47 // pred_fallthru
          _
        // Predicated region
        $region57: #{aux_predictor_forward.1} parent=47 // pred_check
          %p362 = pneg %p121
        $region58: #{aux_predictor_forward.1} parent=47 // pred_check_branch
          %364 = sbr.rel (%p362) target = $region60
        $region59: #{aux_predictor_forward.1} parent=47 // pred_region
          %365 = dma.done [#allocation6], 16
        $region60: #{aux_predictor_forward.1} parent=47 // pred_fallthru
          _
        %s366 = sand.u32 %s25, 1
        %s367 = scalar_lea.sflag [#allocation9], %s366
        %s368 = sand.u32 %s136, 1
        %s369 = smul.addr %s368, 2048
        %s370 = scalar_lea.vmem [#allocation8], %s369
        // Predicated region
        $region61: #{aux_predictor_forward.1} parent=47 // pred_check
          %p371 = pneg %p149
        $region62: #{aux_predictor_forward.1} parent=47 // pred_check_branch
          %373 = sbr.rel (%p371) target = $region64
        $region63: #{aux_predictor_forward.1} parent=47 // pred_region
          %374 = dma.done %s367, 32768
        $region64: #{aux_predictor_forward.1} parent=47 // pred_fallthru
          _
        %s375 = sand.u32 %s25, 1
        %s376 = scalar_lea.sflag [#allocation9], %s375
        %s377 = sand.u32 %s162, 1
        %s378 = smul.addr %s377, 4
        %s379 = scalar_lea.vmem [#allocation10], %s378
        // Predicated region
        $region65: #{aux_predictor_forward.1} parent=47 // pred_check
          %p380 = pneg %p175
        $region66: #{aux_predictor_forward.1} parent=47 // pred_check_branch
          %382 = sbr.rel (%p380) target = $region68
        $region67: #{aux_predictor_forward.1} parent=47 // pred_region
          %383 = dma.done %s376, 64
        $region68: #{aux_predictor_forward.1} parent=47 // pred_fallthru
          _
        %p384 = pneg %p53
        %p385 = pneg %p50
        %s386 = sand.u32 %s66, 1
        %s387 = scalar_lea.sflag [#allocation4], %s386
        %s388 = sand.u32 %s66, 1
        %s389 = smul.addr %s388, 16
        %s390 = scalar_lea.vmem [#allocation3], %s389
        %p391 = pneg %p79
        %p392 = pneg %p76
        %p393 = pneg %p100
        %p394 = pneg %p97
        %p395 = pneg %p121
        %p396 = pneg %p118
        %s397 = sand.u32 %s25, 1
        %s398 = scalar_lea.sflag [#allocation9], %s397
        %s399 = sand.u32 %s136, 1
        %s400 = smul.addr %s399, 2048
        %s401 = scalar_lea.vmem [#allocation8], %s400
        %p402 = pneg %p149
        %p403 = pneg %p146
        %s404 = sand.u32 %s25, 1
        %s405 = scalar_lea.sflag [#allocation9], %s404
        %s406 = sand.u32 %s162, 1
        %s407 = smul.addr %s406, 4
        %s408 = scalar_lea.vmem [#allocation10], %s407
        %p409 = pneg %p175
        %p410 = pneg %p172
        %s411 = smul.u32 64, %s29
        %p412 = scmp.lt.s32.totalorder %s411, 127
        %s413 = scalar_select %p412, %s411, 127
        %s414 = smul.addr %s413, 4
        %s415 = scalar_lea.vmem %s6, %s414
        %p416 = pneg %p201
        %p417 = pneg %p198
        %p418 = pneg %p227
        %p419 = pneg %p224
        %p420 = scmp.lt.s32.totalorder %s29, 1
        %s421 = scalar_select %p420, %s29, 1
        %s422 = smul.addr %s421, 2
        %s423 = scalar_lea.vmem %s7, %s422
        %s424 = smul.u32 8, %s30
        %s425 = smul.u32 4, %s29
        %s426 = smul.u32 4, %s29
        %s427 = smul.u32 64, %s29
        %p428 = scmp.lt.s32.totalorder %s427, 127
        %s429 = scalar_select %p428, %s427, 127
        %s430 = smul.addr %s429, 4
        %s431 = scalar_lea.vmem %s6, %s430
        %s432 = smul.u32 64, %s29
        %p433 = scmp.lt.s32.totalorder %s29, 1
        %s434 = scalar_select %p433, %s29, 1
        %s435 = smul.addr %s434, 2
        %s436 = scalar_lea.vmem %s7, %s435
        %p438 = scmp.eq.s32.totalorder %s30, 0
        // Predicated region
        $region69: #{aux_predictor_forward.1} parent=47 // pred_check
          %p439 = pneg %p438
        $region70: #{aux_predictor_forward.1} parent=47 // pred_check_branch
          %441 = sbr.rel (%p439) target = $region72
        $region71: #{aux_predictor_forward.1} parent=47 // pred_region
          %442 = vst [vmem:[#allocation2] sm:$0xff] 0.0
        $region72: #{aux_predictor_forward.1} parent=47 // pred_fallthru
          _
        %v443 = vld [vmem:[%s353] sm:$0xff]
        %v444 = vld [vmem:[%s353 + $0x8] sm:$0xff]
        %v445 = vld [vmem:[#allocation5] sm:$0xf]
        %v446 = vld [vmem:[#allocation7] sm:$0x1]
        %v447 = vld [vmem:[%s0] sm:$0xff]
        %v448 = vld [vmem:[%s0 + $0x8] sm:$0xff]
        %v449 = vld [vmem:[%s0 + $0x10] sm:$0xff]
        %v450 = vld [vmem:[%s0 + $0x18] sm:$0xff]
        %v451 = vld [vmem:[%s0 + $0x20] sm:$0xff]
        %v452 = vld [vmem:[%s0 + $0x28] sm:$0xff]
        %v453 = vld [vmem:[%s0 + $0x30] sm:$0xff]
        %v454 = vld [vmem:[%s0 + $0x38] sm:$0xff]
        %v455 = vld [vmem:[%s0 + $0x40] sm:$0xff]
        %v456 = vld [vmem:[%s0 + $0x48] sm:$0xff]
        %v457 = vld [vmem:[%s0 + $0x50] sm:$0xff]
        %v458 = vld [vmem:[%s0 + $0x58] sm:$0xff]
        %v459 = vld [vmem:[%s0 + $0x60] sm:$0xff]
        %v460 = vld [vmem:[%s0 + $0x68] sm:$0xff]
        %v461 = vld [vmem:[%s0 + $0x70] sm:$0xff]
        %v462 = vld [vmem:[%s0 + $0x78] sm:$0xff]
        %v463 = vld [vmem:[%s0 + $0x80] sm:$0xff]
        %v464 = vld [vmem:[%s0 + $0x88] sm:$0xff]
        %v465 = vld [vmem:[%s0 + $0x90] sm:$0xff]
        %v466 = vld [vmem:[%s0 + $0x98] sm:$0xff]
        %v467 = vld [vmem:[%s0 + $0xa0] sm:$0xff]
        %v468 = vld [vmem:[%s0 + $0xa8] sm:$0xff]
        %v469 = vld [vmem:[%s0 + $0xb0] sm:$0xff]
        %v470 = vld [vmem:[%s0 + $0xb8] sm:$0xff]
        %v471 = vld [vmem:[%s0 + $0xc0] sm:$0xff]
        %v472 = vld [vmem:[%s0 + $0xc8] sm:$0xff]
        %v473 = vld [vmem:[%s0 + $0xd0] sm:$0xff]
        %v474 = vld [vmem:[%s0 + $0xd8] sm:$0xff]
        %v475 = vld [vmem:[%s0 + $0xe0] sm:$0xff]
        %v476 = vld [vmem:[%s0 + $0xe8] sm:$0xff]
        %v477 = vld [vmem:[%s0 + $0xf0] sm:$0xff]
        %v478 = vld [vmem:[%s0 + $0xf8] sm:$0xff]
        %479 = vmatprep.subr.mxu0 0.0
        %480 = vmatpush1.msra.mxu0 %v462
        %481 = vmatprep.subr.mxu0 0.0
        %482 = vmatpush1.msra.mxu0 %v461
        %483 = vmatprep.subr.mxu0 0.0
        %484 = vmatpush1.msra.mxu0 %v460
        %485 = vmatprep.subr.mxu0 0.0
        %486 = vmatpush1.msra.mxu0 %v459
        %487 = vmatprep.subr.mxu0 0.0
        %488 = vmatpush1.msra.mxu0 %v458
        %489 = vmatprep.subr.mxu0 0.0
        %490 = vmatpush1.msra.mxu0 %v457
        %491 = vmatprep.subr.mxu0 0.0
        %492 = vmatpush1.msra.mxu0 %v456
        %493 = vmatprep.subr.mxu0 0.0
        %494 = vmatpush1.msra.mxu0 %v455
        %495 = vmatprep.subr.mxu0 0.0
        %496 = vmatpush1.msra.mxu0 %v454
        %497 = vmatprep.subr.mxu0 0.0
        %498 = vmatpush1.msra.mxu0 %v453
        %499 = vmatprep.subr.mxu0 0.0
        %500 = vmatpush1.msra.mxu0 %v452
        %501 = vmatprep.subr.mxu0 0.0
        %502 = vmatpush1.msra.mxu0 %v451
        %503 = vmatprep.subr.mxu0 0.0
        %504 = vmatpush1.msra.mxu0 %v450
        %505 = vmatprep.subr.mxu0 0.0
        %506 = vmatpush1.msra.mxu0 %v449
        %507 = vmatprep.subr.mxu0 0.0
        %508 = vmatpush1.msra.mxu0 %v448
        %509 = vmatprep.subr.mxu0 0.0
        %510 = vmatpush1.msra.mxu0 %v447
        %511 = vmatprep.subr.mxu0 0.0
        %512 = vmatpush2.msra.mxu0 %v478
        %513 = vmatprep.subr.mxu0 0.0
        %514 = vmatpush2.msra.mxu0 %v477
        %515 = vmatprep.subr.mxu0 0.0
        %516 = vmatpush2.msra.mxu0 %v476
        %517 = vmatprep.subr.mxu0 0.0
        %518 = vmatpush2.msra.mxu0 %v475
        %519 = vmatprep.subr.mxu0 0.0
        %520 = vmatpush2.msra.mxu0 %v474
        %521 = vmatprep.subr.mxu0 0.0
        %522 = vmatpush2.msra.mxu0 %v473
        %523 = vmatprep.subr.mxu0 0.0
        %524 = vmatpush2.msra.mxu0 %v472
        %525 = vmatprep.subr.mxu0 0.0
        %526 = vmatpush2.msra.mxu0 %v471
        %527 = vmatprep.subr.mxu0 0.0
        %528 = vmatpush2.msra.mxu0 %v470
        %529 = vmatprep.subr.mxu0 0.0
        %530 = vmatpush2.msra.mxu0 %v469
        %531 = vmatprep.subr.mxu0 0.0
        %532 = vmatpush2.msra.mxu0 %v468
        %533 = vmatprep.subr.mxu0 0.0
        %534 = vmatpush2.msra.mxu0 %v467
        %535 = vmatprep.subr.mxu0 0.0
        %536 = vmatpush2.msra.mxu0 %v466
        %537 = vmatprep.subr.mxu0 0.0
        %538 = vmatpush2.msra.mxu0 %v465
        %539 = vmatprep.subr.mxu0 0.0
        %540 = vmatpush2.msra.mxu0 %v464
        %541 = vmatprep.subr.mxu0 0.0
        %542 = vmatpush2.msra.mxu0 %v463
        %543 = vmatprep.mubr.f32.mxu0 %v444
        %544 = vmatmul.mubr.f32.gmra.mxu0 %v443
        %v545 = vpop.f32.mrf.mxu0
        %v546 = vadd.f32 0.0, %v545
        %v547 = vpop.f32.mrf.mxu0
        %548 = vdwg.mxu0
        %v550 = vlaneseq
        %v551 = vshrl.u32 %v550, 7
        %v552 = vsub.s32 0, %v551
        %v553 = vrot.slane %v446, %v552
        %vm555 = vcmask 31744
        %v557 = vsel %vm555, %v546, 0
        %vm559 = vcmask 1043456
        %v561 = vsel %vm559, %v445, 0
        %563 = vmatprep.subr.mxu0 0.0
        %564 = vmatpush1.msra.mxu0 0.0
        %565 = vmatprep.subr.mxu0 0.0
        %566 = vmatpush1.msra.mxu0 0.0
        %567 = vmatprep.subr.mxu0 0.0
        %568 = vmatpush1.msra.mxu0 0.0
        %569 = vmatprep.subr.mxu0 0.0
        %570 = vmatpush1.msra.mxu0 0.0
        %571 = vmatprep.subr.mxu0 0.0
        %572 = vmatpush1.msra.mxu0 0.0
        %573 = vmatprep.subr.mxu0 0.0
        %574 = vmatpush1.msra.mxu0 0.0
        %575 = vmatprep.subr.mxu0 0.0
        %576 = vmatpush1.msra.mxu0 0.0
        %577 = vmatprep.subr.mxu0 0.0
        %578 = vmatpush1.msra.mxu0 0.0
        %579 = vmatprep.subr.mxu0 0.0
        %580 = vmatpush1.msra.mxu0 0.0
        %581 = vmatprep.subr.mxu0 0.0
        %582 = vmatpush1.msra.mxu0 0.0
        %583 = vmatprep.subr.mxu0 0.0
        %584 = vmatpush1.msra.mxu0 0.0
        %585 = vmatprep.subr.mxu0 0.0
        %586 = vmatpush1.msra.mxu0 0.0
        %587 = vmatprep.subr.mxu0 0.0
        %588 = vmatpush1.msra.mxu0 0.0
        %589 = vmatprep.subr.mxu0 0.0
        %590 = vmatpush1.msra.mxu0 0.0
        %591 = vmatprep.subr.mxu0 0.0
        %592 = vmatpush1.msra.mxu0 0.0
        %593 = vmatprep.subr.mxu0 0.0
        %594 = vmatpush1.msra.mxu0 %v561
        %595 = vmatprep.subr.mxu0 0.0
        %596 = vmatpush2.msra.mxu0 0.0
        %597 = vmatprep.subr.mxu0 0.0
        %598 = vmatpush2.msra.mxu0 0.0
        %599 = vmatprep.subr.mxu0 0.0
        %600 = vmatpush2.msra.mxu0 0.0
        %601 = vmatprep.subr.mxu0 0.0
        %602 = vmatpush2.msra.mxu0 0.0
        %603 = vmatprep.subr.mxu0 0.0
        %604 = vmatpush2.msra.mxu0 0.0
        %605 = vmatprep.subr.mxu0 0.0
        %606 = vmatpush2.msra.mxu0 0.0
        %607 = vmatprep.subr.mxu0 0.0
        %608 = vmatpush2.msra.mxu0 0.0
        %609 = vmatprep.subr.mxu0 0.0
        %610 = vmatpush2.msra.mxu0 0.0
        %611 = vmatprep.subr.mxu0 0.0
        %612 = vmatpush2.msra.mxu0 0.0
        %613 = vmatprep.subr.mxu0 0.0
        %614 = vmatpush2.msra.mxu0 0.0
        %615 = vmatprep.subr.mxu0 0.0
        %616 = vmatpush2.msra.mxu0 0.0
        %617 = vmatprep.subr.mxu0 0.0
        %618 = vmatpush2.msra.mxu0 0.0
        %619 = vmatprep.subr.mxu0 0.0
        %620 = vmatpush2.msra.mxu0 0.0
        %621 = vmatprep.subr.mxu0 0.0
        %622 = vmatpush2.msra.mxu0 0.0
        %623 = vmatprep.subr.mxu0 0.0
        %624 = vmatpush2.msra.mxu0 0.0
        %625 = vmatprep.subr.mxu0 0.0
        %626 = vmatpush2.msra.mxu0 0.0
        %627 = vmatprep.mubr.f32.mxu0 0.0
        %628 = vmatmul.mubr.f32.gmra.mxu0 %v557
        %v629 = vpop.f32.mrf.mxu0
        %v630 = vadd.f32 %v553, %v629
        %v631 = vpop.f32.mrf.mxu0
        %632 = vdwg.mxu0
        %v633 = vmax.f32 %v630, 0.0
        %s634 = scalar_lea.vmem %s0, 256
        %v635 = vld [vmem:[%s634] sm:$0xff]
        %v636 = vld [vmem:[%s634 + $0x8] sm:$0xff]
        %v637 = vld [vmem:[%s634 + $0x10] sm:$0xff]
        %v638 = vld [vmem:[%s634 + $0x18] sm:$0xff]
        %v639 = vld [vmem:[%s634 + $0x20] sm:$0xff]
        %v640 = vld [vmem:[%s634 + $0x28] sm:$0xff]
        %v641 = vld [vmem:[%s634 + $0x30] sm:$0xff]
        %v642 = vld [vmem:[%s634 + $0x38] sm:$0xff]
        %v643 = vld [vmem:[%s634 + $0x40] sm:$0xff]
        %v644 = vld [vmem:[%s634 + $0x48] sm:$0xff]
        %v645 = vld [vmem:[%s634 + $0x50] sm:$0xff]
        %v646 = vld [vmem:[%s634 + $0x58] sm:$0xff]
        %v647 = vld [vmem:[%s634 + $0x60] sm:$0xff]
        %v648 = vld [vmem:[%s634 + $0x68] sm:$0xff]
        %v649 = vld [vmem:[%s634 + $0x70] sm:$0xff]
        %v650 = vld [vmem:[%s634 + $0x78] sm:$0xff]
        %v651 = vld [vmem:[%s634 + $0x80] sm:$0xff]
        %v652 = vld [vmem:[%s634 + $0x88] sm:$0xff]
        %v653 = vld [vmem:[%s634 + $0x90] sm:$0xff]
        %v654 = vld [vmem:[%s634 + $0x98] sm:$0xff]
        %v655 = vld [vmem:[%s634 + $0xa0] sm:$0xff]
        %v656 = vld [vmem:[%s634 + $0xa8] sm:$0xff]
        %v657 = vld [vmem:[%s634 + $0xb0] sm:$0xff]
        %v658 = vld [vmem:[%s634 + $0xb8] sm:$0xff]
        %v659 = vld [vmem:[%s634 + $0xc0] sm:$0xff]
        %v660 = vld [vmem:[%s634 + $0xc8] sm:$0xff]
        %v661 = vld [vmem:[%s634 + $0xd0] sm:$0xff]
        %v662 = vld [vmem:[%s634 + $0xd8] sm:$0xff]
        %v663 = vld [vmem:[%s634 + $0xe0] sm:$0xff]
        %v664 = vld [vmem:[%s634 + $0xe8] sm:$0xff]
        %v665 = vld [vmem:[%s634 + $0xf0] sm:$0xff]
        %v666 = vld [vmem:[%s634 + $0xf8] sm:$0xff]
        %667 = vmatprep.subr.mxu0 0.0
        %668 = vmatpush1.msra.mxu0 %v650
        %669 = vmatprep.subr.mxu0 0.0
        %670 = vmatpush1.msra.mxu0 %v649
        %671 = vmatprep.subr.mxu0 0.0
        %672 = vmatpush1.msra.mxu0 %v648
        %673 = vmatprep.subr.mxu0 0.0
        %674 = vmatpush1.msra.mxu0 %v647
        %675 = vmatprep.subr.mxu0 0.0
        %676 = vmatpush1.msra.mxu0 %v646
        %677 = vmatprep.subr.mxu0 0.0
        %678 = vmatpush1.msra.mxu0 %v645
        %679 = vmatprep.subr.mxu0 0.0
        %680 = vmatpush1.msra.mxu0 %v644
        %681 = vmatprep.subr.mxu0 0.0
        %682 = vmatpush1.msra.mxu0 %v643
        %683 = vmatprep.subr.mxu0 0.0
        %684 = vmatpush1.msra.mxu0 %v642
        %685 = vmatprep.subr.mxu0 0.0
        %686 = vmatpush1.msra.mxu0 %v641
        %687 = vmatprep.subr.mxu0 0.0
        %688 = vmatpush1.msra.mxu0 %v640
        %689 = vmatprep.subr.mxu0 0.0
        %690 = vmatpush1.msra.mxu0 %v639
        %691 = vmatprep.subr.mxu0 0.0
        %692 = vmatpush1.msra.mxu0 %v638
        %693 = vmatprep.subr.mxu0 0.0
        %694 = vmatpush1.msra.mxu0 %v637
        %695 = vmatprep.subr.mxu0 0.0
        %696 = vmatpush1.msra.mxu0 %v636
        %697 = vmatprep.subr.mxu0 0.0
        %698 = vmatpush1.msra.mxu0 %v635
        %699 = vmatprep.subr.mxu0 0.0
        %700 = vmatpush2.msra.mxu0 %v666
        %701 = vmatprep.subr.mxu0 0.0
        %702 = vmatpush2.msra.mxu0 %v665
        %703 = vmatprep.subr.mxu0 0.0
        %704 = vmatpush2.msra.mxu0 %v664
        %705 = vmatprep.subr.mxu0 0.0
        %706 = vmatpush2.msra.mxu0 %v663
        %707 = vmatprep.subr.mxu0 0.0
        %708 = vmatpush2.msra.mxu0 %v662
        %709 = vmatprep.subr.mxu0 0.0
        %710 = vmatpush2.msra.mxu0 %v661
        %711 = vmatprep.subr.mxu0 0.0
        %712 = vmatpush2.msra.mxu0 %v660
        %713 = vmatprep.subr.mxu0 0.0
        %714 = vmatpush2.msra.mxu0 %v659
        %715 = vmatprep.subr.mxu0 0.0
        %716 = vmatpush2.msra.mxu0 %v658
        %717 = vmatprep.subr.mxu0 0.0
        %718 = vmatpush2.msra.mxu0 %v657
        %719 = vmatprep.subr.mxu0 0.0
        %720 = vmatpush2.msra.mxu0 %v656
        %721 = vmatprep.subr.mxu0 0.0
        %722 = vmatpush2.msra.mxu0 %v655
        %723 = vmatprep.subr.mxu0 0.0
        %724 = vmatpush2.msra.mxu0 %v654
        %725 = vmatprep.subr.mxu0 0.0
        %726 = vmatpush2.msra.mxu0 %v653
        %727 = vmatprep.subr.mxu0 0.0
        %728 = vmatpush2.msra.mxu0 %v652
        %729 = vmatprep.subr.mxu0 0.0
        %730 = vmatpush2.msra.mxu0 %v651
        %731 = vmatprep.mubr.f32.mxu0 %v444
        %732 = vmatmul.mubr.f32.gmra.mxu0 %v443
        %v733 = vpop.f32.mrf.mxu0
        %v734 = vadd.f32 0.0, %v733
        %v735 = vpop.f32.mrf.mxu0
        %736 = vdwg.mxu0
        %v738 = vsel %vm555, %v734, 0
        %740 = vmatprep.subr.mxu0 0.0
        %741 = vmatpush1.msra.mxu0 0.0
        %742 = vmatprep.subr.mxu0 0.0
        %743 = vmatpush1.msra.mxu0 0.0
        %744 = vmatprep.subr.mxu0 0.0
        %745 = vmatpush1.msra.mxu0 0.0
        %746 = vmatprep.subr.mxu0 0.0
        %747 = vmatpush1.msra.mxu0 0.0
        %748 = vmatprep.subr.mxu0 0.0
        %749 = vmatpush1.msra.mxu0 0.0
        %750 = vmatprep.subr.mxu0 0.0
        %751 = vmatpush1.msra.mxu0 0.0
        %752 = vmatprep.subr.mxu0 0.0
        %753 = vmatpush1.msra.mxu0 0.0
        %754 = vmatprep.subr.mxu0 0.0
        %755 = vmatpush1.msra.mxu0 0.0
        %756 = vmatprep.subr.mxu0 0.0
        %757 = vmatpush1.msra.mxu0 0.0
        %758 = vmatprep.subr.mxu0 0.0
        %759 = vmatpush1.msra.mxu0 0.0
        %760 = vmatprep.subr.mxu0 0.0
        %761 = vmatpush1.msra.mxu0 0.0
        %762 = vmatprep.subr.mxu0 0.0
        %763 = vmatpush1.msra.mxu0 0.0
        %764 = vmatprep.subr.mxu0 0.0
        %765 = vmatpush1.msra.mxu0 0.0
        %766 = vmatprep.subr.mxu0 0.0
        %767 = vmatpush1.msra.mxu0 0.0
        %768 = vmatprep.subr.mxu0 0.0
        %769 = vmatpush1.msra.mxu0 0.0
        %770 = vmatprep.subr.mxu0 0.0
        %771 = vmatpush1.msra.mxu0 %v561
        %772 = vmatprep.subr.mxu0 0.0
        %773 = vmatpush2.msra.mxu0 0.0
        %774 = vmatprep.subr.mxu0 0.0
        %775 = vmatpush2.msra.mxu0 0.0
        %776 = vmatprep.subr.mxu0 0.0
        %777 = vmatpush2.msra.mxu0 0.0
        %778 = vmatprep.subr.mxu0 0.0
        %779 = vmatpush2.msra.mxu0 0.0
        %780 = vmatprep.subr.mxu0 0.0
        %781 = vmatpush2.msra.mxu0 0.0
        %782 = vmatprep.subr.mxu0 0.0
        %783 = vmatpush2.msra.mxu0 0.0
        %784 = vmatprep.subr.mxu0 0.0
        %785 = vmatpush2.msra.mxu0 0.0
        %786 = vmatprep.subr.mxu0 0.0
        %787 = vmatpush2.msra.mxu0 0.0
        %788 = vmatprep.subr.mxu0 0.0
        %789 = vmatpush2.msra.mxu0 0.0
        %790 = vmatprep.subr.mxu0 0.0
        %791 = vmatpush2.msra.mxu0 0.0
        %792 = vmatprep.subr.mxu0 0.0
        %793 = vmatpush2.msra.mxu0 0.0
        %794 = vmatprep.subr.mxu0 0.0
        %795 = vmatpush2.msra.mxu0 0.0
        %796 = vmatprep.subr.mxu0 0.0
        %797 = vmatpush2.msra.mxu0 0.0
        %798 = vmatprep.subr.mxu0 0.0
        %799 = vmatpush2.msra.mxu0 0.0
        %800 = vmatprep.subr.mxu0 0.0
        %801 = vmatpush2.msra.mxu0 0.0
        %802 = vmatprep.subr.mxu0 0.0
        %803 = vmatpush2.msra.mxu0 0.0
        %804 = vmatprep.mubr.f32.mxu0 0.0
        %805 = vmatmul.mubr.f32.gmra.mxu0 %v738
        %v806 = vpop.f32.mrf.mxu0
        %v807 = vadd.f32 %v553, %v806
        %v808 = vpop.f32.mrf.mxu0
        %809 = vdwg.mxu0
        %v810 = vmax.f32 %v807, 0.0
        %v812 = vrot.slane %v810, 7
        %vm814 = vcmask 1040384
        %v815 = vsel %vm814, %v633, %v812
        %v816 = vpack.c.bf16 %v815, %v815
        %v817 = vld [vmem:[%s370] sm:$0xff]
        %v818 = vld [vmem:[%s370 + $0x8] sm:$0xff]
        %v819 = vld [vmem:[%s370 + $0x10] sm:$0xff]
        %v820 = vld [vmem:[%s370 + $0x18] sm:$0xff]
        %v821 = vld [vmem:[%s370 + $0x20] sm:$0xff]
        %v822 = vld [vmem:[%s370 + $0x28] sm:$0xff]
        %v823 = vld [vmem:[%s370 + $0x30] sm:$0xff]
        %v824 = vld [vmem:[%s370 + $0x38] sm:$0xff]
        %v825 = vld [vmem:[%s370 + $0x40] sm:$0xff]
        %v826 = vld [vmem:[%s370 + $0x48] sm:$0xff]
        %v827 = vld [vmem:[%s370 + $0x50] sm:$0xff]
        %v828 = vld [vmem:[%s370 + $0x58] sm:$0xff]
        %v829 = vld [vmem:[%s370 + $0x60] sm:$0xff]
        %v830 = vld [vmem:[%s370 + $0x68] sm:$0xff]
        %v831 = vld [vmem:[%s370 + $0x70] sm:$0xff]
        %v832 = vld [vmem:[%s370 + $0x78] sm:$0xff]
        %v833 = vld [vmem:[%s370 + $0x80] sm:$0xff]
        %v834 = vld [vmem:[%s370 + $0x88] sm:$0xff]
        %v835 = vld [vmem:[%s370 + $0x90] sm:$0xff]
        %v836 = vld [vmem:[%s370 + $0x98] sm:$0xff]
        %v837 = vld [vmem:[%s370 + $0xa0] sm:$0xff]
        %v838 = vld [vmem:[%s370 + $0xa8] sm:$0xff]
        %v839 = vld [vmem:[%s370 + $0xb0] sm:$0xff]
        %v840 = vld [vmem:[%s370 + $0xb8] sm:$0xff]
        %v841 = vld [vmem:[%s370 + $0xc0] sm:$0xff]
        %v842 = vld [vmem:[%s370 + $0xc8] sm:$0xff]
        %v843 = vld [vmem:[%s370 + $0xd0] sm:$0xff]
        %v844 = vld [vmem:[%s370 + $0xd8] sm:$0xff]
        %v845 = vld [vmem:[%s370 + $0xe0] sm:$0xff]
        %v846 = vld [vmem:[%s370 + $0xe8] sm:$0xff]
        %v847 = vld [vmem:[%s370 + $0xf0] sm:$0xff]
        %v848 = vld [vmem:[%s370 + $0xf8] sm:$0xff]
        %v850 = vrot.slane %v633, 1
        %v852 = vsel %vm814, %v850, %v810
        %v853 = vpack.c.bf16 %v852, %v852
        %s854 = scalar_lea.vmem %s370, 256 [#allocation8]
        %v855 = vld [vmem:[%s854] sm:$0xff]
        %v856 = vld [vmem:[%s854 + $0x8] sm:$0xff]
        %v857 = vld [vmem:[%s854 + $0x10] sm:$0xff]
        %v858 = vld [vmem:[%s854 + $0x18] sm:$0xff]
        %v859 = vld [vmem:[%s854 + $0x20] sm:$0xff]
        %v860 = vld [vmem:[%s854 + $0x28] sm:$0xff]
        %v861 = vld [vmem:[%s854 + $0x30] sm:$0xff]
        %v862 = vld [vmem:[%s854 + $0x38] sm:$0xff]
        %v863 = vld [vmem:[%s854 + $0x40] sm:$0xff]
        %v864 = vld [vmem:[%s854 + $0x48] sm:$0xff]
        %v865 = vld [vmem:[%s854 + $0x50] sm:$0xff]
        %v866 = vld [vmem:[%s854 + $0x58] sm:$0xff]
        %v867 = vld [vmem:[%s854 + $0x60] sm:$0xff]
        %v868 = vld [vmem:[%s854 + $0x68] sm:$0xff]
        %v869 = vld [vmem:[%s854 + $0x70] sm:$0xff]
        %v870 = vld [vmem:[%s854 + $0x78] sm:$0xff]
        %v871 = vld [vmem:[%s854 + $0x80] sm:$0xff]
        %v872 = vld [vmem:[%s854 + $0x88] sm:$0xff]
        %v873 = vld [vmem:[%s854 + $0x90] sm:$0xff]
        %v874 = vld [vmem:[%s854 + $0x98] sm:$0xff]
        %v875 = vld [vmem:[%s854 + $0xa0] sm:$0xff]
        %v876 = vld [vmem:[%s854 + $0xa8] sm:$0xff]
        %v877 = vld [vmem:[%s854 + $0xb0] sm:$0xff]
        %v878 = vld [vmem:[%s854 + $0xb8] sm:$0xff]
        %v879 = vld [vmem:[%s854 + $0xc0] sm:$0xff]
        %v880 = vld [vmem:[%s854 + $0xc8] sm:$0xff]
        %v881 = vld [vmem:[%s854 + $0xd0] sm:$0xff]
        %v882 = vld [vmem:[%s854 + $0xd8] sm:$0xff]
        %v883 = vld [vmem:[%s854 + $0xe0] sm:$0xff]
        %v884 = vld [vmem:[%s854 + $0xe8] sm:$0xff]
        %v885 = vld [vmem:[%s854 + $0xf0] sm:$0xff]
        %v886 = vld [vmem:[%s854 + $0xf8] sm:$0xff]
        %v919 = vunpack.c.l.b16 %v855
        %v920 = vunpack.c.h.b16 %v855
        %v921 = vunpack.c.l.b16 %v856
        %v922 = vunpack.c.h.b16 %v856
        %v923 = vunpack.c.l.b16 %v857
        %v924 = vunpack.c.h.b16 %v857
        %v925 = vunpack.c.l.b16 %v858
        %v926 = vunpack.c.h.b16 %v858
        %v927 = vunpack.c.l.b16 %v859
        %v928 = vunpack.c.h.b16 %v859
        %v929 = vunpack.c.l.b16 %v860
        %v930 = vunpack.c.h.b16 %v860
        %v931 = vunpack.c.l.b16 %v861
        %v932 = vunpack.c.h.b16 %v861
        %v933 = vunpack.c.l.b16 %v862
        %v934 = vunpack.c.h.b16 %v862
        %v935 = vunpack.c.l.b16 %v863
        %v936 = vunpack.c.h.b16 %v863
        %v937 = vunpack.c.l.b16 %v864
        %v938 = vunpack.c.h.b16 %v864
        %v939 = vunpack.c.l.b16 %v865
        %v940 = vunpack.c.h.b16 %v865
        %v941 = vunpack.c.l.b16 %v866
        %v942 = vunpack.c.h.b16 %v866
        %v943 = vunpack.c.l.b16 %v867
        %v944 = vunpack.c.h.b16 %v867
        %v945 = vunpack.c.l.b16 %v868
        %v946 = vunpack.c.h.b16 %v868
        %v947 = vunpack.c.l.b16 %v869
        %v948 = vunpack.c.h.b16 %v869
        %v949 = vunpack.c.l.b16 %v870
        %v950 = vunpack.c.h.b16 %v870
        %v951 = vunpack.c.l.b16 %v871
        %v952 = vunpack.c.h.b16 %v871
        %v953 = vunpack.c.l.b16 %v872
        %v954 = vunpack.c.h.b16 %v872
        %v955 = vunpack.c.l.b16 %v873
        %v956 = vunpack.c.h.b16 %v873
        %v957 = vunpack.c.l.b16 %v874
        %v958 = vunpack.c.h.b16 %v874
        %v959 = vunpack.c.l.b16 %v875
        %v960 = vunpack.c.h.b16 %v875
        %v961 = vunpack.c.l.b16 %v876
        %v962 = vunpack.c.h.b16 %v876
        %v963 = vunpack.c.l.b16 %v877
        %v964 = vunpack.c.h.b16 %v877
        %v965 = vunpack.c.l.b16 %v878
        %v966 = vunpack.c.h.b16 %v878
        %v967 = vunpack.c.l.b16 %v879
        %v968 = vunpack.c.h.b16 %v879
        %v969 = vunpack.c.l.b16 %v880
        %v970 = vunpack.c.h.b16 %v880
        %v971 = vunpack.c.l.b16 %v881
        %v972 = vunpack.c.h.b16 %v881
        %v973 = vunpack.c.l.b16 %v882
        %v974 = vunpack.c.h.b16 %v882
        %v975 = vunpack.c.l.b16 %v883
        %v976 = vunpack.c.h.b16 %v883
        %v977 = vunpack.c.l.b16 %v884
        %v978 = vunpack.c.h.b16 %v884
        %v979 = vunpack.c.l.b16 %v885
        %v980 = vunpack.c.h.b16 %v885
        %v981 = vunpack.c.l.b16 %v886
        %v982 = vunpack.c.h.b16 %v886
        %v983 = vpack.c.b16 %v923, %v919
        %v984 = vpack.c.b16 %v924, %v920
        %v985 = vpack.c.b16 %v925, %v921
        %v986 = vpack.c.b16 %v926, %v922
        %v987 = vpack.c.b16 %v931, %v927
        %v988 = vpack.c.b16 %v932, %v928
        %v989 = vpack.c.b16 %v933, %v929
        %v990 = vpack.c.b16 %v934, %v930
        %v991 = vpack.c.b16 %v939, %v935
        %v992 = vpack.c.b16 %v940, %v936
        %v993 = vpack.c.b16 %v941, %v937
        %v994 = vpack.c.b16 %v942, %v938
        %v995 = vpack.c.b16 %v947, %v943
        %v996 = vpack.c.b16 %v948, %v944
        %v997 = vpack.c.b16 %v949, %v945
        %v998 = vpack.c.b16 %v950, %v946
        %v999 = vpack.c.b16 %v955, %v951
        %v1000 = vpack.c.b16 %v956, %v952
        %v1001 = vpack.c.b16 %v957, %v953
        %v1002 = vpack.c.b16 %v958, %v954
        %v1003 = vpack.c.b16 %v963, %v959
        %v1004 = vpack.c.b16 %v964, %v960
        %v1005 = vpack.c.b16 %v965, %v961
        %v1006 = vpack.c.b16 %v966, %v962
        %v1007 = vpack.c.b16 %v971, %v967
        %v1008 = vpack.c.b16 %v972, %v968
        %v1009 = vpack.c.b16 %v973, %v969
        %v1010 = vpack.c.b16 %v974, %v970
        %v1011 = vpack.c.b16 %v979, %v975
        %v1012 = vpack.c.b16 %v980, %v976
        %v1013 = vpack.c.b16 %v981, %v977
        %v1014 = vpack.c.b16 %v982, %v978
        %1047 = vmatprep.subr.bf16.mxu0 %v1012
        %1048 = vmatpush1.bf16.msra.mxu0 %v1011
        %1049 = vmatprep.subr.bf16.mxu0 %v1008
        %1050 = vmatpush1.bf16.msra.mxu0 %v1007
        %1051 = vmatprep.subr.bf16.mxu0 %v1004
        %1052 = vmatpush1.bf16.msra.mxu0 %v1003
        %1053 = vmatprep.subr.bf16.mxu0 %v1000
        %1054 = vmatpush1.bf16.msra.mxu0 %v999
        %1055 = vmatprep.subr.bf16.mxu0 %v996
        %1056 = vmatpush1.bf16.msra.mxu0 %v995
        %1057 = vmatprep.subr.bf16.mxu0 %v992
        %1058 = vmatpush1.bf16.msra.mxu0 %v991
        %1059 = vmatprep.subr.bf16.mxu0 %v988
        %1060 = vmatpush1.bf16.msra.mxu0 %v987
        %1061 = vmatprep.subr.bf16.mxu0 %v984
        %1062 = vmatpush1.bf16.msra.mxu0 %v983
        %1063 = vmatprep.subr.bf16.mxu0 0
        %1064 = vmatpush2.bf16.msra.mxu0 0
        %1065 = vmatprep.subr.bf16.mxu0 0
        %1066 = vmatpush2.bf16.msra.mxu0 0
        %1067 = vmatprep.subr.bf16.mxu0 0
        %1068 = vmatpush2.bf16.msra.mxu0 0
        %1069 = vmatprep.subr.bf16.mxu0 0
        %1070 = vmatpush2.bf16.msra.mxu0 0
        %1071 = vmatprep.subr.bf16.mxu0 0
        %1072 = vmatpush2.bf16.msra.mxu0 0
        %1073 = vmatprep.subr.bf16.mxu0 0
        %1074 = vmatpush2.bf16.msra.mxu0 0
        %1075 = vmatprep.subr.bf16.mxu0 0
        %1076 = vmatpush2.bf16.msra.mxu0 0
        %1077 = vmatprep.subr.bf16.mxu0 0
        %1078 = vmatpush2.bf16.msra.mxu0 0
        %1079 = vmatprep.mubr.bf16.mxu0 0
        %1080 = vmatmul.mubr.bf16.gmra.mxu0 %v853
        %v1081 = vpop.f32.mrf.mxu0
        %v1082 = vadd.f32 0.0, %v1081
        %v1083 = vpop.f32.mrf.mxu0
        %v1084 = vadd.f32 0.0, %v1083
        %v1085 = vpop.f32.mrf.mxu0
        %v1086 = vpop.f32.mrf.mxu0
        %1087 = vdwg.mxu0
        %1088 = vmatprep.subr.bf16.mxu0 %v1014
        %1089 = vmatpush1.bf16.msra.mxu0 %v1013
        %1090 = vmatprep.subr.bf16.mxu0 %v1010
        %1091 = vmatpush1.bf16.msra.mxu0 %v1009
        %1092 = vmatprep.subr.bf16.mxu0 %v1006
        %1093 = vmatpush1.bf16.msra.mxu0 %v1005
        %1094 = vmatprep.subr.bf16.mxu0 %v1002
        %1095 = vmatpush1.bf16.msra.mxu0 %v1001
        %1096 = vmatprep.subr.bf16.mxu0 %v998
        %1097 = vmatpush1.bf16.msra.mxu0 %v997
        %1098 = vmatprep.subr.bf16.mxu0 %v994
        %1099 = vmatpush1.bf16.msra.mxu0 %v993
        %1100 = vmatprep.subr.bf16.mxu0 %v990
        %1101 = vmatpush1.bf16.msra.mxu0 %v989
        %1102 = vmatprep.subr.bf16.mxu0 %v986
        %1103 = vmatpush1.bf16.msra.mxu0 %v985
        %1104 = vmatprep.subr.bf16.mxu0 0
        %1105 = vmatpush2.bf16.msra.mxu0 0
        %1106 = vmatprep.subr.bf16.mxu0 0
        %1107 = vmatpush2.bf16.msra.mxu0 0
        %1108 = vmatprep.subr.bf16.mxu0 0
        %1109 = vmatpush2.bf16.msra.mxu0 0
        %1110 = vmatprep.subr.bf16.mxu0 0
        %1111 = vmatpush2.bf16.msra.mxu0 0
        %1112 = vmatprep.subr.bf16.mxu0 0
        %1113 = vmatpush2.bf16.msra.mxu0 0
        %1114 = vmatprep.subr.bf16.mxu0 0
        %1115 = vmatpush2.bf16.msra.mxu0 0
        %1116 = vmatprep.subr.bf16.mxu0 0
        %1117 = vmatpush2.bf16.msra.mxu0 0
        %1118 = vmatprep.subr.bf16.mxu0 0
        %1119 = vmatpush2.bf16.msra.mxu0 0
        %1120 = vmatprep.mubr.bf16.mxu0 0
        %1121 = vmatmul.mubr.bf16.gmra.mxu0 %v853
        %v1122 = vpop.f32.mrf.mxu0
        %v1123 = vadd.f32 0.0, %v1122
        %v1124 = vpop.f32.mrf.mxu0
        %v1125 = vadd.f32 0.0, %v1124
        %v1126 = vpop.f32.mrf.mxu0
        %v1127 = vpop.f32.mrf.mxu0
        %1128 = vdwg.mxu0
        %v1161 = vunpack.c.l.b16 %v817
        %v1162 = vunpack.c.h.b16 %v817
        %v1163 = vunpack.c.l.b16 %v818
        %v1164 = vunpack.c.h.b16 %v818
        %v1165 = vunpack.c.l.b16 %v819
        %v1166 = vunpack.c.h.b16 %v819
        %v1167 = vunpack.c.l.b16 %v820
        %v1168 = vunpack.c.h.b16 %v820
        %v1169 = vunpack.c.l.b16 %v821
        %v1170 = vunpack.c.h.b16 %v821
        %v1171 = vunpack.c.l.b16 %v822
        %v1172 = vunpack.c.h.b16 %v822
        %v1173 = vunpack.c.l.b16 %v823
        %v1174 = vunpack.c.h.b16 %v823
        %v1175 = vunpack.c.l.b16 %v824
        %v1176 = vunpack.c.h.b16 %v824
        %v1177 = vunpack.c.l.b16 %v825
        %v1178 = vunpack.c.h.b16 %v825
        %v1179 = vunpack.c.l.b16 %v826
        %v1180 = vunpack.c.h.b16 %v826
        %v1181 = vunpack.c.l.b16 %v827
        %v1182 = vunpack.c.h.b16 %v827
        %v1183 = vunpack.c.l.b16 %v828
        %v1184 = vunpack.c.h.b16 %v828
        %v1185 = vunpack.c.l.b16 %v829
        %v1186 = vunpack.c.h.b16 %v829
        %v1187 = vunpack.c.l.b16 %v830
        %v1188 = vunpack.c.h.b16 %v830
        %v1189 = vunpack.c.l.b16 %v831
        %v1190 = vunpack.c.h.b16 %v831
        %v1191 = vunpack.c.l.b16 %v832
        %v1192 = vunpack.c.h.b16 %v832
        %v1193 = vunpack.c.l.b16 %v833
        %v1194 = vunpack.c.h.b16 %v833
        %v1195 = vunpack.c.l.b16 %v834
        %v1196 = vunpack.c.h.b16 %v834
        %v1197 = vunpack.c.l.b16 %v835
        %v1198 = vunpack.c.h.b16 %v835
        %v1199 = vunpack.c.l.b16 %v836
        %v1200 = vunpack.c.h.b16 %v836
        %v1201 = vunpack.c.l.b16 %v837
        %v1202 = vunpack.c.h.b16 %v837
        %v1203 = vunpack.c.l.b16 %v838
        %v1204 = vunpack.c.h.b16 %v838
        %v1205 = vunpack.c.l.b16 %v839
        %v1206 = vunpack.c.h.b16 %v839
        %v1207 = vunpack.c.l.b16 %v840
        %v1208 = vunpack.c.h.b16 %v840
        %v1209 = vunpack.c.l.b16 %v841
        %v1210 = vunpack.c.h.b16 %v841
        %v1211 = vunpack.c.l.b16 %v842
        %v1212 = vunpack.c.h.b16 %v842
        %v1213 = vunpack.c.l.b16 %v843
        %v1214 = vunpack.c.h.b16 %v843
        %v1215 = vunpack.c.l.b16 %v844
        %v1216 = vunpack.c.h.b16 %v844
        %v1217 = vunpack.c.l.b16 %v845
        %v1218 = vunpack.c.h.b16 %v845
        %v1219 = vunpack.c.l.b16 %v846
        %v1220 = vunpack.c.h.b16 %v846
        %v1221 = vunpack.c.l.b16 %v847
        %v1222 = vunpack.c.h.b16 %v847
        %v1223 = vunpack.c.l.b16 %v848
        %v1224 = vunpack.c.h.b16 %v848
        %v1225 = vpack.c.b16 %v1165, %v1161
        %v1226 = vpack.c.b16 %v1166, %v1162
        %v1227 = vpack.c.b16 %v1167, %v1163
        %v1228 = vpack.c.b16 %v1168, %v1164
        %v1229 = vpack.c.b16 %v1173, %v1169
        %v1230 = vpack.c.b16 %v1174, %v1170
        %v1231 = vpack.c.b16 %v1175, %v1171
        %v1232 = vpack.c.b16 %v1176, %v1172
        %v1233 = vpack.c.b16 %v1181, %v1177
        %v1234 = vpack.c.b16 %v1182, %v1178
        %v1235 = vpack.c.b16 %v1183, %v1179
        %v1236 = vpack.c.b16 %v1184, %v1180
        %v1237 = vpack.c.b16 %v1189, %v1185
        %v1238 = vpack.c.b16 %v1190, %v1186
        %v1239 = vpack.c.b16 %v1191, %v1187
        %v1240 = vpack.c.b16 %v1192, %v1188
        %v1241 = vpack.c.b16 %v1197, %v1193
        %v1242 = vpack.c.b16 %v1198, %v1194
        %v1243 = vpack.c.b16 %v1199, %v1195
        %v1244 = vpack.c.b16 %v1200, %v1196
        %v1245 = vpack.c.b16 %v1205, %v1201
        %v1246 = vpack.c.b16 %v1206, %v1202
        %v1247 = vpack.c.b16 %v1207, %v1203
        %v1248 = vpack.c.b16 %v1208, %v1204
        %v1249 = vpack.c.b16 %v1213, %v1209
        %v1250 = vpack.c.b16 %v1214, %v1210
        %v1251 = vpack.c.b16 %v1215, %v1211
        %v1252 = vpack.c.b16 %v1216, %v1212
        %v1253 = vpack.c.b16 %v1221, %v1217
        %v1254 = vpack.c.b16 %v1222, %v1218
        %v1255 = vpack.c.b16 %v1223, %v1219
        %v1256 = vpack.c.b16 %v1224, %v1220
        %1289 = vmatprep.subr.bf16.mxu0 %v1254
        %1290 = vmatpush1.bf16.msra.mxu0 %v1253
        %1291 = vmatprep.subr.bf16.mxu0 %v1250
        %1292 = vmatpush1.bf16.msra.mxu0 %v1249
        %1293 = vmatprep.subr.bf16.mxu0 %v1246
        %1294 = vmatpush1.bf16.msra.mxu0 %v1245
        %1295 = vmatprep.subr.bf16.mxu0 %v1242
        %1296 = vmatpush1.bf16.msra.mxu0 %v1241
        %1297 = vmatprep.subr.bf16.mxu0 %v1238
        %1298 = vmatpush1.bf16.msra.mxu0 %v1237
        %1299 = vmatprep.subr.bf16.mxu0 %v1234
        %1300 = vmatpush1.bf16.msra.mxu0 %v1233
        %1301 = vmatprep.subr.bf16.mxu0 %v1230
        %1302 = vmatpush1.bf16.msra.mxu0 %v1229
        %1303 = vmatprep.subr.bf16.mxu0 %v1226
        %1304 = vmatpush1.bf16.msra.mxu0 %v1225
        %1305 = vmatprep.subr.bf16.mxu0 0
        %1306 = vmatpush2.bf16.msra.mxu0 0
        %1307 = vmatprep.subr.bf16.mxu0 0
        %1308 = vmatpush2.bf16.msra.mxu0 0
        %1309 = vmatprep.subr.bf16.mxu0 0
        %1310 = vmatpush2.bf16.msra.mxu0 0
        %1311 = vmatprep.subr.bf16.mxu0 0
        %1312 = vmatpush2.bf16.msra.mxu0 0
        %1313 = vmatprep.subr.bf16.mxu0 0
        %1314 = vmatpush2.bf16.msra.mxu0 0
        %1315 = vmatprep.subr.bf16.mxu0 0
        %1316 = vmatpush2.bf16.msra.mxu0 0
        %1317 = vmatprep.subr.bf16.mxu0 0
        %1318 = vmatpush2.bf16.msra.mxu0 0
        %1319 = vmatprep.subr.bf16.mxu0 0
        %1320 = vmatpush2.bf16.msra.mxu0 0
        %1321 = vmatprep.mubr.bf16.mxu0 0
        %1322 = vmatmul.mubr.bf16.gmra.mxu0 %v816
        %v1323 = vpop.f32.mrf.mxu0
        %v1324 = vadd.f32 %v1082, %v1323
        %v1325 = vpop.f32.mrf.mxu0
        %v1326 = vadd.f32 %v1084, %v1325
        %v1327 = vpop.f32.mrf.mxu0
        %v1328 = vpop.f32.mrf.mxu0
        %1329 = vdwg.mxu0
        %1330 = vmatprep.subr.bf16.mxu0 %v1256
        %1331 = vmatpush1.bf16.msra.mxu0 %v1255
        %1332 = vmatprep.subr.bf16.mxu0 %v1252
        %1333 = vmatpush1.bf16.msra.mxu0 %v1251
        %1334 = vmatprep.subr.bf16.mxu0 %v1248
        %1335 = vmatpush1.bf16.msra.mxu0 %v1247
        %1336 = vmatprep.subr.bf16.mxu0 %v1244
        %1337 = vmatpush1.bf16.msra.mxu0 %v1243
        %1338 = vmatprep.subr.bf16.mxu0 %v1240
        %1339 = vmatpush1.bf16.msra.mxu0 %v1239
        %1340 = vmatprep.subr.bf16.mxu0 %v1236
        %1341 = vmatpush1.bf16.msra.mxu0 %v1235
        %1342 = vmatprep.subr.bf16.mxu0 %v1232
        %1343 = vmatpush1.bf16.msra.mxu0 %v1231
        %1344 = vmatprep.subr.bf16.mxu0 %v1228
        %1345 = vmatpush1.bf16.msra.mxu0 %v1227
        %1346 = vmatprep.subr.bf16.mxu0 0
        %1347 = vmatpush2.bf16.msra.mxu0 0
        %1348 = vmatprep.subr.bf16.mxu0 0
        %1349 = vmatpush2.bf16.msra.mxu0 0
        %1350 = vmatprep.subr.bf16.mxu0 0
        %1351 = vmatpush2.bf16.msra.mxu0 0
        %1352 = vmatprep.subr.bf16.mxu0 0
        %1353 = vmatpush2.bf16.msra.mxu0 0
        %1354 = vmatprep.subr.bf16.mxu0 0
        %1355 = vmatpush2.bf16.msra.mxu0 0
        %1356 = vmatprep.subr.bf16.mxu0 0
        %1357 = vmatpush2.bf16.msra.mxu0 0
        %1358 = vmatprep.subr.bf16.mxu0 0
        %1359 = vmatpush2.bf16.msra.mxu0 0
        %1360 = vmatprep.subr.bf16.mxu0 0
        %1361 = vmatpush2.bf16.msra.mxu0 0
        %1362 = vmatprep.mubr.bf16.mxu0 0
        %1363 = vmatmul.mubr.bf16.gmra.mxu0 %v816
        %v1364 = vpop.f32.mrf.mxu0
        %v1365 = vadd.f32 %v1123, %v1364
        %v1366 = vpop.f32.mrf.mxu0
        %v1367 = vadd.f32 %v1125, %v1366
        %v1368 = vpop.f32.mrf.mxu0
        %v1369 = vpop.f32.mrf.mxu0
        %1370 = vdwg.mxu0
        %v1371 = vrot.slane %v633, 2
        %v1373 = vrot.slane %v810, 1
        %v1375 = vsel %vm814, %v1371, %v1373
        %v1376 = vpack.c.bf16 %v1375, %v1375
        %s1377 = scalar_lea.vmem %s370, 512 [#allocation8]
        %v1378 = vld [vmem:[%s1377] sm:$0xff]
        %v1379 = vld [vmem:[%s1377 + $0x8] sm:$0xff]
        %v1380 = vld [vmem:[%s1377 + $0x10] sm:$0xff]
        %v1381 = vld [vmem:[%s1377 + $0x18] sm:$0xff]
        %v1382 = vld [vmem:[%s1377 + $0x20] sm:$0xff]
        %v1383 = vld [vmem:[%s1377 + $0x28] sm:$0xff]
        %v1384 = vld [vmem:[%s1377 + $0x30] sm:$0xff]
        %v1385 = vld [vmem:[%s1377 + $0x38] sm:$0xff]
        %v1386 = vld [vmem:[%s1377 + $0x40] sm:$0xff]
        %v1387 = vld [vmem:[%s1377 + $0x48] sm:$0xff]
        %v1388 = vld [vmem:[%s1377 + $0x50] sm:$0xff]
        %v1389 = vld [vmem:[%s1377 + $0x58] sm:$0xff]
        %v1390 = vld [vmem:[%s1377 + $0x60] sm:$0xff]
        %v1391 = vld [vmem:[%s1377 + $0x68] sm:$0xff]
        %v1392 = vld [vmem:[%s1377 + $0x70] sm:$0xff]
        %v1393 = vld [vmem:[%s1377 + $0x78] sm:$0xff]
        %v1394 = vld [vmem:[%s1377 + $0x80] sm:$0xff]
        %v1395 = vld [vmem:[%s1377 + $0x88] sm:$0xff]
        %v1396 = vld [vmem:[%s1377 + $0x90] sm:$0xff]
        %v1397 = vld [vmem:[%s1377 + $0x98] sm:$0xff]
        %v1398 = vld [vmem:[%s1377 + $0xa0] sm:$0xff]
        %v1399 = vld [vmem:[%s1377 + $0xa8] sm:$0xff]
        %v1400 = vld [vmem:[%s1377 + $0xb0] sm:$0xff]
        %v1401 = vld [vmem:[%s1377 + $0xb8] sm:$0xff]
        %v1402 = vld [vmem:[%s1377 + $0xc0] sm:$0xff]
        %v1403 = vld [vmem:[%s1377 + $0xc8] sm:$0xff]
        %v1404 = vld [vmem:[%s1377 + $0xd0] sm:$0xff]
        %v1405 = vld [vmem:[%s1377 + $0xd8] sm:$0xff]
        %v1406 = vld [vmem:[%s1377 + $0xe0] sm:$0xff]
        %v1407 = vld [vmem:[%s1377 + $0xe8] sm:$0xff]
        %v1408 = vld [vmem:[%s1377 + $0xf0] sm:$0xff]
        %v1409 = vld [vmem:[%s1377 + $0xf8] sm:$0xff]
        %v1442 = vunpack.c.l.b16 %v1378
        %v1443 = vunpack.c.h.b16 %v1378
        %v1444 = vunpack.c.l.b16 %v1379
        %v1445 = vunpack.c.h.b16 %v1379
        %v1446 = vunpack.c.l.b16 %v1380
        %v1447 = vunpack.c.h.b16 %v1380
        %v1448 = vunpack.c.l.b16 %v1381
        %v1449 = vunpack.c.h.b16 %v1381
        %v1450 = vunpack.c.l.b16 %v1382
        %v1451 = vunpack.c.h.b16 %v1382
        %v1452 = vunpack.c.l.b16 %v1383
        %v1453 = vunpack.c.h.b16 %v1383
        %v1454 = vunpack.c.l.b16 %v1384
        %v1455 = vunpack.c.h.b16 %v1384
        %v1456 = vunpack.c.l.b16 %v1385
        %v1457 = vunpack.c.h.b16 %v1385
        %v1458 = vunpack.c.l.b16 %v1386
        %v1459 = vunpack.c.h.b16 %v1386
        %v1460 = vunpack.c.l.b16 %v1387
        %v1461 = vunpack.c.h.b16 %v1387
        %v1462 = vunpack.c.l.b16 %v1388
        %v1463 = vunpack.c.h.b16 %v1388
        %v1464 = vunpack.c.l.b16 %v1389
        %v1465 = vunpack.c.h.b16 %v1389
        %v1466 = vunpack.c.l.b16 %v1390
        %v1467 = vunpack.c.h.b16 %v1390
        %v1468 = vunpack.c.l.b16 %v1391
        %v1469 = vunpack.c.h.b16 %v1391
        %v1470 = vunpack.c.l.b16 %v1392
        %v1471 = vunpack.c.h.b16 %v1392
        %v1472 = vunpack.c.l.b16 %v1393
        %v1473 = vunpack.c.h.b16 %v1393
        %v1474 = vunpack.c.l.b16 %v1394
        %v1475 = vunpack.c.h.b16 %v1394
        %v1476 = vunpack.c.l.b16 %v1395
        %v1477 = vunpack.c.h.b16 %v1395
        %v1478 = vunpack.c.l.b16 %v1396
        %v1479 = vunpack.c.h.b16 %v1396
        %v1480 = vunpack.c.l.b16 %v1397
        %v1481 = vunpack.c.h.b16 %v1397
        %v1482 = vunpack.c.l.b16 %v1398
        %v1483 = vunpack.c.h.b16 %v1398
        %v1484 = vunpack.c.l.b16 %v1399
        %v1485 = vunpack.c.h.b16 %v1399
        %v1486 = vunpack.c.l.b16 %v1400
        %v1487 = vunpack.c.h.b16 %v1400
        %v1488 = vunpack.c.l.b16 %v1401
        %v1489 = vunpack.c.h.b16 %v1401
        %v1490 = vunpack.c.l.b16 %v1402
        %v1491 = vunpack.c.h.b16 %v1402
        %v1492 = vunpack.c.l.b16 %v1403
        %v1493 = vunpack.c.h.b16 %v1403
        %v1494 = vunpack.c.l.b16 %v1404
        %v1495 = vunpack.c.h.b16 %v1404
        %v1496 = vunpack.c.l.b16 %v1405
        %v1497 = vunpack.c.h.b16 %v1405
        %v1498 = vunpack.c.l.b16 %v1406
        %v1499 = vunpack.c.h.b16 %v1406
        %v1500 = vunpack.c.l.b16 %v1407
        %v1501 = vunpack.c.h.b16 %v1407
        %v1502 = vunpack.c.l.b16 %v1408
        %v1503 = vunpack.c.h.b16 %v1408
        %v1504 = vunpack.c.l.b16 %v1409
        %v1505 = vunpack.c.h.b16 %v1409
        %v1506 = vpack.c.b16 %v1446, %v1442
        %v1507 = vpack.c.b16 %v1447, %v1443
        %v1508 = vpack.c.b16 %v1448, %v1444
        %v1509 = vpack.c.b16 %v1449, %v1445
        %v1510 = vpack.c.b16 %v1454, %v1450
        %v1511 = vpack.c.b16 %v1455, %v1451
        %v1512 = vpack.c.b16 %v1456, %v1452
        %v1513 = vpack.c.b16 %v1457, %v1453
        %v1514 = vpack.c.b16 %v1462, %v1458
        %v1515 = vpack.c.b16 %v1463, %v1459
        %v1516 = vpack.c.b16 %v1464, %v1460
        %v1517 = vpack.c.b16 %v1465, %v1461
        %v1518 = vpack.c.b16 %v1470, %v1466
        %v1519 = vpack.c.b16 %v1471, %v1467
        %v1520 = vpack.c.b16 %v1472, %v1468
        %v1521 = vpack.c.b16 %v1473, %v1469
        %v1522 = vpack.c.b16 %v1478, %v1474
        %v1523 = vpack.c.b16 %v1479, %v1475
        %v1524 = vpack.c.b16 %v1480, %v1476
        %v1525 = vpack.c.b16 %v1481, %v1477
        %v1526 = vpack.c.b16 %v1486, %v1482
        %v1527 = vpack.c.b16 %v1487, %v1483
        %v1528 = vpack.c.b16 %v1488, %v1484
        %v1529 = vpack.c.b16 %v1489, %v1485
        %v1530 = vpack.c.b16 %v1494, %v1490
        %v1531 = vpack.c.b16 %v1495, %v1491
        %v1532 = vpack.c.b16 %v1496, %v1492
        %v1533 = vpack.c.b16 %v1497, %v1493
        %v1534 = vpack.c.b16 %v1502, %v1498
        %v1535 = vpack.c.b16 %v1503, %v1499
        %v1536 = vpack.c.b16 %v1504, %v1500
        %v1537 = vpack.c.b16 %v1505, %v1501
        %1570 = vmatprep.subr.bf16.mxu0 %v1535
        %1571 = vmatpush1.bf16.msra.mxu0 %v1534
        %1572 = vmatprep.subr.bf16.mxu0 %v1531
        %1573 = vmatpush1.bf16.msra.mxu0 %v1530
        %1574 = vmatprep.subr.bf16.mxu0 %v1527
        %1575 = vmatpush1.bf16.msra.mxu0 %v1526
        %1576 = vmatprep.subr.bf16.mxu0 %v1523
        %1577 = vmatpush1.bf16.msra.mxu0 %v1522
        %1578 = vmatprep.subr.bf16.mxu0 %v1519
        %1579 = vmatpush1.bf16.msra.mxu0 %v1518
        %1580 = vmatprep.subr.bf16.mxu0 %v1515
        %1581 = vmatpush1.bf16.msra.mxu0 %v1514
        %1582 = vmatprep.subr.bf16.mxu0 %v1511
        %1583 = vmatpush1.bf16.msra.mxu0 %v1510
        %1584 = vmatprep.subr.bf16.mxu0 %v1507
        %1585 = vmatpush1.bf16.msra.mxu0 %v1506
        %1586 = vmatprep.subr.bf16.mxu0 0
        %1587 = vmatpush2.bf16.msra.mxu0 0
        %1588 = vmatprep.subr.bf16.mxu0 0
        %1589 = vmatpush2.bf16.msra.mxu0 0
        %1590 = vmatprep.subr.bf16.mxu0 0
        %1591 = vmatpush2.bf16.msra.mxu0 0
        %1592 = vmatprep.subr.bf16.mxu0 0
        %1593 = vmatpush2.bf16.msra.mxu0 0
        %1594 = vmatprep.subr.bf16.mxu0 0
        %1595 = vmatpush2.bf16.msra.mxu0 0
        %1596 = vmatprep.subr.bf16.mxu0 0
        %1597 = vmatpush2.bf16.msra.mxu0 0
        %1598 = vmatprep.subr.bf16.mxu0 0
        %1599 = vmatpush2.bf16.msra.mxu0 0
        %1600 = vmatprep.subr.bf16.mxu0 0
        %1601 = vmatpush2.bf16.msra.mxu0 0
        %1602 = vmatprep.mubr.bf16.mxu0 0
        %1603 = vmatmul.mubr.bf16.gmra.mxu0 %v1376
        %v1604 = vpop.f32.mrf.mxu0
        %v1605 = vadd.f32 0.0, %v1604
        %v1606 = vpop.f32.mrf.mxu0
        %v1607 = vadd.f32 0.0, %v1606
        %v1608 = vpop.f32.mrf.mxu0
        %v1609 = vpop.f32.mrf.mxu0
        %1610 = vdwg.mxu0
        %1611 = vmatprep.subr.bf16.mxu0 %v1537
        %1612 = vmatpush1.bf16.msra.mxu0 %v1536
        %1613 = vmatprep.subr.bf16.mxu0 %v1533
        %1614 = vmatpush1.bf16.msra.mxu0 %v1532
        %1615 = vmatprep.subr.bf16.mxu0 %v1529
        %1616 = vmatpush1.bf16.msra.mxu0 %v1528
        %1617 = vmatprep.subr.bf16.mxu0 %v1525
        %1618 = vmatpush1.bf16.msra.mxu0 %v1524
        %1619 = vmatprep.subr.bf16.mxu0 %v1521
        %1620 = vmatpush1.bf16.msra.mxu0 %v1520
        %1621 = vmatprep.subr.bf16.mxu0 %v1517
        %1622 = vmatpush1.bf16.msra.mxu0 %v1516
        %1623 = vmatprep.subr.bf16.mxu0 %v1513
        %1624 = vmatpush1.bf16.msra.mxu0 %v1512
        %1625 = vmatprep.subr.bf16.mxu0 %v1509
        %1626 = vmatpush1.bf16.msra.mxu0 %v1508
        %1627 = vmatprep.subr.bf16.mxu0 0
        %1628 = vmatpush2.bf16.msra.mxu0 0
        %1629 = vmatprep.subr.bf16.mxu0 0
        %1630 = vmatpush2.bf16.msra.mxu0 0
        %1631 = vmatprep.subr.bf16.mxu0 0
        %1632 = vmatpush2.bf16.msra.mxu0 0
        %1633 = vmatprep.subr.bf16.mxu0 0
        %1634 = vmatpush2.bf16.msra.mxu0 0
        %1635 = vmatprep.subr.bf16.mxu0 0
        %1636 = vmatpush2.bf16.msra.mxu0 0
        %1637 = vmatprep.subr.bf16.mxu0 0
        %1638 = vmatpush2.bf16.msra.mxu0 0
        %1639 = vmatprep.subr.bf16.mxu0 0
        %1640 = vmatpush2.bf16.msra.mxu0 0
        %1641 = vmatprep.subr.bf16.mxu0 0
        %1642 = vmatpush2.bf16.msra.mxu0 0
        %1643 = vmatprep.mubr.bf16.mxu0 0
        %1644 = vmatmul.mubr.bf16.gmra.mxu0 %v1376
        %v1645 = vpop.f32.mrf.mxu0
        %v1646 = vadd.f32 0.0, %v1645
        %v1647 = vpop.f32.mrf.mxu0
        %v1648 = vadd.f32 0.0, %v1647
        %v1649 = vpop.f32.mrf.mxu0
        %v1650 = vpop.f32.mrf.mxu0
        %1651 = vdwg.mxu0
        %v1652 = vadd.f32 %v1324, %v1605
        %v1653 = vadd.f32 %v1326, %v1607
        %v1654 = vadd.f32 %v1365, %v1646
        %v1655 = vadd.f32 %v1367, %v1648
        %v1656 = vrot.slane %v633, 3
        %v1658 = vrot.slane %v810, 2
        %v1660 = vsel %vm814, %v1656, %v1658
        %v1661 = vpack.c.bf16 %v1660, %v1660
        %s1662 = scalar_lea.vmem %s370, 768 [#allocation8]
        %v1663 = vld [vmem:[%s1662] sm:$0xff]
        %v1664 = vld [vmem:[%s1662 + $0x8] sm:$0xff]
        %v1665 = vld [vmem:[%s1662 + $0x10] sm:$0xff]
        %v1666 = vld [vmem:[%s1662 + $0x18] sm:$0xff]
        %v1667 = vld [vmem:[%s1662 + $0x20] sm:$0xff]
        %v1668 = vld [vmem:[%s1662 + $0x28] sm:$0xff]
        %v1669 = vld [vmem:[%s1662 + $0x30] sm:$0xff]
        %v1670 = vld [vmem:[%s1662 + $0x38] sm:$0xff]
        %v1671 = vld [vmem:[%s1662 + $0x40] sm:$0xff]
        %v1672 = vld [vmem:[%s1662 + $0x48] sm:$0xff]
        %v1673 = vld [vmem:[%s1662 + $0x50] sm:$0xff]
        %v1674 = vld [vmem:[%s1662 + $0x58] sm:$0xff]
        %v1675 = vld [vmem:[%s1662 + $0x60] sm:$0xff]
        %v1676 = vld [vmem:[%s1662 + $0x68] sm:$0xff]
        %v1677 = vld [vmem:[%s1662 + $0x70] sm:$0xff]
        %v1678 = vld [vmem:[%s1662 + $0x78] sm:$0xff]
        %v1679 = vld [vmem:[%s1662 + $0x80] sm:$0xff]
        %v1680 = vld [vmem:[%s1662 + $0x88] sm:$0xff]
        %v1681 = vld [vmem:[%s1662 + $0x90] sm:$0xff]
        %v1682 = vld [vmem:[%s1662 + $0x98] sm:$0xff]
        %v1683 = vld [vmem:[%s1662 + $0xa0] sm:$0xff]
        %v1684 = vld [vmem:[%s1662 + $0xa8] sm:$0xff]
        %v1685 = vld [vmem:[%s1662 + $0xb0] sm:$0xff]
        %v1686 = vld [vmem:[%s1662 + $0xb8] sm:$0xff]
        %v1687 = vld [vmem:[%s1662 + $0xc0] sm:$0xff]
        %v1688 = vld [vmem:[%s1662 + $0xc8] sm:$0xff]
        %v1689 = vld [vmem:[%s1662 + $0xd0] sm:$0xff]
        %v1690 = vld [vmem:[%s1662 + $0xd8] sm:$0xff]
        %v1691 = vld [vmem:[%s1662 + $0xe0] sm:$0xff]
        %v1692 = vld [vmem:[%s1662 + $0xe8] sm:$0xff]
        %v1693 = vld [vmem:[%s1662 + $0xf0] sm:$0xff]
        %v1694 = vld [vmem:[%s1662 + $0xf8] sm:$0xff]
        %v1727 = vunpack.c.l.b16 %v1663
        %v1728 = vunpack.c.h.b16 %v1663
        %v1729 = vunpack.c.l.b16 %v1664
        %v1730 = vunpack.c.h.b16 %v1664
        %v1731 = vunpack.c.l.b16 %v1665
        %v1732 = vunpack.c.h.b16 %v1665
        %v1733 = vunpack.c.l.b16 %v1666
        %v1734 = vunpack.c.h.b16 %v1666
        %v1735 = vunpack.c.l.b16 %v1667
        %v1736 = vunpack.c.h.b16 %v1667
        %v1737 = vunpack.c.l.b16 %v1668
        %v1738 = vunpack.c.h.b16 %v1668
        %v1739 = vunpack.c.l.b16 %v1669
        %v1740 = vunpack.c.h.b16 %v1669
        %v1741 = vunpack.c.l.b16 %v1670
        %v1742 = vunpack.c.h.b16 %v1670
        %v1743 = vunpack.c.l.b16 %v1671
        %v1744 = vunpack.c.h.b16 %v1671
        %v1745 = vunpack.c.l.b16 %v1672
        %v1746 = vunpack.c.h.b16 %v1672
        %v1747 = vunpack.c.l.b16 %v1673
        %v1748 = vunpack.c.h.b16 %v1673
        %v1749 = vunpack.c.l.b16 %v1674
        %v1750 = vunpack.c.h.b16 %v1674
        %v1751 = vunpack.c.l.b16 %v1675
        %v1752 = vunpack.c.h.b16 %v1675
        %v1753 = vunpack.c.l.b16 %v1676
        %v1754 = vunpack.c.h.b16 %v1676
        %v1755 = vunpack.c.l.b16 %v1677
        %v1756 = vunpack.c.h.b16 %v1677
        %v1757 = vunpack.c.l.b16 %v1678
        %v1758 = vunpack.c.h.b16 %v1678
        %v1759 = vunpack.c.l.b16 %v1679
        %v1760 = vunpack.c.h.b16 %v1679
        %v1761 = vunpack.c.l.b16 %v1680
        %v1762 = vunpack.c.h.b16 %v1680
        %v1763 = vunpack.c.l.b16 %v1681
        %v1764 = vunpack.c.h.b16 %v1681
        %v1765 = vunpack.c.l.b16 %v1682
        %v1766 = vunpack.c.h.b16 %v1682
        %v1767 = vunpack.c.l.b16 %v1683
        %v1768 = vunpack.c.h.b16 %v1683
        %v1769 = vunpack.c.l.b16 %v1684
        %v1770 = vunpack.c.h.b16 %v1684
        %v1771 = vunpack.c.l.b16 %v1685
        %v1772 = vunpack.c.h.b16 %v1685
        %v1773 = vunpack.c.l.b16 %v1686
        %v1774 = vunpack.c.h.b16 %v1686
        %v1775 = vunpack.c.l.b16 %v1687
        %v1776 = vunpack.c.h.b16 %v1687
        %v1777 = vunpack.c.l.b16 %v1688
        %v1778 = vunpack.c.h.b16 %v1688
        %v1779 = vunpack.c.l.b16 %v1689
        %v1780 = vunpack.c.h.b16 %v1689
        %v1781 = vunpack.c.l.b16 %v1690
        %v1782 = vunpack.c.h.b16 %v1690
        %v1783 = vunpack.c.l.b16 %v1691
        %v1784 = vunpack.c.h.b16 %v1691
        %v1785 = vunpack.c.l.b16 %v1692
        %v1786 = vunpack.c.h.b16 %v1692
        %v1787 = vunpack.c.l.b16 %v1693
        %v1788 = vunpack.c.h.b16 %v1693
        %v1789 = vunpack.c.l.b16 %v1694
        %v1790 = vunpack.c.h.b16 %v1694
        %v1791 = vpack.c.b16 %v1731, %v1727
        %v1792 = vpack.c.b16 %v1732, %v1728
        %v1793 = vpack.c.b16 %v1733, %v1729
        %v1794 = vpack.c.b16 %v1734, %v1730
        %v1795 = vpack.c.b16 %v1739, %v1735
        %v1796 = vpack.c.b16 %v1740, %v1736
        %v1797 = vpack.c.b16 %v1741, %v1737
        %v1798 = vpack.c.b16 %v1742, %v1738
        %v1799 = vpack.c.b16 %v1747, %v1743
        %v1800 = vpack.c.b16 %v1748, %v1744
        %v1801 = vpack.c.b16 %v1749, %v1745
        %v1802 = vpack.c.b16 %v1750, %v1746
        %v1803 = vpack.c.b16 %v1755, %v1751
        %v1804 = vpack.c.b16 %v1756, %v1752
        %v1805 = vpack.c.b16 %v1757, %v1753
        %v1806 = vpack.c.b16 %v1758, %v1754
        %v1807 = vpack.c.b16 %v1763, %v1759
        %v1808 = vpack.c.b16 %v1764, %v1760
        %v1809 = vpack.c.b16 %v1765, %v1761
        %v1810 = vpack.c.b16 %v1766, %v1762
        %v1811 = vpack.c.b16 %v1771, %v1767
        %v1812 = vpack.c.b16 %v1772, %v1768
        %v1813 = vpack.c.b16 %v1773, %v1769
        %v1814 = vpack.c.b16 %v1774, %v1770
        %v1815 = vpack.c.b16 %v1779, %v1775
        %v1816 = vpack.c.b16 %v1780, %v1776
        %v1817 = vpack.c.b16 %v1781, %v1777
        %v1818 = vpack.c.b16 %v1782, %v1778
        %v1819 = vpack.c.b16 %v1787, %v1783
        %v1820 = vpack.c.b16 %v1788, %v1784
        %v1821 = vpack.c.b16 %v1789, %v1785
        %v1822 = vpack.c.b16 %v1790, %v1786
        %1855 = vmatprep.subr.bf16.mxu0 %v1820
        %1856 = vmatpush1.bf16.msra.mxu0 %v1819
        %1857 = vmatprep.subr.bf16.mxu0 %v1816
        %1858 = vmatpush1.bf16.msra.mxu0 %v1815
        %1859 = vmatprep.subr.bf16.mxu0 %v1812
        %1860 = vmatpush1.bf16.msra.mxu0 %v1811
        %1861 = vmatprep.subr.bf16.mxu0 %v1808
        %1862 = vmatpush1.bf16.msra.mxu0 %v1807
        %1863 = vmatprep.subr.bf16.mxu0 %v1804
        %1864 = vmatpush1.bf16.msra.mxu0 %v1803
        %1865 = vmatprep.subr.bf16.mxu0 %v1800
        %1866 = vmatpush1.bf16.msra.mxu0 %v1799
        %1867 = vmatprep.subr.bf16.mxu0 %v1796
        %1868 = vmatpush1.bf16.msra.mxu0 %v1795
        %1869 = vmatprep.subr.bf16.mxu0 %v1792
        %1870 = vmatpush1.bf16.msra.mxu0 %v1791
        %1871 = vmatprep.subr.bf16.mxu0 0
        %1872 = vmatpush2.bf16.msra.mxu0 0
        %1873 = vmatprep.subr.bf16.mxu0 0
        %1874 = vmatpush2.bf16.msra.mxu0 0
        %1875 = vmatprep.subr.bf16.mxu0 0
        %1876 = vmatpush2.bf16.msra.mxu0 0
        %1877 = vmatprep.subr.bf16.mxu0 0
        %1878 = vmatpush2.bf16.msra.mxu0 0
        %1879 = vmatprep.subr.bf16.mxu0 0
        %1880 = vmatpush2.bf16.msra.mxu0 0
        %1881 = vmatprep.subr.bf16.mxu0 0
        %1882 = vmatpush2.bf16.msra.mxu0 0
        %1883 = vmatprep.subr.bf16.mxu0 0
        %1884 = vmatpush2.bf16.msra.mxu0 0
        %1885 = vmatprep.subr.bf16.mxu0 0
        %1886 = vmatpush2.bf16.msra.mxu0 0
        %1887 = vmatprep.mubr.bf16.mxu0 0
        %1888 = vmatmul.mubr.bf16.gmra.mxu0 %v1661
        %v1889 = vpop.f32.mrf.mxu0
        %v1890 = vadd.f32 0.0, %v1889
        %v1891 = vpop.f32.mrf.mxu0
        %v1892 = vadd.f32 0.0, %v1891
        %v1893 = vpop.f32.mrf.mxu0
        %v1894 = vpop.f32.mrf.mxu0
        %1895 = vdwg.mxu0
        %1896 = vmatprep.subr.bf16.mxu0 %v1822
        %1897 = vmatpush1.bf16.msra.mxu0 %v1821
        %1898 = vmatprep.subr.bf16.mxu0 %v1818
        %1899 = vmatpush1.bf16.msra.mxu0 %v1817
        %1900 = vmatprep.subr.bf16.mxu0 %v1814
        %1901 = vmatpush1.bf16.msra.mxu0 %v1813
        %1902 = vmatprep.subr.bf16.mxu0 %v1810
        %1903 = vmatpush1.bf16.msra.mxu0 %v1809
        %1904 = vmatprep.subr.bf16.mxu0 %v1806
        %1905 = vmatpush1.bf16.msra.mxu0 %v1805
        %1906 = vmatprep.subr.bf16.mxu0 %v1802
        %1907 = vmatpush1.bf16.msra.mxu0 %v1801
        %1908 = vmatprep.subr.bf16.mxu0 %v1798
        %1909 = vmatpush1.bf16.msra.mxu0 %v1797
        %1910 = vmatprep.subr.bf16.mxu0 %v1794
        %1911 = vmatpush1.bf16.msra.mxu0 %v1793
        %1912 = vmatprep.subr.bf16.mxu0 0
        %1913 = vmatpush2.bf16.msra.mxu0 0
        %1914 = vmatprep.subr.bf16.mxu0 0
        %1915 = vmatpush2.bf16.msra.mxu0 0
        %1916 = vmatprep.subr.bf16.mxu0 0
        %1917 = vmatpush2.bf16.msra.mxu0 0
        %1918 = vmatprep.subr.bf16.mxu0 0
        %1919 = vmatpush2.bf16.msra.mxu0 0
        %1920 = vmatprep.subr.bf16.mxu0 0
        %1921 = vmatpush2.bf16.msra.mxu0 0
        %1922 = vmatprep.subr.bf16.mxu0 0
        %1923 = vmatpush2.bf16.msra.mxu0 0
        %1924 = vmatprep.subr.bf16.mxu0 0
        %1925 = vmatpush2.bf16.msra.mxu0 0
        %1926 = vmatprep.subr.bf16.mxu0 0
        %1927 = vmatpush2.bf16.msra.mxu0 0
        %1928 = vmatprep.mubr.bf16.mxu0 0
        %1929 = vmatmul.mubr.bf16.gmra.mxu0 %v1661
        %v1930 = vpop.f32.mrf.mxu0
        %v1931 = vadd.f32 0.0, %v1930
        %v1932 = vpop.f32.mrf.mxu0
        %v1933 = vadd.f32 0.0, %v1932
        %v1934 = vpop.f32.mrf.mxu0
        %v1935 = vpop.f32.mrf.mxu0
        %1936 = vdwg.mxu0
        %v1937 = vadd.f32 %v1652, %v1890
        %v1938 = vadd.f32 %v1653, %v1892
        %v1939 = vadd.f32 %v1654, %v1931
        %v1940 = vadd.f32 %v1655, %v1933
        %v1941 = vrot.slane %v633, 4
        %v1943 = vrot.slane %v810, 3
        %v1945 = vsel %vm814, %v1941, %v1943
        %v1946 = vpack.c.bf16 %v1945, %v1945
        %s1947 = scalar_lea.vmem %s370, 1024 [#allocation8]
        %v1948 = vld [vmem:[%s1947] sm:$0xff]
        %v1949 = vld [vmem:[%s1947 + $0x8] sm:$0xff]
        %v1950 = vld [vmem:[%s1947 + $0x10] sm:$0xff]
        %v1951 = vld [vmem:[%s1947 + $0x18] sm:$0xff]
        %v1952 = vld [vmem:[%s1947 + $0x20] sm:$0xff]
        %v1953 = vld [vmem:[%s1947 + $0x28] sm:$0xff]
        %v1954 = vld [vmem:[%s1947 + $0x30] sm:$0xff]
        %v1955 = vld [vmem:[%s1947 + $0x38] sm:$0xff]
        %v1956 = vld [vmem:[%s1947 + $0x40] sm:$0xff]
        %v1957 = vld [vmem:[%s1947 + $0x48] sm:$0xff]
        %v1958 = vld [vmem:[%s1947 + $0x50] sm:$0xff]
        %v1959 = vld [vmem:[%s1947 + $0x58] sm:$0xff]
        %v1960 = vld [vmem:[%s1947 + $0x60] sm:$0xff]
        %v1961 = vld [vmem:[%s1947 + $0x68] sm:$0xff]
        %v1962 = vld [vmem:[%s1947 + $0x70] sm:$0xff]
        %v1963 = vld [vmem:[%s1947 + $0x78] sm:$0xff]
        %v1964 = vld [vmem:[%s1947 + $0x80] sm:$0xff]
        %v1965 = vld [vmem:[%s1947 + $0x88] sm:$0xff]
        %v1966 = vld [vmem:[%s1947 + $0x90] sm:$0xff]
        %v1967 = vld [vmem:[%s1947 + $0x98] sm:$0xff]
        %v1968 = vld [vmem:[%s1947 + $0xa0] sm:$0xff]
        %v1969 = vld [vmem:[%s1947 + $0xa8] sm:$0xff]
        %v1970 = vld [vmem:[%s1947 + $0xb0] sm:$0xff]
        %v1971 = vld [vmem:[%s1947 + $0xb8] sm:$0xff]
        %v1972 = vld [vmem:[%s1947 + $0xc0] sm:$0xff]
        %v1973 = vld [vmem:[%s1947 + $0xc8] sm:$0xff]
        %v1974 = vld [vmem:[%s1947 + $0xd0] sm:$0xff]
        %v1975 = vld [vmem:[%s1947 + $0xd8] sm:$0xff]
        %v1976 = vld [vmem:[%s1947 + $0xe0] sm:$0xff]
        %v1977 = vld [vmem:[%s1947 + $0xe8] sm:$0xff]
        %v1978 = vld [vmem:[%s1947 + $0xf0] sm:$0xff]
        %v1979 = vld [vmem:[%s1947 + $0xf8] sm:$0xff]
        %v2012 = vunpack.c.l.b16 %v1948
        %v2013 = vunpack.c.h.b16 %v1948
        %v2014 = vunpack.c.l.b16 %v1949
        %v2015 = vunpack.c.h.b16 %v1949
        %v2016 = vunpack.c.l.b16 %v1950
        %v2017 = vunpack.c.h.b16 %v1950
        %v2018 = vunpack.c.l.b16 %v1951
        %v2019 = vunpack.c.h.b16 %v1951
        %v2020 = vunpack.c.l.b16 %v1952
        %v2021 = vunpack.c.h.b16 %v1952
        %v2022 = vunpack.c.l.b16 %v1953
        %v2023 = vunpack.c.h.b16 %v1953
        %v2024 = vunpack.c.l.b16 %v1954
        %v2025 = vunpack.c.h.b16 %v1954
        %v2026 = vunpack.c.l.b16 %v1955
        %v2027 = vunpack.c.h.b16 %v1955
        %v2028 = vunpack.c.l.b16 %v1956
        %v2029 = vunpack.c.h.b16 %v1956
        %v2030 = vunpack.c.l.b16 %v1957
        %v2031 = vunpack.c.h.b16 %v1957
        %v2032 = vunpack.c.l.b16 %v1958
        %v2033 = vunpack.c.h.b16 %v1958
        %v2034 = vunpack.c.l.b16 %v1959
        %v2035 = vunpack.c.h.b16 %v1959
        %v2036 = vunpack.c.l.b16 %v1960
        %v2037 = vunpack.c.h.b16 %v1960
        %v2038 = vunpack.c.l.b16 %v1961
        %v2039 = vunpack.c.h.b16 %v1961
        %v2040 = vunpack.c.l.b16 %v1962
        %v2041 = vunpack.c.h.b16 %v1962
        %v2042 = vunpack.c.l.b16 %v1963
        %v2043 = vunpack.c.h.b16 %v1963
        %v2044 = vunpack.c.l.b16 %v1964
        %v2045 = vunpack.c.h.b16 %v1964
        %v2046 = vunpack.c.l.b16 %v1965
        %v2047 = vunpack.c.h.b16 %v1965
        %v2048 = vunpack.c.l.b16 %v1966
        %v2049 = vunpack.c.h.b16 %v1966
        %v2050 = vunpack.c.l.b16 %v1967
        %v2051 = vunpack.c.h.b16 %v1967
        %v2052 = vunpack.c.l.b16 %v1968
        %v2053 = vunpack.c.h.b16 %v1968
        %v2054 = vunpack.c.l.b16 %v1969
        %v2055 = vunpack.c.h.b16 %v1969
        %v2056 = vunpack.c.l.b16 %v1970
        %v2057 = vunpack.c.h.b16 %v1970
        %v2058 = vunpack.c.l.b16 %v1971
        %v2059 = vunpack.c.h.b16 %v1971
        %v2060 = vunpack.c.l.b16 %v1972
        %v2061 = vunpack.c.h.b16 %v1972
        %v2062 = vunpack.c.l.b16 %v1973
        %v2063 = vunpack.c.h.b16 %v1973
        %v2064 = vunpack.c.l.b16 %v1974
        %v2065 = vunpack.c.h.b16 %v1974
        %v2066 = vunpack.c.l.b16 %v1975
        %v2067 = vunpack.c.h.b16 %v1975
        %v2068 = vunpack.c.l.b16 %v1976
        %v2069 = vunpack.c.h.b16 %v1976
        %v2070 = vunpack.c.l.b16 %v1977
        %v2071 = vunpack.c.h.b16 %v1977
        %v2072 = vunpack.c.l.b16 %v1978
        %v2073 = vunpack.c.h.b16 %v1978
        %v2074 = vunpack.c.l.b16 %v1979
        %v2075 = vunpack.c.h.b16 %v1979
        %v2076 = vpack.c.b16 %v2016, %v2012
        %v2077 = vpack.c.b16 %v2017, %v2013
        %v2078 = vpack.c.b16 %v2018, %v2014
        %v2079 = vpack.c.b16 %v2019, %v2015
        %v2080 = vpack.c.b16 %v2024, %v2020
        %v2081 = vpack.c.b16 %v2025, %v2021
        %v2082 = vpack.c.b16 %v2026, %v2022
        %v2083 = vpack.c.b16 %v2027, %v2023
        %v2084 = vpack.c.b16 %v2032, %v2028
        %v2085 = vpack.c.b16 %v2033, %v2029
        %v2086 = vpack.c.b16 %v2034, %v2030
        %v2087 = vpack.c.b16 %v2035, %v2031
        %v2088 = vpack.c.b16 %v2040, %v2036
        %v2089 = vpack.c.b16 %v2041, %v2037
        %v2090 = vpack.c.b16 %v2042, %v2038
        %v2091 = vpack.c.b16 %v2043, %v2039
        %v2092 = vpack.c.b16 %v2048, %v2044
        %v2093 = vpack.c.b16 %v2049, %v2045
        %v2094 = vpack.c.b16 %v2050, %v2046
        %v2095 = vpack.c.b16 %v2051, %v2047
        %v2096 = vpack.c.b16 %v2056, %v2052
        %v2097 = vpack.c.b16 %v2057, %v2053
        %v2098 = vpack.c.b16 %v2058, %v2054
        %v2099 = vpack.c.b16 %v2059, %v2055
        %v2100 = vpack.c.b16 %v2064, %v2060
        %v2101 = vpack.c.b16 %v2065, %v2061
        %v2102 = vpack.c.b16 %v2066, %v2062
        %v2103 = vpack.c.b16 %v2067, %v2063
        %v2104 = vpack.c.b16 %v2072, %v2068
        %v2105 = vpack.c.b16 %v2073, %v2069
        %v2106 = vpack.c.b16 %v2074, %v2070
        %v2107 = vpack.c.b16 %v2075, %v2071
        %2140 = vmatprep.subr.bf16.mxu0 %v2105
        %2141 = vmatpush1.bf16.msra.mxu0 %v2104
        %2142 = vmatprep.subr.bf16.mxu0 %v2101
        %2143 = vmatpush1.bf16.msra.mxu0 %v2100
        %2144 = vmatprep.subr.bf16.mxu0 %v2097
        %2145 = vmatpush1.bf16.msra.mxu0 %v2096
        %2146 = vmatprep.subr.bf16.mxu0 %v2093
        %2147 = vmatpush1.bf16.msra.mxu0 %v2092
        %2148 = vmatprep.subr.bf16.mxu0 %v2089
        %2149 = vmatpush1.bf16.msra.mxu0 %v2088
        %2150 = vmatprep.subr.bf16.mxu0 %v2085
        %2151 = vmatpush1.bf16.msra.mxu0 %v2084
        %2152 = vmatprep.subr.bf16.mxu0 %v2081
        %2153 = vmatpush1.bf16.msra.mxu0 %v2080
        %2154 = vmatprep.subr.bf16.mxu0 %v2077
        %2155 = vmatpush1.bf16.msra.mxu0 %v2076
        %2156 = vmatprep.subr.bf16.mxu0 0
        %2157 = vmatpush2.bf16.msra.mxu0 0
        %2158 = vmatprep.subr.bf16.mxu0 0
        %2159 = vmatpush2.bf16.msra.mxu0 0
        %2160 = vmatprep.subr.bf16.mxu0 0
        %2161 = vmatpush2.bf16.msra.mxu0 0
        %2162 = vmatprep.subr.bf16.mxu0 0
        %2163 = vmatpush2.bf16.msra.mxu0 0
        %2164 = vmatprep.subr.bf16.mxu0 0
        %2165 = vmatpush2.bf16.msra.mxu0 0
        %2166 = vmatprep.subr.bf16.mxu0 0
        %2167 = vmatpush2.bf16.msra.mxu0 0
        %2168 = vmatprep.subr.bf16.mxu0 0
        %2169 = vmatpush2.bf16.msra.mxu0 0
        %2170 = vmatprep.subr.bf16.mxu0 0
        %2171 = vmatpush2.bf16.msra.mxu0 0
        %2172 = vmatprep.mubr.bf16.mxu0 0
        %2173 = vmatmul.mubr.bf16.gmra.mxu0 %v1946
        %v2174 = vpop.f32.mrf.mxu0
        %v2175 = vadd.f32 0.0, %v2174
        %v2176 = vpop.f32.mrf.mxu0
        %v2177 = vadd.f32 0.0, %v2176
        %v2178 = vpop.f32.mrf.mxu0
        %v2179 = vpop.f32.mrf.mxu0
        %2180 = vdwg.mxu0
        %2181 = vmatprep.subr.bf16.mxu0 %v2107
        %2182 = vmatpush1.bf16.msra.mxu0 %v2106
        %2183 = vmatprep.subr.bf16.mxu0 %v2103
        %2184 = vmatpush1.bf16.msra.mxu0 %v2102
        %2185 = vmatprep.subr.bf16.mxu0 %v2099
        %2186 = vmatpush1.bf16.msra.mxu0 %v2098
        %2187 = vmatprep.subr.bf16.mxu0 %v2095
        %2188 = vmatpush1.bf16.msra.mxu0 %v2094
        %2189 = vmatprep.subr.bf16.mxu0 %v2091
        %2190 = vmatpush1.bf16.msra.mxu0 %v2090
        %2191 = vmatprep.subr.bf16.mxu0 %v2087
        %2192 = vmatpush1.bf16.msra.mxu0 %v2086
        %2193 = vmatprep.subr.bf16.mxu0 %v2083
        %2194 = vmatpush1.bf16.msra.mxu0 %v2082
        %2195 = vmatprep.subr.bf16.mxu0 %v2079
        %2196 = vmatpush1.bf16.msra.mxu0 %v2078
        %2197 = vmatprep.subr.bf16.mxu0 0
        %2198 = vmatpush2.bf16.msra.mxu0 0
        %2199 = vmatprep.subr.bf16.mxu0 0
        %2200 = vmatpush2.bf16.msra.mxu0 0
        %2201 = vmatprep.subr.bf16.mxu0 0
        %2202 = vmatpush2.bf16.msra.mxu0 0
        %2203 = vmatprep.subr.bf16.mxu0 0
        %2204 = vmatpush2.bf16.msra.mxu0 0
        %2205 = vmatprep.subr.bf16.mxu0 0
        %2206 = vmatpush2.bf16.msra.mxu0 0
        %2207 = vmatprep.subr.bf16.mxu0 0
        %2208 = vmatpush2.bf16.msra.mxu0 0
        %2209 = vmatprep.subr.bf16.mxu0 0
        %2210 = vmatpush2.bf16.msra.mxu0 0
        %2211 = vmatprep.subr.bf16.mxu0 0
        %2212 = vmatpush2.bf16.msra.mxu0 0
        %2213 = vmatprep.mubr.bf16.mxu0 0
        %2214 = vmatmul.mubr.bf16.gmra.mxu0 %v1946
        %v2215 = vpop.f32.mrf.mxu0
        %v2216 = vadd.f32 0.0, %v2215
        %v2217 = vpop.f32.mrf.mxu0
        %v2218 = vadd.f32 0.0, %v2217
        %v2219 = vpop.f32.mrf.mxu0
        %v2220 = vpop.f32.mrf.mxu0
        %2221 = vdwg.mxu0
        %v2222 = vadd.f32 %v1937, %v2175
        %v2223 = vadd.f32 %v1938, %v2177
        %v2224 = vadd.f32 %v1939, %v2216
        %v2225 = vadd.f32 %v1940, %v2218
        %v2226 = vrot.slane %v633, 5
        %v2228 = vrot.slane %v810, 4
        %v2230 = vsel %vm814, %v2226, %v2228
        %v2231 = vpack.c.bf16 %v2230, %v2230
        %s2232 = scalar_lea.vmem %s370, 1280 [#allocation8]
        %v2233 = vld [vmem:[%s2232] sm:$0xff]
        %v2234 = vld [vmem:[%s2232 + $0x8] sm:$0xff]
        %v2235 = vld [vmem:[%s2232 + $0x10] sm:$0xff]
        %v2236 = vld [vmem:[%s2232 + $0x18] sm:$0xff]
        %v2237 = vld [vmem:[%s2232 + $0x20] sm:$0xff]
        %v2238 = vld [vmem:[%s2232 + $0x28] sm:$0xff]
        %v2239 = vld [vmem:[%s2232 + $0x30] sm:$0xff]
        %v2240 = vld [vmem:[%s2232 + $0x38] sm:$0xff]
        %v2241 = vld [vmem:[%s2232 + $0x40] sm:$0xff]
        %v2242 = vld [vmem:[%s2232 + $0x48] sm:$0xff]
        %v2243 = vld [vmem:[%s2232 + $0x50] sm:$0xff]
        %v2244 = vld [vmem:[%s2232 + $0x58] sm:$0xff]
        %v2245 = vld [vmem:[%s2232 + $0x60] sm:$0xff]
        %v2246 = vld [vmem:[%s2232 + $0x68] sm:$0xff]
        %v2247 = vld [vmem:[%s2232 + $0x70] sm:$0xff]
        %v2248 = vld [vmem:[%s2232 + $0x78] sm:$0xff]
        %v2249 = vld [vmem:[%s2232 + $0x80] sm:$0xff]
        %v2250 = vld [vmem:[%s2232 + $0x88] sm:$0xff]
        %v2251 = vld [vmem:[%s2232 + $0x90] sm:$0xff]
        %v2252 = vld [vmem:[%s2232 + $0x98] sm:$0xff]
        %v2253 = vld [vmem:[%s2232 + $0xa0] sm:$0xff]
        %v2254 = vld [vmem:[%s2232 + $0xa8] sm:$0xff]
        %v2255 = vld [vmem:[%s2232 + $0xb0] sm:$0xff]
        %v2256 = vld [vmem:[%s2232 + $0xb8] sm:$0xff]
        %v2257 = vld [vmem:[%s2232 + $0xc0] sm:$0xff]
        %v2258 = vld [vmem:[%s2232 + $0xc8] sm:$0xff]
        %v2259 = vld [vmem:[%s2232 + $0xd0] sm:$0xff]
        %v2260 = vld [vmem:[%s2232 + $0xd8] sm:$0xff]
        %v2261 = vld [vmem:[%s2232 + $0xe0] sm:$0xff]
        %v2262 = vld [vmem:[%s2232 + $0xe8] sm:$0xff]
        %v2263 = vld [vmem:[%s2232 + $0xf0] sm:$0xff]
        %v2264 = vld [vmem:[%s2232 + $0xf8] sm:$0xff]
        %v2297 = vunpack.c.l.b16 %v2233
        %v2298 = vunpack.c.h.b16 %v2233
        %v2299 = vunpack.c.l.b16 %v2234
        %v2300 = vunpack.c.h.b16 %v2234
        %v2301 = vunpack.c.l.b16 %v2235
        %v2302 = vunpack.c.h.b16 %v2235
        %v2303 = vunpack.c.l.b16 %v2236
        %v2304 = vunpack.c.h.b16 %v2236
        %v2305 = vunpack.c.l.b16 %v2237
        %v2306 = vunpack.c.h.b16 %v2237
        %v2307 = vunpack.c.l.b16 %v2238
        %v2308 = vunpack.c.h.b16 %v2238
        %v2309 = vunpack.c.l.b16 %v2239
        %v2310 = vunpack.c.h.b16 %v2239
        %v2311 = vunpack.c.l.b16 %v2240
        %v2312 = vunpack.c.h.b16 %v2240
        %v2313 = vunpack.c.l.b16 %v2241
        %v2314 = vunpack.c.h.b16 %v2241
        %v2315 = vunpack.c.l.b16 %v2242
        %v2316 = vunpack.c.h.b16 %v2242
        %v2317 = vunpack.c.l.b16 %v2243
        %v2318 = vunpack.c.h.b16 %v2243
        %v2319 = vunpack.c.l.b16 %v2244
        %v2320 = vunpack.c.h.b16 %v2244
        %v2321 = vunpack.c.l.b16 %v2245
        %v2322 = vunpack.c.h.b16 %v2245
        %v2323 = vunpack.c.l.b16 %v2246
        %v2324 = vunpack.c.h.b16 %v2246
        %v2325 = vunpack.c.l.b16 %v2247
        %v2326 = vunpack.c.h.b16 %v2247
        %v2327 = vunpack.c.l.b16 %v2248
        %v2328 = vunpack.c.h.b16 %v2248
        %v2329 = vunpack.c.l.b16 %v2249
        %v2330 = vunpack.c.h.b16 %v2249
        %v2331 = vunpack.c.l.b16 %v2250
        %v2332 = vunpack.c.h.b16 %v2250
        %v2333 = vunpack.c.l.b16 %v2251
        %v2334 = vunpack.c.h.b16 %v2251
        %v2335 = vunpack.c.l.b16 %v2252
        %v2336 = vunpack.c.h.b16 %v2252
        %v2337 = vunpack.c.l.b16 %v2253
        %v2338 = vunpack.c.h.b16 %v2253
        %v2339 = vunpack.c.l.b16 %v2254
        %v2340 = vunpack.c.h.b16 %v2254
        %v2341 = vunpack.c.l.b16 %v2255
        %v2342 = vunpack.c.h.b16 %v2255
        %v2343 = vunpack.c.l.b16 %v2256
        %v2344 = vunpack.c.h.b16 %v2256
        %v2345 = vunpack.c.l.b16 %v2257
        %v2346 = vunpack.c.h.b16 %v2257
        %v2347 = vunpack.c.l.b16 %v2258
        %v2348 = vunpack.c.h.b16 %v2258
        %v2349 = vunpack.c.l.b16 %v2259
        %v2350 = vunpack.c.h.b16 %v2259
        %v2351 = vunpack.c.l.b16 %v2260
        %v2352 = vunpack.c.h.b16 %v2260
        %v2353 = vunpack.c.l.b16 %v2261
        %v2354 = vunpack.c.h.b16 %v2261
        %v2355 = vunpack.c.l.b16 %v2262
        %v2356 = vunpack.c.h.b16 %v2262
        %v2357 = vunpack.c.l.b16 %v2263
        %v2358 = vunpack.c.h.b16 %v2263
        %v2359 = vunpack.c.l.b16 %v2264
        %v2360 = vunpack.c.h.b16 %v2264
        %v2361 = vpack.c.b16 %v2301, %v2297
        %v2362 = vpack.c.b16 %v2302, %v2298
        %v2363 = vpack.c.b16 %v2303, %v2299
        %v2364 = vpack.c.b16 %v2304, %v2300
        %v2365 = vpack.c.b16 %v2309, %v2305
        %v2366 = vpack.c.b16 %v2310, %v2306
        %v2367 = vpack.c.b16 %v2311, %v2307
        %v2368 = vpack.c.b16 %v2312, %v2308
        %v2369 = vpack.c.b16 %v2317, %v2313
        %v2370 = vpack.c.b16 %v2318, %v2314
        %v2371 = vpack.c.b16 %v2319, %v2315
        %v2372 = vpack.c.b16 %v2320, %v2316
        %v2373 = vpack.c.b16 %v2325, %v2321
        %v2374 = vpack.c.b16 %v2326, %v2322
        %v2375 = vpack.c.b16 %v2327, %v2323
        %v2376 = vpack.c.b16 %v2328, %v2324
        %v2377 = vpack.c.b16 %v2333, %v2329
        %v2378 = vpack.c.b16 %v2334, %v2330
        %v2379 = vpack.c.b16 %v2335, %v2331
        %v2380 = vpack.c.b16 %v2336, %v2332
        %v2381 = vpack.c.b16 %v2341, %v2337
        %v2382 = vpack.c.b16 %v2342, %v2338
        %v2383 = vpack.c.b16 %v2343, %v2339
        %v2384 = vpack.c.b16 %v2344, %v2340
        %v2385 = vpack.c.b16 %v2349, %v2345
        %v2386 = vpack.c.b16 %v2350, %v2346
        %v2387 = vpack.c.b16 %v2351, %v2347
        %v2388 = vpack.c.b16 %v2352, %v2348
        %v2389 = vpack.c.b16 %v2357, %v2353
        %v2390 = vpack.c.b16 %v2358, %v2354
        %v2391 = vpack.c.b16 %v2359, %v2355
        %v2392 = vpack.c.b16 %v2360, %v2356
        %2425 = vmatprep.subr.bf16.mxu0 %v2390
        %2426 = vmatpush1.bf16.msra.mxu0 %v2389
        %2427 = vmatprep.subr.bf16.mxu0 %v2386
        %2428 = vmatpush1.bf16.msra.mxu0 %v2385
        %2429 = vmatprep.subr.bf16.mxu0 %v2382
        %2430 = vmatpush1.bf16.msra.mxu0 %v2381
        %2431 = vmatprep.subr.bf16.mxu0 %v2378
        %2432 = vmatpush1.bf16.msra.mxu0 %v2377
        %2433 = vmatprep.subr.bf16.mxu0 %v2374
        %2434 = vmatpush1.bf16.msra.mxu0 %v2373
        %2435 = vmatprep.subr.bf16.mxu0 %v2370
        %2436 = vmatpush1.bf16.msra.mxu0 %v2369
        %2437 = vmatprep.subr.bf16.mxu0 %v2366
        %2438 = vmatpush1.bf16.msra.mxu0 %v2365
        %2439 = vmatprep.subr.bf16.mxu0 %v2362
        %2440 = vmatpush1.bf16.msra.mxu0 %v2361
        %2441 = vmatprep.subr.bf16.mxu0 0
        %2442 = vmatpush2.bf16.msra.mxu0 0
        %2443 = vmatprep.subr.bf16.mxu0 0
        %2444 = vmatpush2.bf16.msra.mxu0 0
        %2445 = vmatprep.subr.bf16.mxu0 0
        %2446 = vmatpush2.bf16.msra.mxu0 0
        %2447 = vmatprep.subr.bf16.mxu0 0
        %2448 = vmatpush2.bf16.msra.mxu0 0
        %2449 = vmatprep.subr.bf16.mxu0 0
        %2450 = vmatpush2.bf16.msra.mxu0 0
        %2451 = vmatprep.subr.bf16.mxu0 0
        %2452 = vmatpush2.bf16.msra.mxu0 0
        %2453 = vmatprep.subr.bf16.mxu0 0
        %2454 = vmatpush2.bf16.msra.mxu0 0
        %2455 = vmatprep.subr.bf16.mxu0 0
        %2456 = vmatpush2.bf16.msra.mxu0 0
        %2457 = vmatprep.mubr.bf16.mxu0 0
        %2458 = vmatmul.mubr.bf16.gmra.mxu0 %v2231
        %v2459 = vpop.f32.mrf.mxu0
        %v2460 = vadd.f32 0.0, %v2459
        %v2461 = vpop.f32.mrf.mxu0
        %v2462 = vadd.f32 0.0, %v2461
        %v2463 = vpop.f32.mrf.mxu0
        %v2464 = vpop.f32.mrf.mxu0
        %2465 = vdwg.mxu0
        %2466 = vmatprep.subr.bf16.mxu0 %v2392
        %2467 = vmatpush1.bf16.msra.mxu0 %v2391
        %2468 = vmatprep.subr.bf16.mxu0 %v2388
        %2469 = vmatpush1.bf16.msra.mxu0 %v2387
        %2470 = vmatprep.subr.bf16.mxu0 %v2384
        %2471 = vmatpush1.bf16.msra.mxu0 %v2383
        %2472 = vmatprep.subr.bf16.mxu0 %v2380
        %2473 = vmatpush1.bf16.msra.mxu0 %v2379
        %2474 = vmatprep.subr.bf16.mxu0 %v2376
        %2475 = vmatpush1.bf16.msra.mxu0 %v2375
        %2476 = vmatprep.subr.bf16.mxu0 %v2372
        %2477 = vmatpush1.bf16.msra.mxu0 %v2371
        %2478 = vmatprep.subr.bf16.mxu0 %v2368
        %2479 = vmatpush1.bf16.msra.mxu0 %v2367
        %2480 = vmatprep.subr.bf16.mxu0 %v2364
        %2481 = vmatpush1.bf16.msra.mxu0 %v2363
        %2482 = vmatprep.subr.bf16.mxu0 0
        %2483 = vmatpush2.bf16.msra.mxu0 0
        %2484 = vmatprep.subr.bf16.mxu0 0
        %2485 = vmatpush2.bf16.msra.mxu0 0
        %2486 = vmatprep.subr.bf16.mxu0 0
        %2487 = vmatpush2.bf16.msra.mxu0 0
        %2488 = vmatprep.subr.bf16.mxu0 0
        %2489 = vmatpush2.bf16.msra.mxu0 0
        %2490 = vmatprep.subr.bf16.mxu0 0
        %2491 = vmatpush2.bf16.msra.mxu0 0
        %2492 = vmatprep.subr.bf16.mxu0 0
        %2493 = vmatpush2.bf16.msra.mxu0 0
        %2494 = vmatprep.subr.bf16.mxu0 0
        %2495 = vmatpush2.bf16.msra.mxu0 0
        %2496 = vmatprep.subr.bf16.mxu0 0
        %2497 = vmatpush2.bf16.msra.mxu0 0
        %2498 = vmatprep.mubr.bf16.mxu0 0
        %2499 = vmatmul.mubr.bf16.gmra.mxu0 %v2231
        %v2500 = vpop.f32.mrf.mxu0
        %v2501 = vadd.f32 0.0, %v2500
        %v2502 = vpop.f32.mrf.mxu0
        %v2503 = vadd.f32 0.0, %v2502
        %v2504 = vpop.f32.mrf.mxu0
        %v2505 = vpop.f32.mrf.mxu0
        %2506 = vdwg.mxu0
        %v2507 = vadd.f32 %v2222, %v2460
        %v2508 = vadd.f32 %v2223, %v2462
        %v2509 = vadd.f32 %v2224, %v2501
        %v2510 = vadd.f32 %v2225, %v2503
        %v2511 = vrot.slane %v633, 6
        %v2513 = vrot.slane %v810, 5
        %v2515 = vsel %vm814, %v2511, %v2513
        %v2516 = vpack.c.bf16 %v2515, %v2515
        %s2517 = scalar_lea.vmem %s370, 1536 [#allocation8]
        %v2518 = vld [vmem:[%s2517] sm:$0xff]
        %v2519 = vld [vmem:[%s2517 + $0x8] sm:$0xff]
        %v2520 = vld [vmem:[%s2517 + $0x10] sm:$0xff]
        %v2521 = vld [vmem:[%s2517 + $0x18] sm:$0xff]
        %v2522 = vld [vmem:[%s2517 + $0x20] sm:$0xff]
        %v2523 = vld [vmem:[%s2517 + $0x28] sm:$0xff]
        %v2524 = vld [vmem:[%s2517 + $0x30] sm:$0xff]
        %v2525 = vld [vmem:[%s2517 + $0x38] sm:$0xff]
        %v2526 = vld [vmem:[%s2517 + $0x40] sm:$0xff]
        %v2527 = vld [vmem:[%s2517 + $0x48] sm:$0xff]
        %v2528 = vld [vmem:[%s2517 + $0x50] sm:$0xff]
        %v2529 = vld [vmem:[%s2517 + $0x58] sm:$0xff]
        %v2530 = vld [vmem:[%s2517 + $0x60] sm:$0xff]
        %v2531 = vld [vmem:[%s2517 + $0x68] sm:$0xff]
        %v2532 = vld [vmem:[%s2517 + $0x70] sm:$0xff]
        %v2533 = vld [vmem:[%s2517 + $0x78] sm:$0xff]
        %v2534 = vld [vmem:[%s2517 + $0x80] sm:$0xff]
        %v2535 = vld [vmem:[%s2517 + $0x88] sm:$0xff]
        %v2536 = vld [vmem:[%s2517 + $0x90] sm:$0xff]
        %v2537 = vld [vmem:[%s2517 + $0x98] sm:$0xff]
        %v2538 = vld [vmem:[%s2517 + $0xa0] sm:$0xff]
        %v2539 = vld [vmem:[%s2517 + $0xa8] sm:$0xff]
        %v2540 = vld [vmem:[%s2517 + $0xb0] sm:$0xff]
        %v2541 = vld [vmem:[%s2517 + $0xb8] sm:$0xff]
        %v2542 = vld [vmem:[%s2517 + $0xc0] sm:$0xff]
        %v2543 = vld [vmem:[%s2517 + $0xc8] sm:$0xff]
        %v2544 = vld [vmem:[%s2517 + $0xd0] sm:$0xff]
        %v2545 = vld [vmem:[%s2517 + $0xd8] sm:$0xff]
        %v2546 = vld [vmem:[%s2517 + $0xe0] sm:$0xff]
        %v2547 = vld [vmem:[%s2517 + $0xe8] sm:$0xff]
        %v2548 = vld [vmem:[%s2517 + $0xf0] sm:$0xff]
        %v2549 = vld [vmem:[%s2517 + $0xf8] sm:$0xff]
        %v2582 = vunpack.c.l.b16 %v2518
        %v2583 = vunpack.c.h.b16 %v2518
        %v2584 = vunpack.c.l.b16 %v2519
        %v2585 = vunpack.c.h.b16 %v2519
        %v2586 = vunpack.c.l.b16 %v2520
        %v2587 = vunpack.c.h.b16 %v2520
        %v2588 = vunpack.c.l.b16 %v2521
        %v2589 = vunpack.c.h.b16 %v2521
        %v2590 = vunpack.c.l.b16 %v2522
        %v2591 = vunpack.c.h.b16 %v2522
        %v2592 = vunpack.c.l.b16 %v2523
        %v2593 = vunpack.c.h.b16 %v2523
        %v2594 = vunpack.c.l.b16 %v2524
        %v2595 = vunpack.c.h.b16 %v2524
        %v2596 = vunpack.c.l.b16 %v2525
        %v2597 = vunpack.c.h.b16 %v2525
        %v2598 = vunpack.c.l.b16 %v2526
        %v2599 = vunpack.c.h.b16 %v2526
        %v2600 = vunpack.c.l.b16 %v2527
        %v2601 = vunpack.c.h.b16 %v2527
        %v2602 = vunpack.c.l.b16 %v2528
        %v2603 = vunpack.c.h.b16 %v2528
        %v2604 = vunpack.c.l.b16 %v2529
        %v2605 = vunpack.c.h.b16 %v2529
        %v2606 = vunpack.c.l.b16 %v2530
        %v2607 = vunpack.c.h.b16 %v2530
        %v2608 = vunpack.c.l.b16 %v2531
        %v2609 = vunpack.c.h.b16 %v2531
        %v2610 = vunpack.c.l.b16 %v2532
        %v2611 = vunpack.c.h.b16 %v2532
        %v2612 = vunpack.c.l.b16 %v2533
        %v2613 = vunpack.c.h.b16 %v2533
        %v2614 = vunpack.c.l.b16 %v2534
        %v2615 = vunpack.c.h.b16 %v2534
        %v2616 = vunpack.c.l.b16 %v2535
        %v2617 = vunpack.c.h.b16 %v2535
        %v2618 = vunpack.c.l.b16 %v2536
        %v2619 = vunpack.c.h.b16 %v2536
        %v2620 = vunpack.c.l.b16 %v2537
        %v2621 = vunpack.c.h.b16 %v2537
        %v2622 = vunpack.c.l.b16 %v2538
        %v2623 = vunpack.c.h.b16 %v2538
        %v2624 = vunpack.c.l.b16 %v2539
        %v2625 = vunpack.c.h.b16 %v2539
        %v2626 = vunpack.c.l.b16 %v2540
        %v2627 = vunpack.c.h.b16 %v2540
        %v2628 = vunpack.c.l.b16 %v2541
        %v2629 = vunpack.c.h.b16 %v2541
        %v2630 = vunpack.c.l.b16 %v2542
        %v2631 = vunpack.c.h.b16 %v2542
        %v2632 = vunpack.c.l.b16 %v2543
        %v2633 = vunpack.c.h.b16 %v2543
        %v2634 = vunpack.c.l.b16 %v2544
        %v2635 = vunpack.c.h.b16 %v2544
        %v2636 = vunpack.c.l.b16 %v2545
        %v2637 = vunpack.c.h.b16 %v2545
        %v2638 = vunpack.c.l.b16 %v2546
        %v2639 = vunpack.c.h.b16 %v2546
        %v2640 = vunpack.c.l.b16 %v2547
        %v2641 = vunpack.c.h.b16 %v2547
        %v2642 = vunpack.c.l.b16 %v2548
        %v2643 = vunpack.c.h.b16 %v2548
        %v2644 = vunpack.c.l.b16 %v2549
        %v2645 = vunpack.c.h.b16 %v2549
        %v2646 = vpack.c.b16 %v2586, %v2582
        %v2647 = vpack.c.b16 %v2587, %v2583
        %v2648 = vpack.c.b16 %v2588, %v2584
        %v2649 = vpack.c.b16 %v2589, %v2585
        %v2650 = vpack.c.b16 %v2594, %v2590
        %v2651 = vpack.c.b16 %v2595, %v2591
        %v2652 = vpack.c.b16 %v2596, %v2592
        %v2653 = vpack.c.b16 %v2597, %v2593
        %v2654 = vpack.c.b16 %v2602, %v2598
        %v2655 = vpack.c.b16 %v2603, %v2599
        %v2656 = vpack.c.b16 %v2604, %v2600
        %v2657 = vpack.c.b16 %v2605, %v2601
        %v2658 = vpack.c.b16 %v2610, %v2606
        %v2659 = vpack.c.b16 %v2611, %v2607
        %v2660 = vpack.c.b16 %v2612, %v2608
        %v2661 = vpack.c.b16 %v2613, %v2609
        %v2662 = vpack.c.b16 %v2618, %v2614
        %v2663 = vpack.c.b16 %v2619, %v2615
        %v2664 = vpack.c.b16 %v2620, %v2616
        %v2665 = vpack.c.b16 %v2621, %v2617
        %v2666 = vpack.c.b16 %v2626, %v2622
        %v2667 = vpack.c.b16 %v2627, %v2623
        %v2668 = vpack.c.b16 %v2628, %v2624
        %v2669 = vpack.c.b16 %v2629, %v2625
        %v2670 = vpack.c.b16 %v2634, %v2630
        %v2671 = vpack.c.b16 %v2635, %v2631
        %v2672 = vpack.c.b16 %v2636, %v2632
        %v2673 = vpack.c.b16 %v2637, %v2633
        %v2674 = vpack.c.b16 %v2642, %v2638
        %v2675 = vpack.c.b16 %v2643, %v2639
        %v2676 = vpack.c.b16 %v2644, %v2640
        %v2677 = vpack.c.b16 %v2645, %v2641
        %2710 = vmatprep.subr.bf16.mxu0 %v2675
        %2711 = vmatpush1.bf16.msra.mxu0 %v2674
        %2712 = vmatprep.subr.bf16.mxu0 %v2671
        %2713 = vmatpush1.bf16.msra.mxu0 %v2670
        %2714 = vmatprep.subr.bf16.mxu0 %v2667
        %2715 = vmatpush1.bf16.msra.mxu0 %v2666
        %2716 = vmatprep.subr.bf16.mxu0 %v2663
        %2717 = vmatpush1.bf16.msra.mxu0 %v2662
        %2718 = vmatprep.subr.bf16.mxu0 %v2659
        %2719 = vmatpush1.bf16.msra.mxu0 %v2658
        %2720 = vmatprep.subr.bf16.mxu0 %v2655
        %2721 = vmatpush1.bf16.msra.mxu0 %v2654
        %2722 = vmatprep.subr.bf16.mxu0 %v2651
        %2723 = vmatpush1.bf16.msra.mxu0 %v2650
        %2724 = vmatprep.subr.bf16.mxu0 %v2647
        %2725 = vmatpush1.bf16.msra.mxu0 %v2646
        %2726 = vmatprep.subr.bf16.mxu0 0
        %2727 = vmatpush2.bf16.msra.mxu0 0
        %2728 = vmatprep.subr.bf16.mxu0 0
        %2729 = vmatpush2.bf16.msra.mxu0 0
        %2730 = vmatprep.subr.bf16.mxu0 0
        %2731 = vmatpush2.bf16.msra.mxu0 0
        %2732 = vmatprep.subr.bf16.mxu0 0
        %2733 = vmatpush2.bf16.msra.mxu0 0
        %2734 = vmatprep.subr.bf16.mxu0 0
        %2735 = vmatpush2.bf16.msra.mxu0 0
        %2736 = vmatprep.subr.bf16.mxu0 0
        %2737 = vmatpush2.bf16.msra.mxu0 0
        %2738 = vmatprep.subr.bf16.mxu0 0
        %2739 = vmatpush2.bf16.msra.mxu0 0
        %2740 = vmatprep.subr.bf16.mxu0 0
        %2741 = vmatpush2.bf16.msra.mxu0 0
        %2742 = vmatprep.mubr.bf16.mxu0 0
        %2743 = vmatmul.mubr.bf16.gmra.mxu0 %v2516
        %v2744 = vpop.f32.mrf.mxu0
        %v2745 = vadd.f32 0.0, %v2744
        %v2746 = vpop.f32.mrf.mxu0
        %v2747 = vadd.f32 0.0, %v2746
        %v2748 = vpop.f32.mrf.mxu0
        %v2749 = vpop.f32.mrf.mxu0
        %2750 = vdwg.mxu0
        %2751 = vmatprep.subr.bf16.mxu0 %v2677
        %2752 = vmatpush1.bf16.msra.mxu0 %v2676
        %2753 = vmatprep.subr.bf16.mxu0 %v2673
        %2754 = vmatpush1.bf16.msra.mxu0 %v2672
        %2755 = vmatprep.subr.bf16.mxu0 %v2669
        %2756 = vmatpush1.bf16.msra.mxu0 %v2668
        %2757 = vmatprep.subr.bf16.mxu0 %v2665
        %2758 = vmatpush1.bf16.msra.mxu0 %v2664
        %2759 = vmatprep.subr.bf16.mxu0 %v2661
        %2760 = vmatpush1.bf16.msra.mxu0 %v2660
        %2761 = vmatprep.subr.bf16.mxu0 %v2657
        %2762 = vmatpush1.bf16.msra.mxu0 %v2656
        %2763 = vmatprep.subr.bf16.mxu0 %v2653
        %2764 = vmatpush1.bf16.msra.mxu0 %v2652
        %2765 = vmatprep.subr.bf16.mxu0 %v2649
        %2766 = vmatpush1.bf16.msra.mxu0 %v2648
        %2767 = vmatprep.subr.bf16.mxu0 0
        %2768 = vmatpush2.bf16.msra.mxu0 0
        %2769 = vmatprep.subr.bf16.mxu0 0
        %2770 = vmatpush2.bf16.msra.mxu0 0
        %2771 = vmatprep.subr.bf16.mxu0 0
        %2772 = vmatpush2.bf16.msra.mxu0 0
        %2773 = vmatprep.subr.bf16.mxu0 0
        %2774 = vmatpush2.bf16.msra.mxu0 0
        %2775 = vmatprep.subr.bf16.mxu0 0
        %2776 = vmatpush2.bf16.msra.mxu0 0
        %2777 = vmatprep.subr.bf16.mxu0 0
        %2778 = vmatpush2.bf16.msra.mxu0 0
        %2779 = vmatprep.subr.bf16.mxu0 0
        %2780 = vmatpush2.bf16.msra.mxu0 0
        %2781 = vmatprep.subr.bf16.mxu0 0
        %2782 = vmatpush2.bf16.msra.mxu0 0
        %2783 = vmatprep.mubr.bf16.mxu0 0
        %2784 = vmatmul.mubr.bf16.gmra.mxu0 %v2516
        %v2785 = vpop.f32.mrf.mxu0
        %v2786 = vadd.f32 0.0, %v2785
        %v2787 = vpop.f32.mrf.mxu0
        %v2788 = vadd.f32 0.0, %v2787
        %v2789 = vpop.f32.mrf.mxu0
        %v2790 = vpop.f32.mrf.mxu0
        %2791 = vdwg.mxu0
        %v2792 = vadd.f32 %v2507, %v2745
        %v2793 = vadd.f32 %v2508, %v2747
        %v2794 = vadd.f32 %v2509, %v2786
        %v2795 = vadd.f32 %v2510, %v2788
        %v2796 = vrot.slane %v633, 7
        %v2798 = vrot.slane %v810, 6
        %v2800 = vsel %vm814, %v2796, %v2798
        %v2801 = vpack.c.bf16 %v2800, %v2800
        %s2802 = scalar_lea.vmem %s370, 1792 [#allocation8]
        %v2803 = vld [vmem:[%s2802] sm:$0xff]
        %v2804 = vld [vmem:[%s2802 + $0x8] sm:$0xff]
        %v2805 = vld [vmem:[%s2802 + $0x10] sm:$0xff]
        %v2806 = vld [vmem:[%s2802 + $0x18] sm:$0xff]
        %v2807 = vld [vmem:[%s2802 + $0x20] sm:$0xff]
        %v2808 = vld [vmem:[%s2802 + $0x28] sm:$0xff]
        %v2809 = vld [vmem:[%s2802 + $0x30] sm:$0xff]
        %v2810 = vld [vmem:[%s2802 + $0x38] sm:$0xff]
        %v2811 = vld [vmem:[%s2802 + $0x40] sm:$0xff]
        %v2812 = vld [vmem:[%s2802 + $0x48] sm:$0xff]
        %v2813 = vld [vmem:[%s2802 + $0x50] sm:$0xff]
        %v2814 = vld [vmem:[%s2802 + $0x58] sm:$0xff]
        %v2815 = vld [vmem:[%s2802 + $0x60] sm:$0xff]
        %v2816 = vld [vmem:[%s2802 + $0x68] sm:$0xff]
        %v2817 = vld [vmem:[%s2802 + $0x70] sm:$0xff]
        %v2818 = vld [vmem:[%s2802 + $0x78] sm:$0xff]
        %v2819 = vld [vmem:[%s2802 + $0x80] sm:$0xff]
        %v2820 = vld [vmem:[%s2802 + $0x88] sm:$0xff]
        %v2821 = vld [vmem:[%s2802 + $0x90] sm:$0xff]
        %v2822 = vld [vmem:[%s2802 + $0x98] sm:$0xff]
        %v2823 = vld [vmem:[%s2802 + $0xa0] sm:$0xff]
        %v2824 = vld [vmem:[%s2802 + $0xa8] sm:$0xff]
        %v2825 = vld [vmem:[%s2802 + $0xb0] sm:$0xff]
        %v2826 = vld [vmem:[%s2802 + $0xb8] sm:$0xff]
        %v2827 = vld [vmem:[%s2802 + $0xc0] sm:$0xff]
        %v2828 = vld [vmem:[%s2802 + $0xc8] sm:$0xff]
        %v2829 = vld [vmem:[%s2802 + $0xd0] sm:$0xff]
        %v2830 = vld [vmem:[%s2802 + $0xd8] sm:$0xff]
        %v2831 = vld [vmem:[%s2802 + $0xe0] sm:$0xff]
        %v2832 = vld [vmem:[%s2802 + $0xe8] sm:$0xff]
        %v2833 = vld [vmem:[%s2802 + $0xf0] sm:$0xff]
        %v2834 = vld [vmem:[%s2802 + $0xf8] sm:$0xff]
        %v2867 = vunpack.c.l.b16 %v2803
        %v2868 = vunpack.c.h.b16 %v2803
        %v2869 = vunpack.c.l.b16 %v2804
        %v2870 = vunpack.c.h.b16 %v2804
        %v2871 = vunpack.c.l.b16 %v2805
        %v2872 = vunpack.c.h.b16 %v2805
        %v2873 = vunpack.c.l.b16 %v2806
        %v2874 = vunpack.c.h.b16 %v2806
        %v2875 = vunpack.c.l.b16 %v2807
        %v2876 = vunpack.c.h.b16 %v2807
        %v2877 = vunpack.c.l.b16 %v2808
        %v2878 = vunpack.c.h.b16 %v2808
        %v2879 = vunpack.c.l.b16 %v2809
        %v2880 = vunpack.c.h.b16 %v2809
        %v2881 = vunpack.c.l.b16 %v2810
        %v2882 = vunpack.c.h.b16 %v2810
        %v2883 = vunpack.c.l.b16 %v2811
        %v2884 = vunpack.c.h.b16 %v2811
        %v2885 = vunpack.c.l.b16 %v2812
        %v2886 = vunpack.c.h.b16 %v2812
        %v2887 = vunpack.c.l.b16 %v2813
        %v2888 = vunpack.c.h.b16 %v2813
        %v2889 = vunpack.c.l.b16 %v2814
        %v2890 = vunpack.c.h.b16 %v2814
        %v2891 = vunpack.c.l.b16 %v2815
        %v2892 = vunpack.c.h.b16 %v2815
        %v2893 = vunpack.c.l.b16 %v2816
        %v2894 = vunpack.c.h.b16 %v2816
        %v2895 = vunpack.c.l.b16 %v2817
        %v2896 = vunpack.c.h.b16 %v2817
        %v2897 = vunpack.c.l.b16 %v2818
        %v2898 = vunpack.c.h.b16 %v2818
        %v2899 = vunpack.c.l.b16 %v2819
        %v2900 = vunpack.c.h.b16 %v2819
        %v2901 = vunpack.c.l.b16 %v2820
        %v2902 = vunpack.c.h.b16 %v2820
        %v2903 = vunpack.c.l.b16 %v2821
        %v2904 = vunpack.c.h.b16 %v2821
        %v2905 = vunpack.c.l.b16 %v2822
        %v2906 = vunpack.c.h.b16 %v2822
        %v2907 = vunpack.c.l.b16 %v2823
        %v2908 = vunpack.c.h.b16 %v2823
        %v2909 = vunpack.c.l.b16 %v2824
        %v2910 = vunpack.c.h.b16 %v2824
        %v2911 = vunpack.c.l.b16 %v2825
        %v2912 = vunpack.c.h.b16 %v2825
        %v2913 = vunpack.c.l.b16 %v2826
        %v2914 = vunpack.c.h.b16 %v2826
        %v2915 = vunpack.c.l.b16 %v2827
        %v2916 = vunpack.c.h.b16 %v2827
        %v2917 = vunpack.c.l.b16 %v2828
        %v2918 = vunpack.c.h.b16 %v2828
        %v2919 = vunpack.c.l.b16 %v2829
        %v2920 = vunpack.c.h.b16 %v2829
        %v2921 = vunpack.c.l.b16 %v2830
        %v2922 = vunpack.c.h.b16 %v2830
        %v2923 = vunpack.c.l.b16 %v2831
        %v2924 = vunpack.c.h.b16 %v2831
        %v2925 = vunpack.c.l.b16 %v2832
        %v2926 = vunpack.c.h.b16 %v2832
        %v2927 = vunpack.c.l.b16 %v2833
        %v2928 = vunpack.c.h.b16 %v2833
        %v2929 = vunpack.c.l.b16 %v2834
        %v2930 = vunpack.c.h.b16 %v2834
        %v2931 = vpack.c.b16 %v2871, %v2867
        %v2932 = vpack.c.b16 %v2872, %v2868
        %v2933 = vpack.c.b16 %v2873, %v2869
        %v2934 = vpack.c.b16 %v2874, %v2870
        %v2935 = vpack.c.b16 %v2879, %v2875
        %v2936 = vpack.c.b16 %v2880, %v2876
        %v2937 = vpack.c.b16 %v2881, %v2877
        %v2938 = vpack.c.b16 %v2882, %v2878
        %v2939 = vpack.c.b16 %v2887, %v2883
        %v2940 = vpack.c.b16 %v2888, %v2884
        %v2941 = vpack.c.b16 %v2889, %v2885
        %v2942 = vpack.c.b16 %v2890, %v2886
        %v2943 = vpack.c.b16 %v2895, %v2891
        %v2944 = vpack.c.b16 %v2896, %v2892
        %v2945 = vpack.c.b16 %v2897, %v2893
        %v2946 = vpack.c.b16 %v2898, %v2894
        %v2947 = vpack.c.b16 %v2903, %v2899
        %v2948 = vpack.c.b16 %v2904, %v2900
        %v2949 = vpack.c.b16 %v2905, %v2901
        %v2950 = vpack.c.b16 %v2906, %v2902
        %v2951 = vpack.c.b16 %v2911, %v2907
        %v2952 = vpack.c.b16 %v2912, %v2908
        %v2953 = vpack.c.b16 %v2913, %v2909
        %v2954 = vpack.c.b16 %v2914, %v2910
        %v2955 = vpack.c.b16 %v2919, %v2915
        %v2956 = vpack.c.b16 %v2920, %v2916
        %v2957 = vpack.c.b16 %v2921, %v2917
        %v2958 = vpack.c.b16 %v2922, %v2918
        %v2959 = vpack.c.b16 %v2927, %v2923
        %v2960 = vpack.c.b16 %v2928, %v2924
        %v2961 = vpack.c.b16 %v2929, %v2925
        %v2962 = vpack.c.b16 %v2930, %v2926
        %2995 = vmatprep.subr.bf16.mxu0 %v2960
        %2996 = vmatpush1.bf16.msra.mxu0 %v2959
        %2997 = vmatprep.subr.bf16.mxu0 %v2956
        %2998 = vmatpush1.bf16.msra.mxu0 %v2955
        %2999 = vmatprep.subr.bf16.mxu0 %v2952
        %3000 = vmatpush1.bf16.msra.mxu0 %v2951
        %3001 = vmatprep.subr.bf16.mxu0 %v2948
        %3002 = vmatpush1.bf16.msra.mxu0 %v2947
        %3003 = vmatprep.subr.bf16.mxu0 %v2944
        %3004 = vmatpush1.bf16.msra.mxu0 %v2943
        %3005 = vmatprep.subr.bf16.mxu0 %v2940
        %3006 = vmatpush1.bf16.msra.mxu0 %v2939
        %3007 = vmatprep.subr.bf16.mxu0 %v2936
        %3008 = vmatpush1.bf16.msra.mxu0 %v2935
        %3009 = vmatprep.subr.bf16.mxu0 %v2932
        %3010 = vmatpush1.bf16.msra.mxu0 %v2931
        %3011 = vmatprep.subr.bf16.mxu0 0
        %3012 = vmatpush2.bf16.msra.mxu0 0
        %3013 = vmatprep.subr.bf16.mxu0 0
        %3014 = vmatpush2.bf16.msra.mxu0 0
        %3015 = vmatprep.subr.bf16.mxu0 0
        %3016 = vmatpush2.bf16.msra.mxu0 0
        %3017 = vmatprep.subr.bf16.mxu0 0
        %3018 = vmatpush2.bf16.msra.mxu0 0
        %3019 = vmatprep.subr.bf16.mxu0 0
        %3020 = vmatpush2.bf16.msra.mxu0 0
        %3021 = vmatprep.subr.bf16.mxu0 0
        %3022 = vmatpush2.bf16.msra.mxu0 0
        %3023 = vmatprep.subr.bf16.mxu0 0
        %3024 = vmatpush2.bf16.msra.mxu0 0
        %3025 = vmatprep.subr.bf16.mxu0 0
        %3026 = vmatpush2.bf16.msra.mxu0 0
        %3027 = vmatprep.mubr.bf16.mxu0 0
        %3028 = vmatmul.mubr.bf16.gmra.mxu0 %v2801
        %v3029 = vpop.f32.mrf.mxu0
        %v3030 = vadd.f32 0.0, %v3029
        %v3031 = vpop.f32.mrf.mxu0
        %v3032 = vadd.f32 0.0, %v3031
        %v3033 = vpop.f32.mrf.mxu0
        %v3034 = vpop.f32.mrf.mxu0
        %3035 = vdwg.mxu0
        %3036 = vmatprep.subr.bf16.mxu0 %v2962
        %3037 = vmatpush1.bf16.msra.mxu0 %v2961
        %3038 = vmatprep.subr.bf16.mxu0 %v2958
        %3039 = vmatpush1.bf16.msra.mxu0 %v2957
        %3040 = vmatprep.subr.bf16.mxu0 %v2954
        %3041 = vmatpush1.bf16.msra.mxu0 %v2953
        %3042 = vmatprep.subr.bf16.mxu0 %v2950
        %3043 = vmatpush1.bf16.msra.mxu0 %v2949
        %3044 = vmatprep.subr.bf16.mxu0 %v2946
        %3045 = vmatpush1.bf16.msra.mxu0 %v2945
        %3046 = vmatprep.subr.bf16.mxu0 %v2942
        %3047 = vmatpush1.bf16.msra.mxu0 %v2941
        %3048 = vmatprep.subr.bf16.mxu0 %v2938
        %3049 = vmatpush1.bf16.msra.mxu0 %v2937
        %3050 = vmatprep.subr.bf16.mxu0 %v2934
        %3051 = vmatpush1.bf16.msra.mxu0 %v2933
        %3052 = vmatprep.subr.bf16.mxu0 0
        %3053 = vmatpush2.bf16.msra.mxu0 0
        %3054 = vmatprep.subr.bf16.mxu0 0
        %3055 = vmatpush2.bf16.msra.mxu0 0
        %3056 = vmatprep.subr.bf16.mxu0 0
        %3057 = vmatpush2.bf16.msra.mxu0 0
        %3058 = vmatprep.subr.bf16.mxu0 0
        %3059 = vmatpush2.bf16.msra.mxu0 0
        %3060 = vmatprep.subr.bf16.mxu0 0
        %3061 = vmatpush2.bf16.msra.mxu0 0
        %3062 = vmatprep.subr.bf16.mxu0 0
        %3063 = vmatpush2.bf16.msra.mxu0 0
        %3064 = vmatprep.subr.bf16.mxu0 0
        %3065 = vmatpush2.bf16.msra.mxu0 0
        %3066 = vmatprep.subr.bf16.mxu0 0
        %3067 = vmatpush2.bf16.msra.mxu0 0
        %3068 = vmatprep.mubr.bf16.mxu0 0
        %3069 = vmatmul.mubr.bf16.gmra.mxu0 %v2801
        %v3070 = vpop.f32.mrf.mxu0
        %v3071 = vadd.f32 0.0, %v3070
        %v3072 = vpop.f32.mrf.mxu0
        %v3073 = vadd.f32 0.0, %v3072
        %v3074 = vpop.f32.mrf.mxu0
        %v3075 = vpop.f32.mrf.mxu0
        %3076 = vdwg.mxu0
        %v3077 = vadd.f32 %v2792, %v3030
        %v3078 = vadd.f32 %v2793, %v3032
        %v3079 = vadd.f32 %v2794, %v3071
        %v3080 = vadd.f32 %v2795, %v3073
        %v3081 = vld [vmem:[#allocation2] sm:$0xff]
        %v3086 = vcombine.low %v3077, %v3078
        %v3087 = vcombine.low %v3079, %v3080
        %v3089 = vunpack.c.l.s4 1983009808
        %v3090 = vunpack.c.0.s8 %v3089
        %v3091 = vlaneseq
        %v3092 = vshrl.u32 %v3091, 7
        %v3093 = vsub.s32 %v3090, %v3092
        %v3094 = vrot.slane %v3086, %v3093
        %v3096 = vunpack.c.l.s4 1983009808
        %v3097 = vunpack.c.0.s8 %v3096
        %v3098 = vlaneseq
        %v3099 = vshrl.u32 %v3098, 7
        %v3100 = vsub.s32 %v3097, %v3099
        %v3101 = vrot.slane %v3087, %v3100
        %v3102 = vcombine.low %v3094, %v3101
        %v3104 = vadd.f32 %v3081, %v3102
        %3105 = vst [vmem:[#allocation2] sm:$0xff] %v3104
        %p3106 = scmp.eq.s32.totalorder %s30, 1
        // Predicated region
        $region73: #{aux_predictor_forward.1} parent=47 // pred_check
          %p3107 = pneg %p3106
        $region74: #{aux_predictor_forward.1} parent=47 // pred_check_branch
          %3109 = sbr.rel (%p3107) target = $region76
        $region75: #{aux_predictor_forward.1} parent=47 // pred_region
          %v3110 = vld [vmem:[#allocation2] sm:$0xff]
          %v3111 = vld [vmem:[%s379] sm:$0xf]
          %v3113 = vlaneseq
          %v3114 = vshrl.u32 %v3113, 7
          %v3115 = vsub.s32 0, %v3114
          %v3116 = vrot.slane %v3111, %v3115
          %v3117 = vlaneseq
          %v3118 = vshrl.u32 %v3117, 7
          %v3119 = vsub.s32 1, %v3118
          %v3120 = vrot.slane %v3111, %v3119
          %v3121 = vlaneseq
          %v3122 = vshrl.u32 %v3121, 7
          %v3123 = vsub.s32 2, %v3122
          %v3124 = vrot.slane %v3111, %v3123
          %v3125 = vlaneseq
          %v3126 = vshrl.u32 %v3125, 7
          %v3127 = vsub.s32 3, %v3126
          %v3128 = vrot.slane %v3111, %v3127
          %v3129 = vcombine.low %v3116, %v3120
          %v3130 = vcombine.low %v3124, %v3128
          %v3132 = vunpack.c.l.s4 1983009808
          %v3133 = vunpack.c.0.s8 %v3132
          %v3134 = vlaneseq
          %v3135 = vshrl.u32 %v3134, 7
          %v3136 = vsub.s32 %v3133, %v3135
          %v3137 = vrot.slane %v3129, %v3136
          %v3139 = vunpack.c.l.s4 1983009808
          %v3140 = vunpack.c.0.s8 %v3139
          %v3141 = vlaneseq
          %v3142 = vshrl.u32 %v3141, 7
          %v3143 = vsub.s32 %v3140, %v3142
          %v3144 = vrot.slane %v3130, %v3143
          %v3145 = vcombine.low %v3137, %v3144
          %v3147 = vadd.f32 %v3110, %v3145
          %v3148 = vmax.f32 %v3147, 0.0
          %v3149 = vld [vmem:[%s431] sm:$0xf]
          %v3150 = vld [vmem:[%s431 + $0x4] sm:$0xf]
          %v3151 = vld [vmem:[%s431 + $0x8] sm:$0xf]
          %v3152 = vld [vmem:[%s431 + $0xc] sm:$0xf]
          %v3153 = vld [vmem:[%s431 + $0x10] sm:$0xf]
          %v3154 = vld [vmem:[%s431 + $0x14] sm:$0xf]
          %v3155 = vld [vmem:[%s431 + $0x18] sm:$0xf]
          %v3156 = vld [vmem:[%s431 + $0x1c] sm:$0xf]
          %v3157 = vld [vmem:[%s431 + $0x20] sm:$0xf]
          %v3158 = vld [vmem:[%s431 + $0x24] sm:$0xf]
          %v3159 = vld [vmem:[%s431 + $0x28] sm:$0xf]
          %v3160 = vld [vmem:[%s431 + $0x2c] sm:$0xf]
          %v3161 = vld [vmem:[%s431 + $0x30] sm:$0xf]
          %v3162 = vld [vmem:[%s431 + $0x34] sm:$0xf]
          %v3163 = vld [vmem:[%s431 + $0x38] sm:$0xf]
          %v3164 = vld [vmem:[%s431 + $0x3c] sm:$0xf]
          %v3165 = vld [vmem:[%s431 + $0x40] sm:$0xf]
          %v3166 = vld [vmem:[%s431 + $0x44] sm:$0xf]
          %v3167 = vld [vmem:[%s431 + $0x48] sm:$0xf]
          %v3168 = vld [vmem:[%s431 + $0x4c] sm:$0xf]
          %v3169 = vld [vmem:[%s431 + $0x50] sm:$0xf]
          %v3170 = vld [vmem:[%s431 + $0x54] sm:$0xf]
          %v3171 = vld [vmem:[%s431 + $0x58] sm:$0xf]
          %v3172 = vld [vmem:[%s431 + $0x5c] sm:$0xf]
          %v3173 = vld [vmem:[%s431 + $0x60] sm:$0xf]
          %v3174 = vld [vmem:[%s431 + $0x64] sm:$0xf]
          %v3175 = vld [vmem:[%s431 + $0x68] sm:$0xf]
          %v3176 = vld [vmem:[%s431 + $0x6c] sm:$0xf]
          %v3177 = vld [vmem:[%s431 + $0x70] sm:$0xf]
          %v3178 = vld [vmem:[%s431 + $0x74] sm:$0xf]
          %v3179 = vld [vmem:[%s431 + $0x78] sm:$0xf]
          %v3180 = vld [vmem:[%s431 + $0x7c] sm:$0xf]
          %v3181 = vld [vmem:[%s431 + $0x80] sm:$0xf]
          %v3182 = vld [vmem:[%s431 + $0x84] sm:$0xf]
          %v3183 = vld [vmem:[%s431 + $0x88] sm:$0xf]
          %v3184 = vld [vmem:[%s431 + $0x8c] sm:$0xf]
          %v3185 = vld [vmem:[%s431 + $0x90] sm:$0xf]
          %v3186 = vld [vmem:[%s431 + $0x94] sm:$0xf]
          %v3187 = vld [vmem:[%s431 + $0x98] sm:$0xf]
          %v3188 = vld [vmem:[%s431 + $0x9c] sm:$0xf]
          %v3189 = vld [vmem:[%s431 + $0xa0] sm:$0xf]
          %v3190 = vld [vmem:[%s431 + $0xa4] sm:$0xf]
          %v3191 = vld [vmem:[%s431 + $0xa8] sm:$0xf]
          %v3192 = vld [vmem:[%s431 + $0xac] sm:$0xf]
          %v3193 = vld [vmem:[%s431 + $0xb0] sm:$0xf]
          %v3194 = vld [vmem:[%s431 + $0xb4] sm:$0xf]
          %v3195 = vld [vmem:[%s431 + $0xb8] sm:$0xf]
          %v3196 = vld [vmem:[%s431 + $0xbc] sm:$0xf]
          %v3197 = vld [vmem:[%s431 + $0xc0] sm:$0xf]
          %v3198 = vld [vmem:[%s431 + $0xc4] sm:$0xf]
          %v3199 = vld [vmem:[%s431 + $0xc8] sm:$0xf]
          %v3200 = vld [vmem:[%s431 + $0xcc] sm:$0xf]
          %v3201 = vld [vmem:[%s431 + $0xd0] sm:$0xf]
          %v3202 = vld [vmem:[%s431 + $0xd4] sm:$0xf]
          %v3203 = vld [vmem:[%s431 + $0xd8] sm:$0xf]
          %v3204 = vld [vmem:[%s431 + $0xdc] sm:$0xf]
          %v3205 = vld [vmem:[%s431 + $0xe0] sm:$0xf]
          %v3206 = vld [vmem:[%s431 + $0xe4] sm:$0xf]
          %v3207 = vld [vmem:[%s431 + $0xe8] sm:$0xf]
          %v3208 = vld [vmem:[%s431 + $0xec] sm:$0xf]
          %v3209 = vld [vmem:[%s431 + $0xf0] sm:$0xf]
          %v3210 = vld [vmem:[%s431 + $0xf4] sm:$0xf]
          %v3211 = vld [vmem:[%s431 + $0xf8] sm:$0xf]
          %v3212 = vld [vmem:[%s431 + $0xfc] sm:$0xf]
          %v3213 = vunpack.c.l.bf16 %v3149
          %v3214 = vunpack.c.l.bf16 %v3150
          %v3215 = vunpack.c.l.bf16 %v3151
          %v3216 = vunpack.c.l.bf16 %v3152
          %v3217 = vunpack.c.l.bf16 %v3153
          %v3218 = vunpack.c.l.bf16 %v3154
          %v3219 = vunpack.c.l.bf16 %v3155
          %v3220 = vunpack.c.l.bf16 %v3156
          %v3221 = vunpack.c.l.bf16 %v3157
          %v3222 = vunpack.c.l.bf16 %v3158
          %v3223 = vunpack.c.l.bf16 %v3159
          %v3224 = vunpack.c.l.bf16 %v3160
          %v3225 = vunpack.c.l.bf16 %v3161
          %v3226 = vunpack.c.l.bf16 %v3162
          %v3227 = vunpack.c.l.bf16 %v3163
          %v3228 = vunpack.c.l.bf16 %v3164
          %v3229 = vunpack.c.l.bf16 %v3165
          %v3230 = vunpack.c.l.bf16 %v3166
          %v3231 = vunpack.c.l.bf16 %v3167
          %v3232 = vunpack.c.l.bf16 %v3168
          %v3233 = vunpack.c.l.bf16 %v3169
          %v3234 = vunpack.c.l.bf16 %v3170
          %v3235 = vunpack.c.l.bf16 %v3171
          %v3236 = vunpack.c.l.bf16 %v3172
          %v3237 = vunpack.c.l.bf16 %v3173
          %v3238 = vunpack.c.l.bf16 %v3174
          %v3239 = vunpack.c.l.bf16 %v3175
          %v3240 = vunpack.c.l.bf16 %v3176
          %v3241 = vunpack.c.l.bf16 %v3177
          %v3242 = vunpack.c.l.bf16 %v3178
          %v3243 = vunpack.c.l.bf16 %v3179
          %v3244 = vunpack.c.l.bf16 %v3180
          %v3245 = vunpack.c.l.bf16 %v3181
          %v3246 = vunpack.c.l.bf16 %v3182
          %v3247 = vunpack.c.l.bf16 %v3183
          %v3248 = vunpack.c.l.bf16 %v3184
          %v3249 = vunpack.c.l.bf16 %v3185
          %v3250 = vunpack.c.l.bf16 %v3186
          %v3251 = vunpack.c.l.bf16 %v3187
          %v3252 = vunpack.c.l.bf16 %v3188
          %v3253 = vunpack.c.l.bf16 %v3189
          %v3254 = vunpack.c.l.bf16 %v3190
          %v3255 = vunpack.c.l.bf16 %v3191
          %v3256 = vunpack.c.l.bf16 %v3192
          %v3257 = vunpack.c.l.bf16 %v3193
          %v3258 = vunpack.c.l.bf16 %v3194
          %v3259 = vunpack.c.l.bf16 %v3195
          %v3260 = vunpack.c.l.bf16 %v3196
          %v3261 = vunpack.c.l.bf16 %v3197
          %v3262 = vunpack.c.l.bf16 %v3198
          %v3263 = vunpack.c.l.bf16 %v3199
          %v3264 = vunpack.c.l.bf16 %v3200
          %v3265 = vunpack.c.l.bf16 %v3201
          %v3266 = vunpack.c.l.bf16 %v3202
          %v3267 = vunpack.c.l.bf16 %v3203
          %v3268 = vunpack.c.l.bf16 %v3204
          %v3269 = vunpack.c.l.bf16 %v3205
          %v3270 = vunpack.c.l.bf16 %v3206
          %v3271 = vunpack.c.l.bf16 %v3207
          %v3272 = vunpack.c.l.bf16 %v3208
          %v3273 = vunpack.c.l.bf16 %v3209
          %v3274 = vunpack.c.l.bf16 %v3210
          %v3275 = vunpack.c.l.bf16 %v3211
          %v3276 = vunpack.c.l.bf16 %v3212
          %v3278 = vcombine.high %v3148, %v3148
          %v3280 = vunpack.c.l.s4 1983009808
          %v3281 = vunpack.c.0.s8 %v3280
          %v3282 = vlaneseq
          %v3283 = vshrl.u32 %v3282, 7
          %v3284 = vsub.s32 %v3281, %v3283
          %v3285 = vrot.slane %v3148, %v3284
          %v3287 = vunpack.c.l.s4 1983009808
          %v3288 = vunpack.c.0.s8 %v3287
          %v3289 = vlaneseq
          %v3290 = vshrl.u32 %v3289, 7
          %v3291 = vsub.s32 %v3288, %v3290
          %v3292 = vrot.slane %v3278, %v3291
          %v3293 = vcombine.high %v3285, %v3285
          %v3294 = vcombine.high %v3292, %v3292
          %3299 = vmatprep.subr.mxu0 0.0
          %3300 = vmatpush1.msra.mxu0 %v3228
          %3301 = vmatprep.subr.mxu0 0.0
          %3302 = vmatpush1.msra.mxu0 %v3227
          %3303 = vmatprep.subr.mxu0 0.0
          %3304 = vmatpush1.msra.mxu0 %v3226
          %3305 = vmatprep.subr.mxu0 0.0
          %3306 = vmatpush1.msra.mxu0 %v3225
          %3307 = vmatprep.subr.mxu0 0.0
          %3308 = vmatpush1.msra.mxu0 %v3224
          %3309 = vmatprep.subr.mxu0 0.0
          %3310 = vmatpush1.msra.mxu0 %v3223
          %3311 = vmatprep.subr.mxu0 0.0
          %3312 = vmatpush1.msra.mxu0 %v3222
          %3313 = vmatprep.subr.mxu0 0.0
          %3314 = vmatpush1.msra.mxu0 %v3221
          %3315 = vmatprep.subr.mxu0 0.0
          %3316 = vmatpush1.msra.mxu0 %v3220
          %3317 = vmatprep.subr.mxu0 0.0
          %3318 = vmatpush1.msra.mxu0 %v3219
          %3319 = vmatprep.subr.mxu0 0.0
          %3320 = vmatpush1.msra.mxu0 %v3218
          %3321 = vmatprep.subr.mxu0 0.0
          %3322 = vmatpush1.msra.mxu0 %v3217
          %3323 = vmatprep.subr.mxu0 0.0
          %3324 = vmatpush1.msra.mxu0 %v3216
          %3325 = vmatprep.subr.mxu0 0.0
          %3326 = vmatpush1.msra.mxu0 %v3215
          %3327 = vmatprep.subr.mxu0 0.0
          %3328 = vmatpush1.msra.mxu0 %v3214
          %3329 = vmatprep.subr.mxu0 0.0
          %3330 = vmatpush1.msra.mxu0 %v3213
          %3331 = vmatprep.subr.mxu0 0.0
          %3332 = vmatpush2.msra.mxu0 %v3244
          %3333 = vmatprep.subr.mxu0 0.0
          %3334 = vmatpush2.msra.mxu0 %v3243
          %3335 = vmatprep.subr.mxu0 0.0
          %3336 = vmatpush2.msra.mxu0 %v3242
          %3337 = vmatprep.subr.mxu0 0.0
          %3338 = vmatpush2.msra.mxu0 %v3241
          %3339 = vmatprep.subr.mxu0 0.0
          %3340 = vmatpush2.msra.mxu0 %v3240
          %3341 = vmatprep.subr.mxu0 0.0
          %3342 = vmatpush2.msra.mxu0 %v3239
          %3343 = vmatprep.subr.mxu0 0.0
          %3344 = vmatpush2.msra.mxu0 %v3238
          %3345 = vmatprep.subr.mxu0 0.0
          %3346 = vmatpush2.msra.mxu0 %v3237
          %3347 = vmatprep.subr.mxu0 0.0
          %3348 = vmatpush2.msra.mxu0 %v3236
          %3349 = vmatprep.subr.mxu0 0.0
          %3350 = vmatpush2.msra.mxu0 %v3235
          %3351 = vmatprep.subr.mxu0 0.0
          %3352 = vmatpush2.msra.mxu0 %v3234
          %3353 = vmatprep.subr.mxu0 0.0
          %3354 = vmatpush2.msra.mxu0 %v3233
          %3355 = vmatprep.subr.mxu0 0.0
          %3356 = vmatpush2.msra.mxu0 %v3232
          %3357 = vmatprep.subr.mxu0 0.0
          %3358 = vmatpush2.msra.mxu0 %v3231
          %3359 = vmatprep.subr.mxu0 0.0
          %3360 = vmatpush2.msra.mxu0 %v3230
          %3361 = vmatprep.subr.mxu0 0.0
          %3362 = vmatpush2.msra.mxu0 %v3229
          %3363 = vmatprep.mubr.f32.mxu0 %v3293
          %3364 = vmatmul.mubr.f32.gmra.mxu0 %v3285
          %v3365 = vpop.f32.mrf.mxu0
          %v3366 = vadd.f32 0.0, %v3365
          %v3367 = vpop.f32.mrf.mxu0
          %3368 = vdwg.mxu0
          %3369 = vmatprep.subr.mxu0 0.0
          %3370 = vmatpush1.msra.mxu0 %v3260
          %3371 = vmatprep.subr.mxu0 0.0
          %3372 = vmatpush1.msra.mxu0 %v3259
          %3373 = vmatprep.subr.mxu0 0.0
          %3374 = vmatpush1.msra.mxu0 %v3258
          %3375 = vmatprep.subr.mxu0 0.0
          %3376 = vmatpush1.msra.mxu0 %v3257
          %3377 = vmatprep.subr.mxu0 0.0
          %3378 = vmatpush1.msra.mxu0 %v3256
          %3379 = vmatprep.subr.mxu0 0.0
          %3380 = vmatpush1.msra.mxu0 %v3255
          %3381 = vmatprep.subr.mxu0 0.0
          %3382 = vmatpush1.msra.mxu0 %v3254
          %3383 = vmatprep.subr.mxu0 0.0
          %3384 = vmatpush1.msra.mxu0 %v3253
          %3385 = vmatprep.subr.mxu0 0.0
          %3386 = vmatpush1.msra.mxu0 %v3252
          %3387 = vmatprep.subr.mxu0 0.0
          %3388 = vmatpush1.msra.mxu0 %v3251
          %3389 = vmatprep.subr.mxu0 0.0
          %3390 = vmatpush1.msra.mxu0 %v3250
          %3391 = vmatprep.subr.mxu0 0.0
          %3392 = vmatpush1.msra.mxu0 %v3249
          %3393 = vmatprep.subr.mxu0 0.0
          %3394 = vmatpush1.msra.mxu0 %v3248
          %3395 = vmatprep.subr.mxu0 0.0
          %3396 = vmatpush1.msra.mxu0 %v3247
          %3397 = vmatprep.subr.mxu0 0.0
          %3398 = vmatpush1.msra.mxu0 %v3246
          %3399 = vmatprep.subr.mxu0 0.0
          %3400 = vmatpush1.msra.mxu0 %v3245
          %3401 = vmatprep.subr.mxu0 0.0
          %3402 = vmatpush2.msra.mxu0 %v3276
          %3403 = vmatprep.subr.mxu0 0.0
          %3404 = vmatpush2.msra.mxu0 %v3275
          %3405 = vmatprep.subr.mxu0 0.0
          %3406 = vmatpush2.msra.mxu0 %v3274
          %3407 = vmatprep.subr.mxu0 0.0
          %3408 = vmatpush2.msra.mxu0 %v3273
          %3409 = vmatprep.subr.mxu0 0.0
          %3410 = vmatpush2.msra.mxu0 %v3272
          %3411 = vmatprep.subr.mxu0 0.0
          %3412 = vmatpush2.msra.mxu0 %v3271
          %3413 = vmatprep.subr.mxu0 0.0
          %3414 = vmatpush2.msra.mxu0 %v3270
          %3415 = vmatprep.subr.mxu0 0.0
          %3416 = vmatpush2.msra.mxu0 %v3269
          %3417 = vmatprep.subr.mxu0 0.0
          %3418 = vmatpush2.msra.mxu0 %v3268
          %3419 = vmatprep.subr.mxu0 0.0
          %3420 = vmatpush2.msra.mxu0 %v3267
          %3421 = vmatprep.subr.mxu0 0.0
          %3422 = vmatpush2.msra.mxu0 %v3266
          %3423 = vmatprep.subr.mxu0 0.0
          %3424 = vmatpush2.msra.mxu0 %v3265
          %3425 = vmatprep.subr.mxu0 0.0
          %3426 = vmatpush2.msra.mxu0 %v3264
          %3427 = vmatprep.subr.mxu0 0.0
          %3428 = vmatpush2.msra.mxu0 %v3263
          %3429 = vmatprep.subr.mxu0 0.0
          %3430 = vmatpush2.msra.mxu0 %v3262
          %3431 = vmatprep.subr.mxu0 0.0
          %3432 = vmatpush2.msra.mxu0 %v3261
          %3433 = vmatprep.mubr.f32.mxu0 %v3294
          %3434 = vmatmul.mubr.f32.gmra.mxu0 %v3292
          %v3435 = vpop.f32.mrf.mxu0
          %v3436 = vadd.f32 %v3366, %v3435
          %v3437 = vpop.f32.mrf.mxu0
          %3438 = vdwg.mxu0
          %vm3439 = vcmask 74752
          %3440 = vst.msk [vmem:[%s436] sm:$0x3] %vm3439, %v3436
        $region76: #{aux_predictor_forward.1} parent=47 // pred_fallthru
          _
        %p3441 = scmp.lt.s32.totalorder %s29, 1
        %s3442 = scalar_select %p3441, %s29, 1
        %s3443 = smul.addr %s3442, 2
        %s3444 = scalar_lea.vmem %s7, %s3443
        // Predicated region
        $region77: #{aux_predictor_forward.1} parent=47 // pred_check
          %p3445 = pneg %p224
        $region78: #{aux_predictor_forward.1} parent=47 // pred_check_branch
          %3447 = sbr.rel (%p3445) target = $region80
        $region79: #{aux_predictor_forward.1} parent=47 // pred_region
          _
        $region80: #{aux_predictor_forward.1} parent=47 // pred_fallthru
          _
      $region48: #{aux_predictor_forward.1} parent=5 // pred_fallthru
        _
      %p3448 = scmp.le.s32.totalorder 2, %s20
      // Predicated region
      $region81: #{aux_predictor_forward.1} parent=5 // pred_check
        %p3449 = pneg %p3448
      $region82: #{aux_predictor_forward.1} parent=5 // pred_check_branch
        %3451 = sbr.rel (%p3449) target = $region84
      $region83: #{aux_predictor_forward.1} parent=5 // pred_region
        %s3452 = ssub.s32 %s20, 2
        // Predicated region
        $region85: #{aux_predictor_forward.1} parent=83 // pred_check
          %p3453 = pneg %p230
        $region86: #{aux_predictor_forward.1} parent=83 // pred_check_branch
          %3455 = sbr.rel (%p3453) target = $region88
        $region87: #{aux_predictor_forward.1} parent=83 // pred_region
          %p3456 = scmp.lt.s32.totalorder %s31, 1
          %s3457 = scalar_select %p3456, %s31, 1
          %s3458 = smul.addr %s3457, 2
          %s3459 = scalar_lea.vmem %s7, %s3458
        $region88: #{aux_predictor_forward.1} parent=83 // pred_fallthru
          _
      $region84: #{aux_predictor_forward.1} parent=5 // pred_fallthru
        _
    $region6: #{aux_predictor_forward.1} parent=1 // loop_footer
      %s24 = sadd.s32 1, %s20
    $region7: #{aux_predictor_forward.1} parent=1 // loop_footer_branch
      %19 = sbr.rel target = $region3
    $region8: #{aux_predictor_forward.1} parent=1 // loop_exit
      _
    %3460 = vsyncpa [#allocation4], 1
    %s3461 = scalar_lea.sflag [#allocation4], 1
    %3462 = vsyncpa %s3461, 1
    %3463 = vsyncpa [#allocation6], 1
    %3464 = vsyncpa [#allocation9], 1
    %s3465 = scalar_lea.sflag [#allocation9], 1
    %3466 = vsyncpa %s3465, 1

</llo_original>
